<compile_context>
chip_gen: v7x
topology: tpu7x:2x2x1
jax: 0.10.0
libtpu: 0.0.40
codegen_flags: <defaults>
</compile_context>

<pallas_src>
import jax
import jax.numpy as jnp
import numpy as np
from jax.experimental import pallas as pl
from jax.experimental.pallas import tpu as pltpu


# ----------------------------------------------------------------------------
# Flat padded-buffer layout helpers
# ----------------------------------------------------------------------------
def _flat_pad_layout(H, W):
    """Pixel (h, w) lives at row T + h*W + w of a (Pbuf, C) VMEM buffer.

    Rows [0, T) and [T+H*W, Pbuf) are zero (vertical halo).  T is rounded up
    to a multiple of 8 so the interior store is sublane-aligned.
    """
    M = H * W
    T = ((W + 1 + 7) // 8) * 8          # top halo rows (>= W+1), 8-aligned
    Pbuf = T + M + W + 1                # bottom halo rows
    return M, T, Pbuf


def _conv3x3_acc(buf_ref, w_ref, M, W, T, lmask, rmask):
    """3x3 'same' conv over a flat padded buffer as 9 whole-image matmuls.

    buf_ref: (Pbuf, Cin) VMEM scratch in the _flat_pad_layout layout.
    w_ref:   (9, Cin, Cout) tap-major weights (tap = ky*3 + kx).
    Returns a (M, Cout) f32 accumulator.
    """
    Cout = w_ref.shape[-1]
    acc = jnp.zeros((M, Cout), dtype=jnp.float32)
    for t in range(9):
        oy = t // 3 - 1
        ox = t % 3 - 1
        start = T + oy * W + ox
        lhs = buf_ref[start:start + M, :]
        # Horizontal zero padding: the flat layout wraps rows, so left/right
        # edge output pixels would read the neighbouring row -- mask them.
        if ox == -1:
            lhs = jnp.where(lmask, 0.0, lhs)
        elif ox == 1:
            lhs = jnp.where(rmask, 0.0, lhs)
        acc = acc + jnp.dot(lhs, w_ref[t], preferred_element_type=jnp.float32)
    return acc


# ----------------------------------------------------------------------------
# Fused UpBlock kernel: upsample + concat + conv/BN/ReLU x2 (+ out_conv)
# ----------------------------------------------------------------------------
def _make_upblock_kernel(H, W, M1, with_out_conv):
    M, T, _ = _flat_pad_layout(H, W)

    def kernel(*refs):
        if with_out_conv:
            (x1_ref, x2_ref, sel_ref, w1s_ref, w1u_ref, b1_ref, w2_ref,
             b2_ref, w3_ref, b3_ref, y_ref, out_ref,
             bskip, bup, bmid, bfin) = refs
        else:
            (x1_ref, x2_ref, sel_ref, w1s_ref, w1u_ref, b1_ref, w2_ref,
             b2_ref, y_ref, bskip, bup, bmid) = refs

        col = jax.lax.broadcasted_iota(jnp.int32, (M, 1), 0) % W
        lmask = col == 0
        rmask = col == W - 1

        # ---- nearest-exact x2 upsample of x1 + "concat" with skip x2 ------
        # Concat handled by keeping the two channel groups in separate
        # buffers and splitting conv1's weights accordingly.
        bskip[...] = jnp.zeros_like(bskip)
        bup[...] = jnp.zeros_like(bup)
        bskip[T:T + M, :] = x2_ref[0]
        if M1 == 1:                       # 1x1 -> 2x2: pure sublane broadcast
            up = jnp.broadcast_to(x1_ref[0], (M, x1_ref.shape[-1]))
        else:                             # selection matmul does the repeat
            up = jnp.dot(sel_ref[...], x1_ref[0],
                         preferred_element_type=jnp.float32)
        bup[T:T + M, :] = up

        # ---- conv1 (BN scale folded into weights) + bias + ReLU -----------
        acc1 = (_conv3x3_acc(bskip, w1s_ref, M, W, T, lmask, rmask) +
                _conv3x3_acc(bup, w1u_ref, M, W, T, lmask, rmask))
        h1 = jnp.maximum(acc1 + b1_ref[...], 0.0)

        bmid[...] = jnp.zeros_like(bmid)
        bmid[T:T + M, :] = h1

        # ---- conv2 (BN scale folded) + bias + ReLU ------------------------
        acc2 = _conv3x3_acc(bmid, w2_ref, M, W, T, lmask, rmask)
        y = jnp.maximum(acc2 + b2_ref[...], 0.0)
        y_ref[0] = y.astype(y_ref.dtype)

        if with_out_conv:
            # ---- out_conv: 3x3 conv + bias, no BN / ReLU ------------------
            bfin[...] = jnp.zeros_like(bfin)
            bfin[T:T + M, :] = y
            acc3 = _conv3x3_acc(bfin, w3_ref, M, W, T, lmask, rmask)
            out_ref[0] = (acc3 + b3_ref[...]).astype(out_ref.dtype)

    return kernel


def _nearest_upsample_matrix(h, w):
    """(4hw, hw) 0/1 matrix: flat nearest-exact x2 upsample as one matmul."""
    H, W = 2 * h, 2 * w
    sel = np.zeros((H * W, h * w), np.float32)
    for p in range(H * W):
        r, c = p // W, p % W
        sel[p, (r // 2) * w + (c // 2)] = 1.0
    return jnp.asarray(sel)


# ----------------------------------------------------------------------------
# Pallas wrapper for one UpBlock (optionally fused with the final out_conv)
# ----------------------------------------------------------------------------
def upblock_pallas(x1, x2, blk, out_conv=None):
    """x1: (N, h, w, C1) NHWC low-res input; x2: (N, 2h, 2w, C2) NHWC skip.

    Returns y (N, 2h, 2w, Cout), plus out (N, 2h, 2w, n_class) if out_conv.
    """
    N, h, w, C1 = x1.shape
    _, H, W, C2 = x2.shape
    assert H == 2 * h and W == 2 * w
    M1 = h * w
    M, _, Pbuf = _flat_pad_layout(H, W)
    Cout = blk["b1"].shape[-1]

    x1f = x1.reshape(N, M1, C1)            # free row-major reshapes
    x2f = x2.reshape(N, M, C2)
    sel = _nearest_upsample_matrix(h, w)

    inputs = [x1f, x2f, sel, blk["w1_skip"], blk["w1_up"], blk["b1"],
              blk["w2"], blk["b2"]]
    in_specs = [
        pl.BlockSpec((1, M1, C1), lambda n: (n, 0, 0)),
        pl.BlockSpec((1, M, C2), lambda n: (n, 0, 0)),
        pl.BlockSpec((M, M1), lambda n: (0, 0)),
        pl.BlockSpec((9, C2, Cout), lambda n: (0, 0, 0)),
        pl.BlockSpec((9, C1, Cout), lambda n: (0, 0, 0)),
        pl.BlockSpec((1, Cout), lambda n: (0, 0)),
        pl.BlockSpec((9, Cout, Cout), lambda n: (0, 0, 0)),
        pl.BlockSpec((1, Cout), lambda n: (0, 0)),
    ]
    scratch = [pltpu.VMEM((Pbuf, C2), jnp.float32),
               pltpu.VMEM((Pbuf, C1), jnp.float32),
               pltpu.VMEM((Pbuf, Cout), jnp.float32)]
    out_shape = [jax.ShapeDtypeStruct((N, M, Cout), jnp.float32)]
    out_specs = [pl.BlockSpec((1, M, Cout), lambda n: (n, 0, 0))]

    with_out = out_conv is not None
    if with_out:
        ncls = out_conv["b"].shape[-1]
        inputs += [out_conv["w"], out_conv["b"]]
        in_specs += [pl.BlockSpec((9, Cout, ncls), lambda n: (0, 0, 0)),
                     pl.BlockSpec((1, ncls), lambda n: (0, 0))]
        out_shape.append(jax.ShapeDtypeStruct((N, M, ncls), jnp.float32))
        out_specs.append(pl.BlockSpec((1, M, ncls), lambda n: (n, 0, 0)))
        scratch.append(pltpu.VMEM((Pbuf, Cout), jnp.float32))

    res = pl.pallas_call(
        _make_upblock_kernel(H, W, M1, with_out),
        out_shape=tuple(out_shape),
        grid=(N,),
        in_specs=in_specs,
        out_specs=tuple(out_specs),
        scratch_shapes=scratch,
        compiler_params=pltpu.CompilerParams(
            dimension_semantics=("parallel",)),
    )(*inputs)

    if with_out:
        yf, of = res
        return yf.reshape(N, H, W, Cout), of.reshape(N, H, W, -1)
    yf = res[0] if isinstance(res, (tuple, list)) else res
    return yf.reshape(N, H, W, Cout)


# ----------------------------------------------------------------------------
# Parameters (deterministic synthetic init) and the Decoder forward
# ----------------------------------------------------------------------------
def _init_conv_bn(key, cin, cout, eps=1e-5):
    kw, kb, kg, kbt, km, kv = jax.random.split(key, 6)
    w = jnp.sqrt(2.0 / (9.0 * cin)) * jax.random.normal(
        kw, (3, 3, cin, cout), jnp.float32)                       # HWIO
    conv_b = 0.1 * jax.random.normal(kb, (cout,), jnp.float32)
    gamma = 1.0 + 0.1 * jax.random.normal(kg, (cout,), jnp.float32)
    beta = 0.1 * jax.random.normal(kbt, (cout,), jnp.float32)
    mean = 0.1 * jax.random.normal(km, (cout,), jnp.float32)
    var = 0.5 + jax.random.uniform(kv, (cout,), jnp.float32)
    scale = gamma / jnp.sqrt(var + eps)
    w_folded = (w * scale).reshape(9, cin, cout)   # fold BN scale into weights
    bias = scale * (conv_b - mean) + beta          # fold conv bias + BN shift
    return {"w_taps": w_folded, "bias": bias,
            "w_hwio": w, "conv_b": conv_b, "gamma": gamma, "beta": beta,
            "mean": mean, "var": var, "eps": eps}


def _init_conv(key, cin, cout):
    kw, kb = jax.random.split(key)
    w = jnp.sqrt(2.0 / (9.0 * cin)) * jax.random.normal(
        kw, (3, 3, cin, cout), jnp.float32)
    b = 0.1 * jax.random.normal(kb, (cout,), jnp.float32)
    return {"w_taps": w.reshape(9, cin, cout), "bias": b,
            "w_hwio": w, "conv_b": b}


def make_decoder_params(key, ft_chns, n_class):
    assert len(ft_chns) == 5
    ft = ft_chns
    # (C1 = upsampled-input channels, C2 = skip channels, Cout)
    io = [(ft[4], ft[3], ft[3]), (ft[3], ft[2], ft[2]),
          (ft[2], ft[1], ft[1]), (ft[1], ft[0], ft[0])]
    keys = jax.random.split(key, 2 * len(io) + 1)
    blocks, ki = [], 0
    for c1, c2, cout in io:
        p1 = _init_conv_bn(keys[ki], c1 + c2, cout); ki += 1
        p2 = _init_conv_bn(keys[ki], cout, cout); ki += 1
        blocks.append({
            # conv1 input channels are cat([x2_skip, x1_up]) -> split weights
            "w1_skip": p1["w_taps"][:, :c2, :],
            "w1_up": p1["w_taps"][:, c2:, :],
            "b1": p1["bias"].reshape(1, cout),
            "w2": p2["w_taps"],
            "b2": p2["bias"].reshape(1, cout),
            "_raw": (p1, p2),
        })
    po = _init_conv(keys[ki], ft[0], n_class)
    out_conv = {"w": po["w_taps"], "b": po["bias"].reshape(1, n_class),
                "_raw": po}
    return {"blocks": blocks, "out_conv": out_conv}


def decoder_forward(features_nchw, params):
    """Pallas Decoder.forward: features = [x0..x4] NCHW; returns (output, x) NCHW."""
    x0, x1, x2, x3, x4 = [jnp.transpose(f, (0, 2, 3, 1)).astype(jnp.float32)
                          for f in features_nchw]
    blocks = params["blocks"]
    x = upblock_pallas(x4, x3, blocks[0])                       # up1
    x = upblock_pallas(x, x2, blocks[1])                        # up2
    x = upblock_pallas(x, x1, blocks[2])                        # up3
    x, out = upblock_pallas(x, x0, blocks[3],                   # up4 + out_conv
                            out_conv=params["out_conv"])
    return (jnp.transpose(out, (0, 3, 1, 2)),
            jnp.transpose(x, (0, 3, 1, 2)))


# ----------------------------------------------------------------------------
# Pure-JAX reference (for the sanity check)
# ----------------------------------------------------------------------------
def _ref_conv_bn_relu(x, p):
    y = jax.lax.conv_general_dilated(
        x, p["w_hwio"], (1, 1), ((1, 1), (1, 1)),
        dimension_numbers=("NHWC", "HWIO", "NHWC"),
        precision=jax.lax.Precision.HIGHEST)
    y = y + p["conv_b"]
    y = (y - p["mean"]) / jnp.sqrt(p["var"] + p["eps"]) * p["gamma"] + p["beta"]
    return jnp.maximum(y, 0.0)


def _ref_upblock(x1, x2, blk):
    x1u = jnp.repeat(jnp.repeat(x1, 2, axis=1), 2, axis=2)  # nearest-exact x2
    x = jnp.concatenate([x2, x1u], axis=-1)
    p1, p2 = blk["_raw"]
    return _ref_conv_bn_relu(_ref_conv_bn_relu(x, p1), p2)


def decoder_reference(features_nchw, params):
    x0, x1, x2, x3, x4 = [jnp.transpose(f, (0, 2, 3, 1)).astype(jnp.float32)
                          for f in features_nchw]
    blocks = params["blocks"]
    x = _ref_upblock(x4, x3, blocks[0])
    x = _ref_upblock(x, x2, blocks[1])
    x = _ref_upblock(x, x1, blocks[2])
    x = _ref_upblock(x, x0, blocks[3])
    po = params["out_conv"]["_raw"]
    out = jax.lax.conv_general_dilated(
        x, po["w_hwio"], (1, 1), ((1, 1), (1, 1)),
        dimension_numbers=("NHWC", "HWIO", "NHWC"),
        precision=jax.lax.Precision.HIGHEST) + po["conv_b"]
    return (jnp.transpose(out, (0, 3, 1, 2)),
            jnp.transpose(x, (0, 3, 1, 2)))


# ----------------------------------------------------------------------------
if __name__ == "__main__":
    # Note: Decoder builds its UpBlocks with the default bilinear=True
    # (it never forwards params['bilinear']), i.e. nearest-exact upsampling.
    cfg = dict(in_chns=4, feature_chns=[8, 16, 32, 32, 64], class_num=2,
               bilinear=True, dropout=[0.05, 0.1, 0.2, 0.3, 0.5])
    ft = cfg["feature_chns"]
    N, S = 2, 16

    key = jax.random.PRNGKey(0)
    kf, kp = jax.random.split(key)
    fkeys = jax.random.split(kf, 5)
    # Encoder-style feature pyramid (NCHW): x0 full res ... x4 at 1/16 res.
    features = [jax.random.normal(fkeys[i], (N, ft[i], S >> i, S >> i),
                                  jnp.float32) for i in range(5)]
    params = make_decoder_params(kp, ft, cfg["class_num"])

    out, x = decoder_forward(features, params)
    out, x = jax.block_until_ready((out, x))

    ref_out, ref_x = decoder_reference(features, params)
    assert out.shape == (N, cfg["class_num"], S, S), out.shape
    assert x.shape == (N, ft[0], S, S), x.shape
    np.testing.assert_allclose(np.asarray(x), np.asarray(ref_x),
                               rtol=5e-2, atol=5e-2)
    np.testing.assert_allclose(np.asarray(out), np.asarray(ref_out),
                               rtol=5e-2, atol=5e-2)

    print("KERNEL_OK")
</pallas_src>

<mosaic_0001>
module attributes {stable_mosaic.version = 11 : i64} {
  func.func @kernel(%arg0: i32, %arg1: memref<1x1x64xf32, #tpu.memory_space<vmem>>, %arg2: memref<1x4x32xf32, #tpu.memory_space<vmem>>, %arg3: memref<4x1xf32, #tpu.memory_space<vmem>>, %arg4: memref<9x32x32xf32, #tpu.memory_space<vmem>>, %arg5: memref<9x64x32xf32, #tpu.memory_space<vmem>>, %arg6: memref<1x32xf32, #tpu.memory_space<vmem>>, %arg7: memref<9x32x32xf32, #tpu.memory_space<vmem>>, %arg8: memref<1x32xf32, #tpu.memory_space<vmem>>, %arg9: memref<1x4x32xf32, #tpu.memory_space<vmem>>, %arg10: memref<15x32xf32, #tpu.memory_space<vmem>>, %arg11: memref<15x64xf32, #tpu.memory_space<vmem>>, %arg12: memref<15x32xf32, #tpu.memory_space<vmem>>) attributes {dimension_semantics = [#tpu.dimension_semantics<parallel>], iteration_bounds = array<i64: 2>, scalar_prefetch = 0 : i64, scratch_operands = 3 : i64, tpu.core_type = #tpu.core_type<tc>, window_params = [{transform_indices = @transform_0, window_bounds = array<i64: 1, 1, 64>}, {transform_indices = @transform_1, window_bounds = array<i64: 1, 4, 32>}, {pipeline_mode = #tpu.pipeline_mode<synchronous>, transform_indices = @transform_2, window_bounds = array<i64: 4, 1>}, {pipeline_mode = #tpu.pipeline_mode<synchronous>, transform_indices = @transform_3, window_bounds = array<i64: 9, 32, 32>}, {pipeline_mode = #tpu.pipeline_mode<synchronous>, transform_indices = @transform_4, window_bounds = array<i64: 9, 64, 32>}, {pipeline_mode = #tpu.pipeline_mode<synchronous>, transform_indices = @transform_5, window_bounds = array<i64: 1, 32>}, {pipeline_mode = #tpu.pipeline_mode<synchronous>, transform_indices = @transform_6, window_bounds = array<i64: 9, 32, 32>}, {pipeline_mode = #tpu.pipeline_mode<synchronous>, transform_indices = @transform_7, window_bounds = array<i64: 1, 32>}, {transform_indices = @transform_8, window_bounds = array<i64: 1, 4, 32>}]} {
    %0 = tpu.iota {dimensions = array<i32: 0>} : vector<4x1xi32>
    %c2_i32 = arith.constant 2 : i32
    %c0_i32 = arith.constant 0 : i32
    %1 = arith.cmpi eq, %c2_i32, %c0_i32 : i32
    %c1_i32 = arith.constant 1 : i32
    %2 = arith.select %1, %c1_i32, %c2_i32 : i32
    %3 = vector.broadcast %2 : i32 to vector<4x1xi32>
    %4 = arith.remsi %0, %3 : vector<4x1xi32>
    %c0_i32_0 = arith.constant 0 : i32
    %5 = vector.broadcast %c0_i32_0 : i32 to vector<4x1xi32>
    %6 = arith.cmpi ne, %4, %5 : vector<4x1xi32>
    %c0_i32_1 = arith.constant 0 : i32
    %7 = vector.broadcast %c0_i32_1 : i32 to vector<4x1xi32>
    %8 = arith.cmpi slt, %4, %7 : vector<4x1xi32>
    %c0_i32_2 = arith.constant 0 : i32
    %9 = arith.cmpi slt, %2, %c0_i32_2 : i32
    %10 = vector.broadcast %9 : i1 to vector<4x1xi1>
    %11 = vector.broadcast %10 : vector<4x1xi1> to vector<4x1xi1>
    %12 = arith.xori %8, %11 : vector<4x1xi1>
    %13 = arith.andi %12, %6 : vector<4x1xi1>
    %14 = vector.broadcast %2 : i32 to vector<4x1xi32>
    %15 = arith.addi %4, %14 : vector<4x1xi32>
    %16 = arith.select %13, %15, %4 : vector<4x1xi1>, vector<4x1xi32>
    %c0_i32_3 = arith.constant 0 : i32
    %17 = vector.broadcast %c0_i32_3 : i32 to vector<4x1xi32>
    %18 = arith.cmpi eq, %16, %17 : vector<4x1xi32>
    %c1_i32_4 = arith.constant 1 : i32
    %19 = vector.broadcast %c1_i32_4 : i32 to vector<4x1xi32>
    %20 = arith.cmpi eq, %16, %19 : vector<4x1xi32>
    %cst = arith.constant 0.000000e+00 : f32
    %21 = vector.broadcast %cst : f32 to vector<15x32xf32>
    %c0 = arith.constant 0 : index
    %c0_5 = arith.constant 0 : index
    %22 = vector.load %arg10[%c0, %c0_5] : memref<15x32xf32, #tpu.memory_space<vmem>>, vector<15x32xf32>
    tpu.vector_store %arg10[%c0, %c0_5], %21 {strides = array<i32>} : memref<15x32xf32, #tpu.memory_space<vmem>>, vector<15x32xf32>,
    %cst_6 = arith.constant 0.000000e+00 : f32
    %23 = vector.broadcast %cst_6 : f32 to vector<15x64xf32>
    %c0_7 = arith.constant 0 : index
    %c0_8 = arith.constant 0 : index
    %24 = vector.load %arg11[%c0_7, %c0_8] : memref<15x64xf32, #tpu.memory_space<vmem>>, vector<15x64xf32>
    tpu.vector_store %arg11[%c0_7, %c0_8], %23 {strides = array<i32>} : memref<15x64xf32, #tpu.memory_space<vmem>>, vector<15x64xf32>,
    %c0_9 = arith.constant 0 : index
    %c0_10 = arith.constant 0 : index
    %c0_11 = arith.constant 0 : index
    %25 = vector.load %arg2[%c0_9, %c0_10, %c0_11] : memref<1x4x32xf32, #tpu.memory_space<vmem>>, vector<1x4x32xf32>
    %26 = vector.shape_cast %25 : vector<1x4x32xf32> to vector<4x32xf32>
    %c8 = arith.constant 8 : index
    %c0_12 = arith.constant 0 : index
    %27 = vector.load %arg10[%c8, %c0_12] : memref<15x32xf32, #tpu.memory_space<vmem>>, vector<4x32xf32>
    tpu.vector_store %arg10[%c8, %c0_12], %26 {strides = array<i32>} : memref<15x32xf32, #tpu.memory_space<vmem>>, vector<4x32xf32>,
    %c0_13 = arith.constant 0 : index
    %c0_14 = arith.constant 0 : index
    %c0_15 = arith.constant 0 : index
    %28 = vector.load %arg1[%c0_13, %c0_14, %c0_15] : memref<1x1x64xf32, #tpu.memory_space<vmem>>, vector<1x1x64xf32>
    %29 = vector.shape_cast %28 : vector<1x1x64xf32> to vector<1x64xf32>
    %30 = vector.shape_cast %29 : vector<1x64xf32> to vector<1x64xf32>
    %31 = vector.broadcast %30 : vector<1x64xf32> to vector<4x64xf32>
    %c8_16 = arith.constant 8 : index
    %c0_17 = arith.constant 0 : index
    %32 = vector.load %arg11[%c8_16, %c0_17] : memref<15x64xf32, #tpu.memory_space<vmem>>, vector<4x64xf32>
    tpu.vector_store %arg11[%c8_16, %c0_17], %31 {strides = array<i32>} : memref<15x64xf32, #tpu.memory_space<vmem>>, vector<4x64xf32>,
    %cst_18 = arith.constant 0.000000e+00 : f32
    %33 = vector.broadcast %cst_18 : f32 to vector<4x32xf32>
    %c5 = arith.constant 5 : index
    %c0_19 = arith.constant 0 : index
    %34 = vector.load %arg10[%c5, %c0_19] : memref<15x32xf32, #tpu.memory_space<vmem>>, vector<4x32xf32>
    %cst_20 = arith.constant 0.000000e+00 : f32
    %35 = vector.shape_cast %18 : vector<4x1xi1> to vector<4x1xi1>
    %36 = vector.broadcast %35 : vector<4x1xi1> to vector<4x32xi1>
    %37 = vector.broadcast %cst_20 : f32 to vector<4x32xf32>
    %38 = arith.select %36, %37, %34 : vector<4x32xi1>, vector<4x32xf32>
    %c0_21 = arith.constant 0 : index
    %c0_22 = arith.constant 0 : index
    %c0_23 = arith.constant 0 : index
    %39 = vector.load %arg4[%c0_21, %c0_22, %c0_23] : memref<9x32x32xf32, #tpu.memory_space<vmem>>, vector<1x32x32xf32>
    %40 = vector.shape_cast %39 : vector<1x32x32xf32> to vector<32x32xf32>
    %cst_24 = arith.constant dense<0.000000e+00> : vector<4x32xf32>
    %41 = tpu.matmul %38, %40, %cst_24 {dimension_numbers = #tpu.dot_dimension_numbers<[1], [0], [0], [1], [0, 0, 1, 1], [], []>} : vector<4x32xf32>, vector<32x32xf32>, vector<4x32xf32> -> vector<4x32xf32>
    %42 = arith.addf %33, %41 : vector<4x32xf32>
    %c6 = arith.constant 6 : index
    %c0_25 = arith.constant 0 : index
    %43 = vector.load %arg10[%c6, %c0_25] : memref<15x32xf32, #tpu.memory_space<vmem>>, vector<4x32xf32>
    %c1 = arith.constant 1 : index
    %c0_26 = arith.constant 0 : index
    %c0_27 = arith.constant 0 : index
    %44 = vector.load %arg4[%c1, %c0_26, %c0_27] : memref<9x32x32xf32, #tpu.memory_space<vmem>>, vector<1x32x32xf32>
    %45 = vector.shape_cast %44 : vector<1x32x32xf32> to vector<32x32xf32>
    %cst_28 = arith.constant dense<0.000000e+00> : vector<4x32xf32>
    %46 = tpu.matmul %43, %45, %cst_28 {dimension_numbers = #tpu.dot_dimension_numbers<[1], [0], [0], [1], [0, 0, 1, 1], [], []>} : vector<4x32xf32>, vector<32x32xf32>, vector<4x32xf32> -> vector<4x32xf32>
    %47 = arith.addf %42, %46 : vector<4x32xf32>
    %c7 = arith.constant 7 : index
    %c0_29 = arith.constant 0 : index
    %48 = vector.load %arg10[%c7, %c0_29] : memref<15x32xf32, #tpu.memory_space<vmem>>, vector<4x32xf32>
    %cst_30 = arith.constant 0.000000e+00 : f32
    %49 = vector.shape_cast %20 : vector<4x1xi1> to vector<4x1xi1>
    %50 = vector.broadcast %49 : vector<4x1xi1> to vector<4x32xi1>
    %51 = vector.broadcast %cst_30 : f32 to vector<4x32xf32>
    %52 = arith.select %50, %51, %48 : vector<4x32xi1>, vector<4x32xf32>
    %c2 = arith.constant 2 : index
    %c0_31 = arith.constant 0 : index
    %c0_32 = arith.constant 0 : index
    %53 = vector.load %arg4[%c2, %c0_31, %c0_32] : memref<9x32x32xf32, #tpu.memory_space<vmem>>, vector<1x32x32xf32>
    %54 = vector.shape_cast %53 : vector<1x32x32xf32> to vector<32x32xf32>
    %cst_33 = arith.constant dense<0.000000e+00> : vector<4x32xf32>
    %55 = tpu.matmul %52, %54, %cst_33 {dimension_numbers = #tpu.dot_dimension_numbers<[1], [0], [0], [1], [0, 0, 1, 1], [], []>} : vector<4x32xf32>, vector<32x32xf32>, vector<4x32xf32> -> vector<4x32xf32>
    %56 = arith.addf %47, %55 : vector<4x32xf32>
    %c7_34 = arith.constant 7 : index
    %c0_35 = arith.constant 0 : index
    %57 = vector.load %arg10[%c7_34, %c0_35] : memref<15x32xf32, #tpu.memory_space<vmem>>, vector<4x32xf32>
    %cst_36 = arith.constant 0.000000e+00 : f32
    %58 = vector.shape_cast %18 : vector<4x1xi1> to vector<4x1xi1>
    %59 = vector.broadcast %58 : vector<4x1xi1> to vector<4x32xi1>
    %60 = vector.broadcast %cst_36 : f32 to vector<4x32xf32>
    %61 = arith.select %59, %60, %57 : vector<4x32xi1>, vector<4x32xf32>
    %c3 = arith.constant 3 : index
    %c0_37 = arith.constant 0 : index
    %c0_38 = arith.constant 0 : index
    %62 = vector.load %arg4[%c3, %c0_37, %c0_38] : memref<9x32x32xf32, #tpu.memory_space<vmem>>, vector<1x32x32xf32>
    %63 = vector.shape_cast %62 : vector<1x32x32xf32> to vector<32x32xf32>
    %cst_39 = arith.constant dense<0.000000e+00> : vector<4x32xf32>
    %64 = tpu.matmul %61, %63, %cst_39 {dimension_numbers = #tpu.dot_dimension_numbers<[1], [0], [0], [1], [0, 0, 1, 1], [], []>} : vector<4x32xf32>, vector<32x32xf32>, vector<4x32xf32> -> vector<4x32xf32>
    %65 = arith.addf %56, %64 : vector<4x32xf32>
    %c8_40 = arith.constant 8 : index
    %c0_41 = arith.constant 0 : index
    %66 = vector.load %arg10[%c8_40, %c0_41] : memref<15x32xf32, #tpu.memory_space<vmem>>, vector<4x32xf32>
    %c4 = arith.constant 4 : index
    %c0_42 = arith.constant 0 : index
    %c0_43 = arith.constant 0 : index
    %67 = vector.load %arg4[%c4, %c0_42, %c0_43] : memref<9x32x32xf32, #tpu.memory_space<vmem>>, vector<1x32x32xf32>
    %68 = vector.shape_cast %67 : vector<1x32x32xf32> to vector<32x32xf32>
    %cst_44 = arith.constant dense<0.000000e+00> : vector<4x32xf32>
    %69 = tpu.matmul %66, %68, %cst_44 {dimension_numbers = #tpu.dot_dimension_numbers<[1], [0], [0], [1], [0, 0, 1, 1], [], []>} : vector<4x32xf32>, vector<32x32xf32>, vector<4x32xf32> -> vector<4x32xf32>
    %70 = arith.addf %65, %69 : vector<4x32xf32>
    %c9 = arith.constant 9 : index
    %c0_45 = arith.constant 0 : index
    %71 = vector.load %arg10[%c9, %c0_45] : memref<15x32xf32, #tpu.memory_space<vmem>>, vector<4x32xf32>
    %cst_46 = arith.constant 0.000000e+00 : f32
    %72 = vector.shape_cast %20 : vector<4x1xi1> to vector<4x1xi1>
    %73 = vector.broadcast %72 : vector<4x1xi1> to vector<4x32xi1>
    %74 = vector.broadcast %cst_46 : f32 to vector<4x32xf32>
    %75 = arith.select %73, %74, %71 : vector<4x32xi1>, vector<4x32xf32>
    %c5_47 = arith.constant 5 : index
    %c0_48 = arith.constant 0 : index
    %c0_49 = arith.constant 0 : index
    %76 = vector.load %arg4[%c5_47, %c0_48, %c0_49] : memref<9x32x32xf32, #tpu.memory_space<vmem>>, vector<1x32x32xf32>
    %77 = vector.shape_cast %76 : vector<1x32x32xf32> to vector<32x32xf32>
    %cst_50 = arith.constant dense<0.000000e+00> : vector<4x32xf32>
    %78 = tpu.matmul %75, %77, %cst_50 {dimension_numbers = #tpu.dot_dimension_numbers<[1], [0], [0], [1], [0, 0, 1, 1], [], []>} : vector<4x32xf32>, vector<32x32xf32>, vector<4x32xf32> -> vector<4x32xf32>
    %79 = arith.addf %70, %78 : vector<4x32xf32>
    %c9_51 = arith.constant 9 : index
    %c0_52 = arith.constant 0 : index
    %80 = vector.load %arg10[%c9_51, %c0_52] : memref<15x32xf32, #tpu.memory_space<vmem>>, vector<4x32xf32>
    %cst_53 = arith.constant 0.000000e+00 : f32
    %81 = vector.shape_cast %18 : vector<4x1xi1> to vector<4x1xi1>
    %82 = vector.broadcast %81 : vector<4x1xi1> to vector<4x32xi1>
    %83 = vector.broadcast %cst_53 : f32 to vector<4x32xf32>
    %84 = arith.select %82, %83, %80 : vector<4x32xi1>, vector<4x32xf32>
    %c6_54 = arith.constant 6 : index
    %c0_55 = arith.constant 0 : index
    %c0_56 = arith.constant 0 : index
    %85 = vector.load %arg4[%c6_54, %c0_55, %c0_56] : memref<9x32x32xf32, #tpu.memory_space<vmem>>, vector<1x32x32xf32>
    %86 = vector.shape_cast %85 : vector<1x32x32xf32> to vector<32x32xf32>
    %cst_57 = arith.constant dense<0.000000e+00> : vector<4x32xf32>
    %87 = tpu.matmul %84, %86, %cst_57 {dimension_numbers = #tpu.dot_dimension_numbers<[1], [0], [0], [1], [0, 0, 1, 1], [], []>} : vector<4x32xf32>, vector<32x32xf32>, vector<4x32xf32> -> vector<4x32xf32>
    %88 = arith.addf %79, %87 : vector<4x32xf32>
    %c10 = arith.constant 10 : index
    %c0_58 = arith.constant 0 : index
    %89 = vector.load %arg10[%c10, %c0_58] : memref<15x32xf32, #tpu.memory_space<vmem>>, vector<4x32xf32>
    %c7_59 = arith.constant 7 : index
    %c0_60 = arith.constant 0 : index
    %c0_61 = arith.constant 0 : index
    %90 = vector.load %arg4[%c7_59, %c0_60, %c0_61] : memref<9x32x32xf32, #tpu.memory_space<vmem>>, vector<1x32x32xf32>
    %91 = vector.shape_cast %90 : vector<1x32x32xf32> to vector<32x32xf32>
    %cst_62 = arith.constant dense<0.000000e+00> : vector<4x32xf32>
    %92 = tpu.matmul %89, %91, %cst_62 {dimension_numbers = #tpu.dot_dimension_numbers<[1], [0], [0], [1], [0, 0, 1, 1], [], []>} : vector<4x32xf32>, vector<32x32xf32>, vector<4x32xf32> -> vector<4x32xf32>
    %93 = arith.addf %88, %92 : vector<4x32xf32>
    %c11 = arith.constant 11 : index
    %c0_63 = arith.constant 0 : index
    %94 = vector.load %arg10[%c11, %c0_63] : memref<15x32xf32, #tpu.memory_space<vmem>>, vector<4x32xf32>
    %cst_64 = arith.constant 0.000000e+00 : f32
    %95 = vector.shape_cast %20 : vector<4x1xi1> to vector<4x1xi1>
    %96 = vector.broadcast %95 : vector<4x1xi1> to vector<4x32xi1>
    %97 = vector.broadcast %cst_64 : f32 to vector<4x32xf32>
    %98 = arith.select %96, %97, %94 : vector<4x32xi1>, vector<4x32xf32>
    %c8_65 = arith.constant 8 : index
    %c0_66 = arith.constant 0 : index
    %c0_67 = arith.constant 0 : index
    %99 = vector.load %arg4[%c8_65, %c0_66, %c0_67] : memref<9x32x32xf32, #tpu.memory_space<vmem>>, vector<1x32x32xf32>
    %100 = vector.shape_cast %99 : vector<1x32x32xf32> to vector<32x32xf32>
    %cst_68 = arith.constant dense<0.000000e+00> : vector<4x32xf32>
    %101 = tpu.matmul %98, %100, %cst_68 {dimension_numbers = #tpu.dot_dimension_numbers<[1], [0], [0], [1], [0, 0, 1, 1], [], []>} : vector<4x32xf32>, vector<32x32xf32>, vector<4x32xf32> -> vector<4x32xf32>
    %102 = arith.addf %93, %101 : vector<4x32xf32>
    %cst_69 = arith.constant 0.000000e+00 : f32
    %103 = vector.broadcast %cst_69 : f32 to vector<4x32xf32>
    %c5_70 = arith.constant 5 : index
    %c0_71 = arith.constant 0 : index
    %104 = vector.load %arg11[%c5_70, %c0_71] : memref<15x64xf32, #tpu.memory_space<vmem>>, vector<4x64xf32>
    %cst_72 = arith.constant 0.000000e+00 : f32
    %105 = vector.shape_cast %18 : vector<4x1xi1> to vector<4x1xi1>
    %106 = vector.broadcast %105 : vector<4x1xi1> to vector<4x64xi1>
    %107 = vector.broadcast %cst_72 : f32 to vector<4x64xf32>
    %108 = arith.select %106, %107, %104 : vector<4x64xi1>, vector<4x64xf32>
    %c0_73 = arith.constant 0 : index
    %c0_74 = arith.constant 0 : index
    %c0_75 = arith.constant 0 : index
    %109 = vector.load %arg5[%c0_73, %c0_74, %c0_75] : memref<9x64x32xf32, #tpu.memory_space<vmem>>, vector<1x64x32xf32>
    %110 = vector.shape_cast %109 : vector<1x64x32xf32> to vector<64x32xf32>
    %cst_76 = arith.constant dense<0.000000e+00> : vector<4x32xf32>
    %111 = tpu.matmul %108, %110, %cst_76 {dimension_numbers = #tpu.dot_dimension_numbers<[1], [0], [0], [1], [0, 0, 1, 1], [], []>} : vector<4x64xf32>, vector<64x32xf32>, vector<4x32xf32> -> vector<4x32xf32>
    %112 = arith.addf %103, %111 : vector<4x32xf32>
    %c6_77 = arith.constant 6 : index
    %c0_78 = arith.constant 0 : index
    %113 = vector.load %arg11[%c6_77, %c0_78] : memref<15x64xf32, #tpu.memory_space<vmem>>, vector<4x64xf32>
    %c1_79 = arith.constant 1 : index
    %c0_80 = arith.constant 0 : index
    %c0_81 = arith.constant 0 : index
    %114 = vector.load %arg5[%c1_79, %c0_80, %c0_81] : memref<9x64x32xf32, #tpu.memory_space<vmem>>, vector<1x64x32xf32>
    %115 = vector.shape_cast %114 : vector<1x64x32xf32> to vector<64x32xf32>
    %cst_82 = arith.constant dense<0.000000e+00> : vector<4x32xf32>
    %116 = tpu.matmul %113, %115, %cst_82 {dimension_numbers = #tpu.dot_dimension_numbers<[1], [0], [0], [1], [0, 0, 1, 1], [], []>} : vector<4x64xf32>, vector<64x32xf32>, vector<4x32xf32> -> vector<4x32xf32>
    %117 = arith.addf %112, %116 : vector<4x32xf32>
    %c7_83 = arith.constant 7 : index
    %c0_84 = arith.constant 0 : index
    %118 = vector.load %arg11[%c7_83, %c0_84] : memref<15x64xf32, #tpu.memory_space<vmem>>, vector<4x64xf32>
    %cst_85 = arith.constant 0.000000e+00 : f32
    %119 = vector.shape_cast %20 : vector<4x1xi1> to vector<4x1xi1>
    %120 = vector.broadcast %119 : vector<4x1xi1> to vector<4x64xi1>
    %121 = vector.broadcast %cst_85 : f32 to vector<4x64xf32>
    %122 = arith.select %120, %121, %118 : vector<4x64xi1>, vector<4x64xf32>
    %c2_86 = arith.constant 2 : index
    %c0_87 = arith.constant 0 : index
    %c0_88 = arith.constant 0 : index
    %123 = vector.load %arg5[%c2_86, %c0_87, %c0_88] : memref<9x64x32xf32, #tpu.memory_space<vmem>>, vector<1x64x32xf32>
    %124 = vector.shape_cast %123 : vector<1x64x32xf32> to vector<64x32xf32>
    %cst_89 = arith.constant dense<0.000000e+00> : vector<4x32xf32>
    %125 = tpu.matmul %122, %124, %cst_89 {dimension_numbers = #tpu.dot_dimension_numbers<[1], [0], [0], [1], [0, 0, 1, 1], [], []>} : vector<4x64xf32>, vector<64x32xf32>, vector<4x32xf32> -> vector<4x32xf32>
    %126 = arith.addf %117, %125 : vector<4x32xf32>
    %c7_90 = arith.constant 7 : index
    %c0_91 = arith.constant 0 : index
    %127 = vector.load %arg11[%c7_90, %c0_91] : memref<15x64xf32, #tpu.memory_space<vmem>>, vector<4x64xf32>
    %cst_92 = arith.constant 0.000000e+00 : f32
    %128 = vector.shape_cast %18 : vector<4x1xi1> to vector<4x1xi1>
    %129 = vector.broadcast %128 : vector<4x1xi1> to vector<4x64xi1>
    %130 = vector.broadcast %cst_92 : f32 to vector<4x64xf32>
    %131 = arith.select %129, %130, %127 : vector<4x64xi1>, vector<4x64xf32>
    %c3_93 = arith.constant 3 : index
    %c0_94 = arith.constant 0 : index
    %c0_95 = arith.constant 0 : index
    %132 = vector.load %arg5[%c3_93, %c0_94, %c0_95] : memref<9x64x32xf32, #tpu.memory_space<vmem>>, vector<1x64x32xf32>
    %133 = vector.shape_cast %132 : vector<1x64x32xf32> to vector<64x32xf32>
    %cst_96 = arith.constant dense<0.000000e+00> : vector<4x32xf32>
    %134 = tpu.matmul %131, %133, %cst_96 {dimension_numbers = #tpu.dot_dimension_numbers<[1], [0], [0], [1], [0, 0, 1, 1], [], []>} : vector<4x64xf32>, vector<64x32xf32>, vector<4x32xf32> -> vector<4x32xf32>
    %135 = arith.addf %126, %134 : vector<4x32xf32>
    %c8_97 = arith.constant 8 : index
    %c0_98 = arith.constant 0 : index
    %136 = vector.load %arg11[%c8_97, %c0_98] : memref<15x64xf32, #tpu.memory_space<vmem>>, vector<4x64xf32>
    %c4_99 = arith.constant 4 : index
    %c0_100 = arith.constant 0 : index
    %c0_101 = arith.constant 0 : index
    %137 = vector.load %arg5[%c4_99, %c0_100, %c0_101] : memref<9x64x32xf32, #tpu.memory_space<vmem>>, vector<1x64x32xf32>
    %138 = vector.shape_cast %137 : vector<1x64x32xf32> to vector<64x32xf32>
    %cst_102 = arith.constant dense<0.000000e+00> : vector<4x32xf32>
    %139 = tpu.matmul %136, %138, %cst_102 {dimension_numbers = #tpu.dot_dimension_numbers<[1], [0], [0], [1], [0, 0, 1, 1], [], []>} : vector<4x64xf32>, vector<64x32xf32>, vector<4x32xf32> -> vector<4x32xf32>
    %140 = arith.addf %135, %139 : vector<4x32xf32>
    %c9_103 = arith.constant 9 : index
    %c0_104 = arith.constant 0 : index
    %141 = vector.load %arg11[%c9_103, %c0_104] : memref<15x64xf32, #tpu.memory_space<vmem>>, vector<4x64xf32>
    %cst_105 = arith.constant 0.000000e+00 : f32
    %142 = vector.shape_cast %20 : vector<4x1xi1> to vector<4x1xi1>
    %143 = vector.broadcast %142 : vector<4x1xi1> to vector<4x64xi1>
    %144 = vector.broadcast %cst_105 : f32 to vector<4x64xf32>
    %145 = arith.select %143, %144, %141 : vector<4x64xi1>, vector<4x64xf32>
    %c5_106 = arith.constant 5 : index
    %c0_107 = arith.constant 0 : index
    %c0_108 = arith.constant 0 : index
    %146 = vector.load %arg5[%c5_106, %c0_107, %c0_108] : memref<9x64x32xf32, #tpu.memory_space<vmem>>, vector<1x64x32xf32>
    %147 = vector.shape_cast %146 : vector<1x64x32xf32> to vector<64x32xf32>
    %cst_109 = arith.constant dense<0.000000e+00> : vector<4x32xf32>
    %148 = tpu.matmul %145, %147, %cst_109 {dimension_numbers = #tpu.dot_dimension_numbers<[1], [0], [0], [1], [0, 0, 1, 1], [], []>} : vector<4x64xf32>, vector<64x32xf32>, vector<4x32xf32> -> vector<4x32xf32>
    %149 = arith.addf %140, %148 : vector<4x32xf32>
    %c9_110 = arith.constant 9 : index
    %c0_111 = arith.constant 0 : index
    %150 = vector.load %arg11[%c9_110, %c0_111] : memref<15x64xf32, #tpu.memory_space<vmem>>, vector<4x64xf32>
    %cst_112 = arith.constant 0.000000e+00 : f32
    %151 = vector.shape_cast %18 : vector<4x1xi1> to vector<4x1xi1>
    %152 = vector.broadcast %151 : vector<4x1xi1> to vector<4x64xi1>
    %153 = vector.broadcast %cst_112 : f32 to vector<4x64xf32>
    %154 = arith.select %152, %153, %150 : vector<4x64xi1>, vector<4x64xf32>
    %c6_113 = arith.constant 6 : index
    %c0_114 = arith.constant 0 : index
    %c0_115 = arith.constant 0 : index
    %155 = vector.load %arg5[%c6_113, %c0_114, %c0_115] : memref<9x64x32xf32, #tpu.memory_space<vmem>>, vector<1x64x32xf32>
    %156 = vector.shape_cast %155 : vector<1x64x32xf32> to vector<64x32xf32>
    %cst_116 = arith.constant dense<0.000000e+00> : vector<4x32xf32>
    %157 = tpu.matmul %154, %156, %cst_116 {dimension_numbers = #tpu.dot_dimension_numbers<[1], [0], [0], [1], [0, 0, 1, 1], [], []>} : vector<4x64xf32>, vector<64x32xf32>, vector<4x32xf32> -> vector<4x32xf32>
    %158 = arith.addf %149, %157 : vector<4x32xf32>
    %c10_117 = arith.constant 10 : index
    %c0_118 = arith.constant 0 : index
    %159 = vector.load %arg11[%c10_117, %c0_118] : memref<15x64xf32, #tpu.memory_space<vmem>>, vector<4x64xf32>
    %c7_119 = arith.constant 7 : index
    %c0_120 = arith.constant 0 : index
    %c0_121 = arith.constant 0 : index
    %160 = vector.load %arg5[%c7_119, %c0_120, %c0_121] : memref<9x64x32xf32, #tpu.memory_space<vmem>>, vector<1x64x32xf32>
    %161 = vector.shape_cast %160 : vector<1x64x32xf32> to vector<64x32xf32>
    %cst_122 = arith.constant dense<0.000000e+00> : vector<4x32xf32>
    %162 = tpu.matmul %159, %161, %cst_122 {dimension_numbers = #tpu.dot_dimension_numbers<[1], [0], [0], [1], [0, 0, 1, 1], [], []>} : vector<4x64xf32>, vector<64x32xf32>, vector<4x32xf32> -> vector<4x32xf32>
    %163 = arith.addf %158, %162 : vector<4x32xf32>
    %c11_123 = arith.constant 11 : index
    %c0_124 = arith.constant 0 : index
    %164 = vector.load %arg11[%c11_123, %c0_124] : memref<15x64xf32, #tpu.memory_space<vmem>>, vector<4x64xf32>
    %cst_125 = arith.constant 0.000000e+00 : f32
    %165 = vector.shape_cast %20 : vector<4x1xi1> to vector<4x1xi1>
    %166 = vector.broadcast %165 : vector<4x1xi1> to vector<4x64xi1>
    %167 = vector.broadcast %cst_125 : f32 to vector<4x64xf32>
    %168 = arith.select %166, %167, %164 : vector<4x64xi1>, vector<4x64xf32>
    %c8_126 = arith.constant 8 : index
    %c0_127 = arith.constant 0 : index
    %c0_128 = arith.constant 0 : index
    %169 = vector.load %arg5[%c8_126, %c0_127, %c0_128] : memref<9x64x32xf32, #tpu.memory_space<vmem>>, vector<1x64x32xf32>
    %170 = vector.shape_cast %169 : vector<1x64x32xf32> to vector<64x32xf32>
    %cst_129 = arith.constant dense<0.000000e+00> : vector<4x32xf32>
    %171 = tpu.matmul %168, %170, %cst_129 {dimension_numbers = #tpu.dot_dimension_numbers<[1], [0], [0], [1], [0, 0, 1, 1], [], []>} : vector<4x64xf32>, vector<64x32xf32>, vector<4x32xf32> -> vector<4x32xf32>
    %172 = arith.addf %163, %171 : vector<4x32xf32>
    %173 = arith.addf %102, %172 : vector<4x32xf32>
    %c0_130 = arith.constant 0 : index
    %c0_131 = arith.constant 0 : index
    %174 = vector.load %arg6[%c0_130, %c0_131] : memref<1x32xf32, #tpu.memory_space<vmem>>, vector<1x32xf32>
    %175 = vector.broadcast %174 : vector<1x32xf32> to vector<4x32xf32>
    %176 = arith.addf %173, %175 : vector<4x32xf32>
    %cst_132 = arith.constant 0.000000e+00 : f32
    %177 = vector.broadcast %cst_132 : f32 to vector<4x32xf32>
    %178 = arith.maximumf %176, %177 : vector<4x32xf32>
    %cst_133 = arith.constant 0.000000e+00 : f32
    %179 = vector.broadcast %cst_133 : f32 to vector<15x32xf32>
    %c0_134 = arith.constant 0 : index
    %c0_135 = arith.constant 0 : index
    %180 = vector.load %arg12[%c0_134, %c0_135] : memref<15x32xf32, #tpu.memory_space<vmem>>, vector<15x32xf32>
    tpu.vector_store %arg12[%c0_134, %c0_135], %179 {strides = array<i32>} : memref<15x32xf32, #tpu.memory_space<vmem>>, vector<15x32xf32>,
    %c8_136 = arith.constant 8 : index
    %c0_137 = arith.constant 0 : index
    %181 = vector.load %arg12[%c8_136, %c0_137] : memref<15x32xf32, #tpu.memory_space<vmem>>, vector<4x32xf32>
    tpu.vector_store %arg12[%c8_136, %c0_137], %178 {strides = array<i32>} : memref<15x32xf32, #tpu.memory_space<vmem>>, vector<4x32xf32>,
    %cst_138 = arith.constant 0.000000e+00 : f32
    %182 = vector.broadcast %cst_138 : f32 to vector<4x32xf32>
    %c5_139 = arith.constant 5 : index
    %c0_140 = arith.constant 0 : index
    %183 = vector.load %arg12[%c5_139, %c0_140] : memref<15x32xf32, #tpu.memory_space<vmem>>, vector<4x32xf32>
    %cst_141 = arith.constant 0.000000e+00 : f32
    %184 = vector.shape_cast %18 : vector<4x1xi1> to vector<4x1xi1>
    %185 = vector.broadcast %184 : vector<4x1xi1> to vector<4x32xi1>
    %186 = vector.broadcast %cst_141 : f32 to vector<4x32xf32>
    %187 = arith.select %185, %186, %183 : vector<4x32xi1>, vector<4x32xf32>
    %c0_142 = arith.constant 0 : index
    %c0_143 = arith.constant 0 : index
    %c0_144 = arith.constant 0 : index
    %188 = vector.load %arg7[%c0_142, %c0_143, %c0_144] : memref<9x32x32xf32, #tpu.memory_space<vmem>>, vector<1x32x32xf32>
    %189 = vector.shape_cast %188 : vector<1x32x32xf32> to vector<32x32xf32>
    %cst_145 = arith.constant dense<0.000000e+00> : vector<4x32xf32>
    %190 = tpu.matmul %187, %189, %cst_145 {dimension_numbers = #tpu.dot_dimension_numbers<[1], [0], [0], [1], [0, 0, 1, 1], [], []>} : vector<4x32xf32>, vector<32x32xf32>, vector<4x32xf32> -> vector<4x32xf32>
    %191 = arith.addf %182, %190 : vector<4x32xf32>
    %c6_146 = arith.constant 6 : index
    %c0_147 = arith.constant 0 : index
    %192 = vector.load %arg12[%c6_146, %c0_147] : memref<15x32xf32, #tpu.memory_space<vmem>>, vector<4x32xf32>
    %c1_148 = arith.constant 1 : index
    %c0_149 = arith.constant 0 : index
    %c0_150 = arith.constant 0 : index
    %193 = vector.load %arg7[%c1_148, %c0_149, %c0_150] : memref<9x32x32xf32, #tpu.memory_space<vmem>>, vector<1x32x32xf32>
    %194 = vector.shape_cast %193 : vector<1x32x32xf32> to vector<32x32xf32>
    %cst_151 = arith.constant dense<0.000000e+00> : vector<4x32xf32>
    %195 = tpu.matmul %192, %194, %cst_151 {dimension_numbers = #tpu.dot_dimension_numbers<[1], [0], [0], [1], [0, 0, 1, 1], [], []>} : vector<4x32xf32>, vector<32x32xf32>, vector<4x32xf32> -> vector<4x32xf32>
    %196 = arith.addf %191, %195 : vector<4x32xf32>
    %c7_152 = arith.constant 7 : index
    %c0_153 = arith.constant 0 : index
    %197 = vector.load %arg12[%c7_152, %c0_153] : memref<15x32xf32, #tpu.memory_space<vmem>>, vector<4x32xf32>
    %cst_154 = arith.constant 0.000000e+00 : f32
    %198 = vector.shape_cast %20 : vector<4x1xi1> to vector<4x1xi1>
    %199 = vector.broadcast %198 : vector<4x1xi1> to vector<4x32xi1>
    %200 = vector.broadcast %cst_154 : f32 to vector<4x32xf32>
    %201 = arith.select %199, %200, %197 : vector<4x32xi1>, vector<4x32xf32>
    %c2_155 = arith.constant 2 : index
    %c0_156 = arith.constant 0 : index
    %c0_157 = arith.constant 0 : index
    %202 = vector.load %arg7[%c2_155, %c0_156, %c0_157] : memref<9x32x32xf32, #tpu.memory_space<vmem>>, vector<1x32x32xf32>
    %203 = vector.shape_cast %202 : vector<1x32x32xf32> to vector<32x32xf32>
    %cst_158 = arith.constant dense<0.000000e+00> : vector<4x32xf32>
    %204 = tpu.matmul %201, %203, %cst_158 {dimension_numbers = #tpu.dot_dimension_numbers<[1], [0], [0], [1], [0, 0, 1, 1], [], []>} : vector<4x32xf32>, vector<32x32xf32>, vector<4x32xf32> -> vector<4x32xf32>
    %205 = arith.addf %196, %204 : vector<4x32xf32>
    %c7_159 = arith.constant 7 : index
    %c0_160 = arith.constant 0 : index
    %206 = vector.load %arg12[%c7_159, %c0_160] : memref<15x32xf32, #tpu.memory_space<vmem>>, vector<4x32xf32>
    %cst_161 = arith.constant 0.000000e+00 : f32
    %207 = vector.shape_cast %18 : vector<4x1xi1> to vector<4x1xi1>
    %208 = vector.broadcast %207 : vector<4x1xi1> to vector<4x32xi1>
    %209 = vector.broadcast %cst_161 : f32 to vector<4x32xf32>
    %210 = arith.select %208, %209, %206 : vector<4x32xi1>, vector<4x32xf32>
    %c3_162 = arith.constant 3 : index
    %c0_163 = arith.constant 0 : index
    %c0_164 = arith.constant 0 : index
    %211 = vector.load %arg7[%c3_162, %c0_163, %c0_164] : memref<9x32x32xf32, #tpu.memory_space<vmem>>, vector<1x32x32xf32>
    %212 = vector.shape_cast %211 : vector<1x32x32xf32> to vector<32x32xf32>
    %cst_165 = arith.constant dense<0.000000e+00> : vector<4x32xf32>
    %213 = tpu.matmul %210, %212, %cst_165 {dimension_numbers = #tpu.dot_dimension_numbers<[1], [0], [0], [1], [0, 0, 1, 1], [], []>} : vector<4x32xf32>, vector<32x32xf32>, vector<4x32xf32> -> vector<4x32xf32>
    %214 = arith.addf %205, %213 : vector<4x32xf32>
    %c8_166 = arith.constant 8 : index
    %c0_167 = arith.constant 0 : index
    %215 = vector.load %arg12[%c8_166, %c0_167] : memref<15x32xf32, #tpu.memory_space<vmem>>, vector<4x32xf32>
    %c4_168 = arith.constant 4 : index
    %c0_169 = arith.constant 0 : index
    %c0_170 = arith.constant 0 : index
    %216 = vector.load %arg7[%c4_168, %c0_169, %c0_170] : memref<9x32x32xf32, #tpu.memory_space<vmem>>, vector<1x32x32xf32>
    %217 = vector.shape_cast %216 : vector<1x32x32xf32> to vector<32x32xf32>
    %cst_171 = arith.constant dense<0.000000e+00> : vector<4x32xf32>
    %218 = tpu.matmul %215, %217, %cst_171 {dimension_numbers = #tpu.dot_dimension_numbers<[1], [0], [0], [1], [0, 0, 1, 1], [], []>} : vector<4x32xf32>, vector<32x32xf32>, vector<4x32xf32> -> vector<4x32xf32>
    %219 = arith.addf %214, %218 : vector<4x32xf32>
    %c9_172 = arith.constant 9 : index
    %c0_173 = arith.constant 0 : index
    %220 = vector.load %arg12[%c9_172, %c0_173] : memref<15x32xf32, #tpu.memory_space<vmem>>, vector<4x32xf32>
    %cst_174 = arith.constant 0.000000e+00 : f32
    %221 = vector.shape_cast %20 : vector<4x1xi1> to vector<4x1xi1>
    %222 = vector.broadcast %221 : vector<4x1xi1> to vector<4x32xi1>
    %223 = vector.broadcast %cst_174 : f32 to vector<4x32xf32>
    %224 = arith.select %222, %223, %220 : vector<4x32xi1>, vector<4x32xf32>
    %c5_175 = arith.constant 5 : index
    %c0_176 = arith.constant 0 : index
    %c0_177 = arith.constant 0 : index
    %225 = vector.load %arg7[%c5_175, %c0_176, %c0_177] : memref<9x32x32xf32, #tpu.memory_space<vmem>>, vector<1x32x32xf32>
    %226 = vector.shape_cast %225 : vector<1x32x32xf32> to vector<32x32xf32>
    %cst_178 = arith.constant dense<0.000000e+00> : vector<4x32xf32>
    %227 = tpu.matmul %224, %226, %cst_178 {dimension_numbers = #tpu.dot_dimension_numbers<[1], [0], [0], [1], [0, 0, 1, 1], [], []>} : vector<4x32xf32>, vector<32x32xf32>, vector<4x32xf32> -> vector<4x32xf32>
    %228 = arith.addf %219, %227 : vector<4x32xf32>
    %c9_179 = arith.constant 9 : index
    %c0_180 = arith.constant 0 : index
    %229 = vector.load %arg12[%c9_179, %c0_180] : memref<15x32xf32, #tpu.memory_space<vmem>>, vector<4x32xf32>
    %cst_181 = arith.constant 0.000000e+00 : f32
    %230 = vector.shape_cast %18 : vector<4x1xi1> to vector<4x1xi1>
    %231 = vector.broadcast %230 : vector<4x1xi1> to vector<4x32xi1>
    %232 = vector.broadcast %cst_181 : f32 to vector<4x32xf32>
    %233 = arith.select %231, %232, %229 : vector<4x32xi1>, vector<4x32xf32>
    %c6_182 = arith.constant 6 : index
    %c0_183 = arith.constant 0 : index
    %c0_184 = arith.constant 0 : index
    %234 = vector.load %arg7[%c6_182, %c0_183, %c0_184] : memref<9x32x32xf32, #tpu.memory_space<vmem>>, vector<1x32x32xf32>
    %235 = vector.shape_cast %234 : vector<1x32x32xf32> to vector<32x32xf32>
    %cst_185 = arith.constant dense<0.000000e+00> : vector<4x32xf32>
    %236 = tpu.matmul %233, %235, %cst_185 {dimension_numbers = #tpu.dot_dimension_numbers<[1], [0], [0], [1], [0, 0, 1, 1], [], []>} : vector<4x32xf32>, vector<32x32xf32>, vector<4x32xf32> -> vector<4x32xf32>
    %237 = arith.addf %228, %236 : vector<4x32xf32>
    %c10_186 = arith.constant 10 : index
    %c0_187 = arith.constant 0 : index
    %238 = vector.load %arg12[%c10_186, %c0_187] : memref<15x32xf32, #tpu.memory_space<vmem>>, vector<4x32xf32>
    %c7_188 = arith.constant 7 : index
    %c0_189 = arith.constant 0 : index
    %c0_190 = arith.constant 0 : index
    %239 = vector.load %arg7[%c7_188, %c0_189, %c0_190] : memref<9x32x32xf32, #tpu.memory_space<vmem>>, vector<1x32x32xf32>
    %240 = vector.shape_cast %239 : vector<1x32x32xf32> to vector<32x32xf32>
    %cst_191 = arith.constant dense<0.000000e+00> : vector<4x32xf32>
    %241 = tpu.matmul %238, %240, %cst_191 {dimension_numbers = #tpu.dot_dimension_numbers<[1], [0], [0], [1], [0, 0, 1, 1], [], []>} : vector<4x32xf32>, vector<32x32xf32>, vector<4x32xf32> -> vector<4x32xf32>
    %242 = arith.addf %237, %241 : vector<4x32xf32>
    %c11_192 = arith.constant 11 : index
    %c0_193 = arith.constant 0 : index
    %243 = vector.load %arg12[%c11_192, %c0_193] : memref<15x32xf32, #tpu.memory_space<vmem>>, vector<4x32xf32>
    %cst_194 = arith.constant 0.000000e+00 : f32
    %244 = vector.shape_cast %20 : vector<4x1xi1> to vector<4x1xi1>
    %245 = vector.broadcast %244 : vector<4x1xi1> to vector<4x32xi1>
    %246 = vector.broadcast %cst_194 : f32 to vector<4x32xf32>
    %247 = arith.select %245, %246, %243 : vector<4x32xi1>, vector<4x32xf32>
    %c8_195 = arith.constant 8 : index
    %c0_196 = arith.constant 0 : index
    %c0_197 = arith.constant 0 : index
    %248 = vector.load %arg7[%c8_195, %c0_196, %c0_197] : memref<9x32x32xf32, #tpu.memory_space<vmem>>, vector<1x32x32xf32>
    %249 = vector.shape_cast %248 : vector<1x32x32xf32> to vector<32x32xf32>
    %cst_198 = arith.constant dense<0.000000e+00> : vector<4x32xf32>
    %250 = tpu.matmul %247, %249, %cst_198 {dimension_numbers = #tpu.dot_dimension_numbers<[1], [0], [0], [1], [0, 0, 1, 1], [], []>} : vector<4x32xf32>, vector<32x32xf32>, vector<4x32xf32> -> vector<4x32xf32>
    %251 = arith.addf %242, %250 : vector<4x32xf32>
    %c0_199 = arith.constant 0 : index
    %c0_200 = arith.constant 0 : index
    %252 = vector.load %arg8[%c0_199, %c0_200] : memref<1x32xf32, #tpu.memory_space<vmem>>, vector<1x32xf32>
    %253 = vector.broadcast %252 : vector<1x32xf32> to vector<4x32xf32>
    %254 = arith.addf %251, %253 : vector<4x32xf32>
    %cst_201 = arith.constant 0.000000e+00 : f32
    %255 = vector.broadcast %cst_201 : f32 to vector<4x32xf32>
    %256 = arith.maximumf %254, %255 : vector<4x32xf32>
    %c0_202 = arith.constant 0 : index
    %c0_203 = arith.constant 0 : index
    %c0_204 = arith.constant 0 : index
    %257 = vector.load %arg9[%c0_202, %c0_203, %c0_204] : memref<1x4x32xf32, #tpu.memory_space<vmem>>, vector<1x4x32xf32>
    %258 = vector.shape_cast %257 : vector<1x4x32xf32> to vector<4x32xf32>
    %259 = vector.shape_cast %256 : vector<4x32xf32> to vector<1x4x32xf32>
    tpu.vector_store %arg9[%c0_202, %c0_203, %c0_204], %259 {strides = array<i32>} : memref<1x4x32xf32, #tpu.memory_space<vmem>>, vector<1x4x32xf32>,
    return
  }
  func.func @transform_0(%arg0: i32) -> (i32, i32, i32) {
    %c0_i32 = arith.constant 0 : i32
    %c0_i32_0 = arith.constant 0 : i32
    %c0_i32_1 = arith.constant 0 : i32
    return %arg0, %c0_i32, %c0_i32_0 : i32, i32, i32
  }
  func.func @transform_1(%arg0: i32) -> (i32, i32, i32) {
    %c0_i32 = arith.constant 0 : i32
    %c0_i32_0 = arith.constant 0 : i32
    %c0_i32_1 = arith.constant 0 : i32
    return %arg0, %c0_i32, %c0_i32_0 : i32, i32, i32
  }
  func.func @transform_2(%arg0: i32) -> (i32, i32) {
    %c0_i32 = arith.constant 0 : i32
    %c0_i32_0 = arith.constant 0 : i32
    %c0_i32_1 = arith.constant 0 : i32
    return %c0_i32, %c0_i32_0 : i32, i32
  }
  func.func @transform_3(%arg0: i32) -> (i32, i32, i32) {
    %c0_i32 = arith.constant 0 : i32
    %c0_i32_0 = arith.constant 0 : i32
    %c0_i32_1 = arith.constant 0 : i32
    %c0_i32_2 = arith.constant 0 : i32
    return %c0_i32, %c0_i32_0, %c0_i32_1 : i32, i32, i32
  }
  func.func @transform_4(%arg0: i32) -> (i32, i32, i32) {
    %c0_i32 = arith.constant 0 : i32
    %c0_i32_0 = arith.constant 0 : i32
    %c0_i32_1 = arith.constant 0 : i32
    %c0_i32_2 = arith.constant 0 : i32
    return %c0_i32, %c0_i32_0, %c0_i32_1 : i32, i32, i32
  }
  func.func @transform_5(%arg0: i32) -> (i32, i32) {
    %c0_i32 = arith.constant 0 : i32
    %c0_i32_0 = arith.constant 0 : i32
    %c0_i32_1 = arith.constant 0 : i32
    return %c0_i32, %c0_i32_0 : i32, i32
  }
  func.func @transform_6(%arg0: i32) -> (i32, i32, i32) {
    %c0_i32 = arith.constant 0 : i32
    %c0_i32_0 = arith.constant 0 : i32
    %c0_i32_1 = arith.constant 0 : i32
    %c0_i32_2 = arith.constant 0 : i32
    return %c0_i32, %c0_i32_0, %c0_i32_1 : i32, i32, i32
  }
  func.func @transform_7(%arg0: i32) -> (i32, i32) {
    %c0_i32 = arith.constant 0 : i32
    %c0_i32_0 = arith.constant 0 : i32
    %c0_i32_1 = arith.constant 0 : i32
    return %c0_i32, %c0_i32_0 : i32, i32
  }
  func.func @transform_8(%arg0: i32) -> (i32, i32, i32) {
    %c0_i32 = arith.constant 0 : i32
    %c0_i32_0 = arith.constant 0 : i32
    %c0_i32_1 = arith.constant 0 : i32
    return %arg0, %c0_i32, %c0_i32_0 : i32, i32, i32
  }
}

</mosaic_0001>

<llo_original>
// kernel: tpu_custom_call.1
$region0: #{tpu_custom_call.1}
  #allocation0 [shape = 'u32[]', space=smem, size = 0x4, offset = 0x4, fixed_abs, tag = 'smem constant byte address 0x4 - core index']
  #allocation1 [shape = 'u32[144,128]{1,0:T(1,128)}', space=vmem, size = 0x12000, scoped, tag = 'internal scratch']
  #allocation2 [shape = 'f32[15,32]{1,0:T(8,128)}', space=vmem, size = 0x2000, scoped, tag = 'scratch operand']
  #allocation3 [shape = 'f32[15,64]{1,0:T(8,128)}', space=vmem, size = 0x2000, scoped, tag = 'scratch operand']
  #allocation4 [shape = 'f32[15,32]{1,0:T(8,128)}', space=vmem, size = 0x2000, scoped, tag = 'scratch operand']
  %s0 = inlined_call_operand.vmem [shape: f32[2,1,64], index: 0, kind: input, shape index: {}]
  %s1 = inlined_call_operand.vmem [shape: f32[2,4,32], index: 1, kind: input, shape index: {}]
  %s2 = inlined_call_operand.vmem [shape: f32[4,1], index: 2, kind: input, shape index: {}]
  %s3 = inlined_call_operand.vmem [shape: f32[9,32,32], index: 3, kind: input, shape index: {}]
  %s4 = inlined_call_operand.vmem [shape: f32[9,64,32], index: 4, kind: input, shape index: {}]
  %s5 = inlined_call_operand.vmem [shape: f32[1,32], index: 5, kind: input, shape index: {}]
  %s6 = inlined_call_operand.vmem [shape: f32[9,32,32], index: 6, kind: input, shape index: {}]
  %s7 = inlined_call_operand.vmem [shape: f32[1,32], index: 7, kind: input, shape index: {}]
  %s8 = inlined_call_operand.hbm [shape: f32[2,4,32], index: 8, kind: output, shape index: {}]
  %s9 = sld [smem:[#allocation0]]
  $region65: #{tpu_custom_call.1} parent=0
    _
  %s11 = ssub.s32 1, %s9
  %s12 = scalar_select 0, %s11, %s9
  $region1: #{tpu_custom_call.1} parent=0
    #allocation5 [shape = 'u8[4096]{0}', space=vmem, size = 0x1000, scoped, tag = 'output window, operand 0']
    #allocation6 [shape = 's32[2]{0}', space=sflag, size = 0x8, scoped, tag = 'scoped memory for tpu_custom_call.1']
    %13 = vsyncpa [#allocation6], 0
    %s14 = scalar_lea.sflag [#allocation6], 1
    %15 = vsyncpa %s14, 0
    loop: start=0, step=1, limit=4
    $region2: #{tpu_custom_call.1} parent=1 // loop_pre_header
      _
    $region3: #{tpu_custom_call.1} parent=1 // loop_header
      %s17 = sphi 0, %s21
      %p18 = scmp.ge.s32.totalorder %s17, 4
      %s27 = sphi 0, %s29
      %s30 = sphi 0, %s27
      %s31 = sphi 0, %s30
      %s47 = sphi 0, %s31
      %s53 = sphi 0, %s55
      %s56 = sphi 0, %s53
      %s57 = sphi 0, %s56
      %s73 = sphi 0, %s57
      %s77 = sphi 0, %s77
      %s79 = sphi 0, %s77
      %s80 = sphi 0, %s79
      %s94 = sphi 0, %s80
      %s98 = sphi 0, %s98
      %s100 = sphi 0, %s98
      %s101 = sphi 0, %s100
      %s115 = sphi 0, %s101
      %s119 = sphi 0, %s119
      %s121 = sphi 0, %s119
      %s122 = sphi 0, %s121
      %s136 = sphi 0, %s122
      %s140 = sphi 0, %s140
      %s142 = sphi 0, %s140
      %s143 = sphi 0, %s142
      %s157 = sphi 0, %s143
      %s161 = sphi 0, %s161
      %s163 = sphi 0, %s161
      %s164 = sphi 0, %s163
      %s178 = sphi 0, %s164
      %s182 = sphi 0, %s182
      %s184 = sphi 0, %s182
      %s185 = sphi 0, %s184
      %s199 = sphi 0, %s185
      %s205 = sphi 0, %s207
      %s208 = sphi 0, %s205
      %s209 = sphi 0, %s208
      %s225 = sphi 0, %s209
    $region4: #{tpu_custom_call.1} parent=1 // loop_header_branch
      %20 = sbr.rel (%p18) target = $region8
    $region5: #{tpu_custom_call.1} parent=1 // loop_body
      %s22 = ssub.s32 %s17, 1
      %s23 = ssub.s32 %s17, 2
      %s24 = sadd.s32 %s17, 1
      %s25 = ssub.s32 %s17, %s24
      %p26 = scmp.eq.s32.totalorder %s25, 0
      %s28 = sadd.s32 %s27, 1
      %s29 = scalar_select %p26, %s27, %s28
      %p32 = pneg %p26
      %p33 = scmp.eq.s32.totalorder %s17, 1
      %p34 = por %p32, %p33
      %p35 = scmp.ne.s32.totalorder %s27, %s30
      %p36 = scmp.eq.s32.totalorder %s17, 0
      %p37 = por %p35, %p36
      %p38 = scmp.ne.s32.totalorder %s27, %s30
      %p39 = scmp.eq.s32.totalorder %s22, 1
      %p40 = por %p38, %p39
      %p41 = scmp.ne.s32.totalorder %s30, %s31
      %p42 = scmp.eq.s32.totalorder %s22, 0
      %p43 = por %p41, %p42
      %p44 = scmp.ne.s32.totalorder %s30, %s31
      %p45 = scmp.eq.s32.totalorder %s23, 1
      %p46 = por %p44, %p45
      %p48 = scmp.ne.s32.totalorder %s31, %s47
      %p49 = scmp.eq.s32.totalorder %s23, 0
      %p50 = por %p48, %p49
      %s51 = ssub.s32 %s17, %s24
      %p52 = scmp.eq.s32.totalorder %s51, 0
      %s54 = sadd.s32 %s53, 1
      %s55 = scalar_select %p52, %s53, %s54
      %p58 = pneg %p52
      %p59 = scmp.eq.s32.totalorder %s17, 1
      %p60 = por %p58, %p59
      %p61 = scmp.ne.s32.totalorder %s53, %s56
      %p62 = scmp.eq.s32.totalorder %s17, 0
      %p63 = por %p61, %p62
      %p64 = scmp.ne.s32.totalorder %s53, %s56
      %p65 = scmp.eq.s32.totalorder %s22, 1
      %p66 = por %p64, %p65
      %p67 = scmp.ne.s32.totalorder %s56, %s57
      %p68 = scmp.eq.s32.totalorder %s22, 0
      %p69 = por %p67, %p68
      %p70 = scmp.ne.s32.totalorder %s56, %s57
      %p71 = scmp.eq.s32.totalorder %s23, 1
      %p72 = por %p70, %p71
      %p74 = scmp.ne.s32.totalorder %s57, %s73
      %p75 = scmp.eq.s32.totalorder %s23, 0
      %p76 = por %p74, %p75
      %s78 = sadd.s32 %s77, 1
      %p81 = scmp.eq.s32.totalorder %s17, 1
      %p82 = scmp.ne.s32.totalorder %s77, %s79
      %p83 = scmp.eq.s32.totalorder %s17, 0
      %p84 = por %p82, %p83
      %p85 = scmp.ne.s32.totalorder %s77, %s79
      %p86 = scmp.eq.s32.totalorder %s22, 1
      %p87 = por %p85, %p86
      %p88 = scmp.ne.s32.totalorder %s79, %s80
      %p89 = scmp.eq.s32.totalorder %s22, 0
      %p90 = por %p88, %p89
      %p91 = scmp.ne.s32.totalorder %s79, %s80
      %p92 = scmp.eq.s32.totalorder %s23, 1
      %p93 = por %p91, %p92
      %p95 = scmp.ne.s32.totalorder %s80, %s94
      %p96 = scmp.eq.s32.totalorder %s23, 0
      %p97 = por %p95, %p96
      %s99 = sadd.s32 %s98, 1
      %p102 = scmp.eq.s32.totalorder %s17, 1
      %p103 = scmp.ne.s32.totalorder %s98, %s100
      %p104 = scmp.eq.s32.totalorder %s17, 0
      %p105 = por %p103, %p104
      %p106 = scmp.ne.s32.totalorder %s98, %s100
      %p107 = scmp.eq.s32.totalorder %s22, 1
      %p108 = por %p106, %p107
      %p109 = scmp.ne.s32.totalorder %s100, %s101
      %p110 = scmp.eq.s32.totalorder %s22, 0
      %p111 = por %p109, %p110
      %p112 = scmp.ne.s32.totalorder %s100, %s101
      %p113 = scmp.eq.s32.totalorder %s23, 1
      %p114 = por %p112, %p113
      %p116 = scmp.ne.s32.totalorder %s101, %s115
      %p117 = scmp.eq.s32.totalorder %s23, 0
      %p118 = por %p116, %p117
      %s120 = sadd.s32 %s119, 1
      %p123 = scmp.eq.s32.totalorder %s17, 1
      %p124 = scmp.ne.s32.totalorder %s119, %s121
      %p125 = scmp.eq.s32.totalorder %s17, 0
      %p126 = por %p124, %p125
      %p127 = scmp.ne.s32.totalorder %s119, %s121
      %p128 = scmp.eq.s32.totalorder %s22, 1
      %p129 = por %p127, %p128
      %p130 = scmp.ne.s32.totalorder %s121, %s122
      %p131 = scmp.eq.s32.totalorder %s22, 0
      %p132 = por %p130, %p131
      %p133 = scmp.ne.s32.totalorder %s121, %s122
      %p134 = scmp.eq.s32.totalorder %s23, 1
      %p135 = por %p133, %p134
      %p137 = scmp.ne.s32.totalorder %s122, %s136
      %p138 = scmp.eq.s32.totalorder %s23, 0
      %p139 = por %p137, %p138
      %s141 = sadd.s32 %s140, 1
      %p144 = scmp.eq.s32.totalorder %s17, 1
      %p145 = scmp.ne.s32.totalorder %s140, %s142
      %p146 = scmp.eq.s32.totalorder %s17, 0
      %p147 = por %p145, %p146
      %p148 = scmp.ne.s32.totalorder %s140, %s142
      %p149 = scmp.eq.s32.totalorder %s22, 1
      %p150 = por %p148, %p149
      %p151 = scmp.ne.s32.totalorder %s142, %s143
      %p152 = scmp.eq.s32.totalorder %s22, 0
      %p153 = por %p151, %p152
      %p154 = scmp.ne.s32.totalorder %s142, %s143
      %p155 = scmp.eq.s32.totalorder %s23, 1
      %p156 = por %p154, %p155
      %p158 = scmp.ne.s32.totalorder %s143, %s157
      %p159 = scmp.eq.s32.totalorder %s23, 0
      %p160 = por %p158, %p159
      %s162 = sadd.s32 %s161, 1
      %p165 = scmp.eq.s32.totalorder %s17, 1
      %p166 = scmp.ne.s32.totalorder %s161, %s163
      %p167 = scmp.eq.s32.totalorder %s17, 0
      %p168 = por %p166, %p167
      %p169 = scmp.ne.s32.totalorder %s161, %s163
      %p170 = scmp.eq.s32.totalorder %s22, 1
      %p171 = por %p169, %p170
      %p172 = scmp.ne.s32.totalorder %s163, %s164
      %p173 = scmp.eq.s32.totalorder %s22, 0
      %p174 = por %p172, %p173
      %p175 = scmp.ne.s32.totalorder %s163, %s164
      %p176 = scmp.eq.s32.totalorder %s23, 1
      %p177 = por %p175, %p176
      %p179 = scmp.ne.s32.totalorder %s164, %s178
      %p180 = scmp.eq.s32.totalorder %s23, 0
      %p181 = por %p179, %p180
      %s183 = sadd.s32 %s182, 1
      %p186 = scmp.eq.s32.totalorder %s17, 1
      %p187 = scmp.ne.s32.totalorder %s182, %s184
      %p188 = scmp.eq.s32.totalorder %s17, 0
      %p189 = por %p187, %p188
      %p190 = scmp.ne.s32.totalorder %s182, %s184
      %p191 = scmp.eq.s32.totalorder %s22, 1
      %p192 = por %p190, %p191
      %p193 = scmp.ne.s32.totalorder %s184, %s185
      %p194 = scmp.eq.s32.totalorder %s22, 0
      %p195 = por %p193, %p194
      %p196 = scmp.ne.s32.totalorder %s184, %s185
      %p197 = scmp.eq.s32.totalorder %s23, 1
      %p198 = por %p196, %p197
      %p200 = scmp.ne.s32.totalorder %s185, %s199
      %p201 = scmp.eq.s32.totalorder %s23, 0
      %p202 = por %p200, %p201
      %s203 = ssub.s32 %s17, %s24
      %p204 = scmp.eq.s32.totalorder %s203, 0
      %s206 = sadd.s32 %s205, 1
      %s207 = scalar_select %p204, %s205, %s206
      %p210 = pneg %p204
      %p211 = scmp.eq.s32.totalorder %s17, 1
      %p212 = por %p210, %p211
      %p213 = scmp.ne.s32.totalorder %s205, %s208
      %p214 = scmp.eq.s32.totalorder %s17, 0
      %p215 = por %p213, %p214
      %p216 = scmp.ne.s32.totalorder %s205, %s208
      %p217 = scmp.eq.s32.totalorder %s22, 1
      %p218 = por %p216, %p217
      %p219 = scmp.ne.s32.totalorder %s208, %s209
      %p220 = scmp.eq.s32.totalorder %s22, 0
      %p221 = por %p219, %p220
      %p222 = scmp.ne.s32.totalorder %s208, %s209
      %p223 = scmp.eq.s32.totalorder %s23, 1
      %p224 = por %p222, %p223
      %p226 = scmp.ne.s32.totalorder %s209, %s225
      %p227 = scmp.eq.s32.totalorder %s23, 0
      %p228 = por %p226, %p227
      %p229 = scmp.le.s32.totalorder 1, %s17
      %p230 = scmp.lt.s32.totalorder %s17, 3
      %p231 = pnand %p229, %p230
      %p232 = pneg %p231
      // Predicated region
      $region9: #{tpu_custom_call.1} parent=5 // pred_check
        _
      $region10: #{tpu_custom_call.1} parent=5 // pred_check_branch
        %234 = sbr.rel (%p231) target = $region12
      $region11: #{tpu_custom_call.1} parent=5 // pred_region
        %s235 = ssub.s32 %s17, 1
        // Predicated region
        $region13: #{tpu_custom_call.1} parent=11 // pred_check
          %p236 = pneg %p90
        $region14: #{tpu_custom_call.1} parent=11 // pred_check_branch
          %238 = sbr.rel (%p236) target = $region16
        $region15: #{tpu_custom_call.1} parent=11 // pred_region
          _
        $region16: #{tpu_custom_call.1} parent=11 // pred_fallthru
          _
        // Predicated region
        $region17: #{tpu_custom_call.1} parent=11 // pred_check
          %p239 = pneg %p111
        $region18: #{tpu_custom_call.1} parent=11 // pred_check_branch
          %241 = sbr.rel (%p239) target = $region20
        $region19: #{tpu_custom_call.1} parent=11 // pred_region
          _
        $region20: #{tpu_custom_call.1} parent=11 // pred_fallthru
          _
        // Predicated region
        $region21: #{tpu_custom_call.1} parent=11 // pred_check
          %p242 = pneg %p132
        $region22: #{tpu_custom_call.1} parent=11 // pred_check_branch
          %244 = sbr.rel (%p242) target = $region24
        $region23: #{tpu_custom_call.1} parent=11 // pred_region
          _
        $region24: #{tpu_custom_call.1} parent=11 // pred_fallthru
          _
        // Predicated region
        $region25: #{tpu_custom_call.1} parent=11 // pred_check
          %p245 = pneg %p153
        $region26: #{tpu_custom_call.1} parent=11 // pred_check_branch
          %247 = sbr.rel (%p245) target = $region28
        $region27: #{tpu_custom_call.1} parent=11 // pred_region
          _
        $region28: #{tpu_custom_call.1} parent=11 // pred_fallthru
          _
        // Predicated region
        $region29: #{tpu_custom_call.1} parent=11 // pred_check
          %p248 = pneg %p174
        $region30: #{tpu_custom_call.1} parent=11 // pred_check_branch
          %250 = sbr.rel (%p248) target = $region32
        $region31: #{tpu_custom_call.1} parent=11 // pred_region
          _
        $region32: #{tpu_custom_call.1} parent=11 // pred_fallthru
          _
        // Predicated region
        $region33: #{tpu_custom_call.1} parent=11 // pred_check
          %p251 = pneg %p195
        $region34: #{tpu_custom_call.1} parent=11 // pred_check_branch
          %253 = sbr.rel (%p251) target = $region36
        $region35: #{tpu_custom_call.1} parent=11 // pred_region
          _
        $region36: #{tpu_custom_call.1} parent=11 // pred_fallthru
          _
      $region12: #{tpu_custom_call.1} parent=5 // pred_fallthru
        _
      %p254 = scmp.lt.s32.totalorder %s17, 2
      // Predicated region
      $region37: #{tpu_custom_call.1} parent=5 // pred_check
        %p255 = pneg %p254
      $region38: #{tpu_custom_call.1} parent=5 // pred_check_branch
        %257 = sbr.rel (%p255) target = $region40
      $region39: #{tpu_custom_call.1} parent=5 // pred_region
        // Predicated region
        $region41: #{tpu_custom_call.1} parent=39 // pred_check
          %p258 = pneg %p37
        $region42: #{tpu_custom_call.1} parent=39 // pred_check_branch
          %260 = sbr.rel (%p258) target = $region44
        $region43: #{tpu_custom_call.1} parent=39 // pred_region
          %p261 = scmp.lt.s32.totalorder %s17, 1
          %s262 = scalar_select %p261, %s17, 1
          %s263 = scalar_lea.vmem %s0, %s262
        $region44: #{tpu_custom_call.1} parent=39 // pred_fallthru
          _
        // Predicated region
        $region45: #{tpu_custom_call.1} parent=39 // pred_check
          %p264 = pneg %p63
        $region46: #{tpu_custom_call.1} parent=39 // pred_check_branch
          %266 = sbr.rel (%p264) target = $region48
        $region47: #{tpu_custom_call.1} parent=39 // pred_region
          %p267 = scmp.lt.s32.totalorder %s17, 1
          %s268 = scalar_select %p267, %s17, 1
          %s269 = smul.addr %s268, 4
          %s270 = scalar_lea.vmem %s1, %s269
        $region48: #{tpu_custom_call.1} parent=39 // pred_fallthru
          _
      $region40: #{tpu_custom_call.1} parent=5 // pred_fallthru
        _
      %p271 = scmp.le.s32.totalorder 1, %s17
      %p272 = scmp.lt.s32.totalorder %s17, 3
      %p273 = pnand %p271, %p272
      %p274 = pneg %p273
      // Predicated region
      $region49: #{tpu_custom_call.1} parent=5 // pred_check
        _
      $region50: #{tpu_custom_call.1} parent=5 // pred_check_branch
        %276 = sbr.rel (%p273) target = $region52
      $region51: #{tpu_custom_call.1} parent=5 // pred_region
        %s277 = ssub.s32 %s17, 1
        %p278 = scmp.lt.s32.totalorder %s22, 1
        %s279 = scalar_select %p278, %s22, 1
        %s280 = scalar_lea.vmem %s0, %s279
        %p281 = pneg %p43
        %p282 = pneg %p40
        %p283 = scmp.lt.s32.totalorder %s22, 1
        %s284 = scalar_select %p283, %s22, 1
        %s285 = smul.addr %s284, 4
        %s286 = scalar_lea.vmem %s1, %s285
        %p287 = pneg %p69
        %p288 = pneg %p66
        %p289 = pneg %p90
        %p290 = pneg %p87
        %p291 = pneg %p111
        %p292 = pneg %p108
        %p293 = pneg %p132
        %p294 = pneg %p129
        %p295 = pneg %p153
        %p296 = pneg %p150
        %p297 = pneg %p174
        %p298 = pneg %p171
        %p299 = pneg %p195
        %p300 = pneg %p192
        %p301 = pneg %p221
        %p302 = pneg %p218
        %s303 = sand.u32 %s208, 1
        %s304 = scalar_lea.sflag [#allocation6], %s303
        %s305 = sand.u32 %s208, 1
        %s306 = smul.addr %s305, 4
        %s307 = scalar_lea.vmem [#allocation5], %s306
        %p308 = scmp.lt.s32.totalorder %s22, 1
        %s309 = scalar_select %p308, %s22, 1
        %s310 = scalar_lea.vmem %s0, %s309
        %p311 = scmp.lt.s32.totalorder %s22, 1
        %s312 = scalar_select %p311, %s22, 1
        %s313 = smul.addr %s312, 4
        %s314 = scalar_lea.vmem %s1, %s313
        %v315 = vlaneseq
        %v316 = vshrl.u32 %v315, 7
        %vm317 = vcmp.lt.s32.totalorder %v316, 0
        %v318 = vsub.s32 0, %v316
        %v319 = vsel %vm317, %v318, %v316
        %v320 = vshrl.u32 %v319, 1
        %v321 = vand.u32 %v319, 1
        %v322 = vsub.s32 0, %v321
        %v323 = vsel %vm317, %v322, %v321
        %vm324 = vcmp.ne.s32.totalorder %v323, 0
        %vm325 = vcmp.lt.s32.totalorder %v323, 0
        %vm326 = vmand %vm325, %vm324
        %v327 = vadd.s32 %v323, 2
        %v328 = vsel %vm326, %v327, %v323
        %vm329 = vcmp.eq.s32.totalorder %v328, 0
        %vm330 = vcmp.eq.s32.totalorder %v328, 1
        %vm331 = vcmask 261120
        %332 = vst.msk [vmem:[#allocation2] sm:$0xff] %vm331, 0.0
        %vm333 = vcmask 260096
        %334 = vst.msk [vmem:[#allocation2 + $0x8] sm:$0x7f] %vm333, 0.0
        %vm335 = vcmask 523264
        %336 = vst.msk [vmem:[#allocation3] sm:$0xff] %vm335, 0.0
        %vm337 = vcmask 522240
        %338 = vst.msk [vmem:[#allocation3 + $0x8] sm:$0x7f] %vm337, 0.0
        %v339 = vld [vmem:[%s314] sm:$0xf]
        %vm340 = vcmask 257024
        %341 = vst.msk [vmem:[#allocation2 + $0x8] sm:$0xf] %vm340, %v339
        %v342 = vld [vmem:[%s310] sm:$0x1]
        %v344 = vlaneseq
        %v345 = vshrl.u32 %v344, 7
        %v346 = vsub.s32 0, %v345
        %v347 = vrot.slane %v342, %v346
        %vm349 = vcmask 519168
        %350 = vst.msk [vmem:[#allocation3 + $0x8] sm:$0xf] %vm349, %v347
        %v351 = vld [vmem:[#allocation2 + $0x5] sm:$0xf]
        %v352 = vsel %vm329, 1, 0
        %vm353 = vcmp.eq.s32.totalorder %v352, 1
        %v354 = vsel %vm353, 0.0, %v351
        %v355 = vld [vmem:[%s3] sm:$0xff]
        %v356 = vld [vmem:[%s3 + $0x8] sm:$0xff]
        %v357 = vld [vmem:[%s3 + $0x10] sm:$0xff]
        %v358 = vld [vmem:[%s3 + $0x18] sm:$0xff]
        %v359 = vld [vmem:[#allocation2 + $0x6] sm:$0xf]
        %s360 = scalar_lea.vmem %s3, 32
        %v361 = vld [vmem:[%s360] sm:$0xff]
        %v362 = vld [vmem:[%s360 + $0x8] sm:$0xff]
        %v363 = vld [vmem:[%s360 + $0x10] sm:$0xff]
        %v364 = vld [vmem:[%s360 + $0x18] sm:$0xff]
        %v366 = vsel %vm331, %v359, 0
        %368 = vmatprep.subr.mxu0 0.0
        %369 = vmatpush1.msra.mxu0 %v361
        %370 = vmatprep.subr.mxu0 0.0
        %371 = vmatpush1.msra.mxu0 %v362
        %372 = vmatprep.subr.mxu0 0.0
        %373 = vmatpush1.msra.mxu0 %v363
        %374 = vmatprep.subr.mxu0 0.0
        %375 = vmatpush1.msra.mxu0 %v364
        %376 = vmatprep.subr.mxu0 0.0
        %377 = vmatpush1.msra.mxu0 0.0
        %378 = vmatprep.subr.mxu0 0.0
        %379 = vmatpush1.msra.mxu0 0.0
        %380 = vmatprep.subr.mxu0 0.0
        %381 = vmatpush1.msra.mxu0 0.0
        %382 = vmatprep.subr.mxu0 0.0
        %383 = vmatpush1.msra.mxu0 0.0
        %384 = vmatprep.subr.mxu0 0.0
        %385 = vmatpush1.msra.mxu0 0.0
        %386 = vmatprep.subr.mxu0 0.0
        %387 = vmatpush1.msra.mxu0 0.0
        %388 = vmatprep.subr.mxu0 0.0
        %389 = vmatpush1.msra.mxu0 0.0
        %390 = vmatprep.subr.mxu0 0.0
        %391 = vmatpush1.msra.mxu0 0.0
        %392 = vmatprep.subr.mxu0 0.0
        %393 = vmatpush1.msra.mxu0 0.0
        %394 = vmatprep.subr.mxu0 0.0
        %395 = vmatpush1.msra.mxu0 0.0
        %396 = vmatprep.subr.mxu0 0.0
        %397 = vmatpush1.msra.mxu0 0.0
        %398 = vmatprep.subr.mxu0 0.0
        %399 = vmatpush1.msra.mxu0 0.0
        %400 = vmatprep.subr.mxu0 0.0
        %401 = vmatpush1.msra.mxu0 0.0
        %402 = vmatprep.subr.mxu0 0.0
        %403 = vmatpush1.msra.mxu0 0.0
        %404 = vmatprep.subr.mxu0 0.0
        %405 = vmatpush1.msra.mxu0 0.0
        %406 = vmatprep.subr.mxu0 0.0
        %407 = vmatpush1.msra.mxu0 0.0
        %408 = vmatprep.subr.mxu0 0.0
        %409 = vmatpush1.msra.mxu0 0.0
        %410 = vmatprep.subr.mxu0 0.0
        %411 = vmatpush1.msra.mxu0 0.0
        %412 = vmatprep.subr.mxu0 0.0
        %413 = vmatpush1.msra.mxu0 0.0
        %414 = vmatprep.subr.mxu0 0.0
        %415 = vmatpush1.msra.mxu0 0.0
        %416 = vmatprep.subr.mxu0 0.0
        %417 = vmatpush1.msra.mxu0 0.0
        %418 = vmatprep.subr.mxu0 0.0
        %419 = vmatpush1.msra.mxu0 0.0
        %420 = vmatprep.subr.mxu0 0.0
        %421 = vmatpush1.msra.mxu0 0.0
        %422 = vmatprep.subr.mxu0 0.0
        %423 = vmatpush1.msra.mxu0 0.0
        %424 = vmatprep.subr.mxu0 0.0
        %425 = vmatpush1.msra.mxu0 0.0
        %426 = vmatprep.subr.mxu0 0.0
        %427 = vmatpush1.msra.mxu0 0.0
        %428 = vmatprep.subr.mxu0 0.0
        %429 = vmatpush1.msra.mxu0 0.0
        %430 = vmatprep.subr.mxu0 0.0
        %431 = vmatpush1.msra.mxu0 0.0
        %432 = vmatprep.mubr.f32.mxu0 0.0
        %433 = vmatmul.mubr.f32.gmra.mrb[0].mxu0 %v366
        %v434 = vpop.f32.mrb[0].mxu0
        %v435 = vadd.f32 0.0, %v434
        %v436 = vpop.f32.mrb[0].mxu0
        %437 = vdwg.mxu0
        %v439 = vsel %vm331, %v354, 0
        %441 = vmatprep.subr.mxu0 0.0
        %442 = vmatpush1.msra.mxu0 %v355
        %443 = vmatprep.subr.mxu0 0.0
        %444 = vmatpush1.msra.mxu0 %v356
        %445 = vmatprep.subr.mxu0 0.0
        %446 = vmatpush1.msra.mxu0 %v357
        %447 = vmatprep.subr.mxu0 0.0
        %448 = vmatpush1.msra.mxu0 %v358
        %449 = vmatprep.subr.mxu0 0.0
        %450 = vmatpush1.msra.mxu0 0.0
        %451 = vmatprep.subr.mxu0 0.0
        %452 = vmatpush1.msra.mxu0 0.0
        %453 = vmatprep.subr.mxu0 0.0
        %454 = vmatpush1.msra.mxu0 0.0
        %455 = vmatprep.subr.mxu0 0.0
        %456 = vmatpush1.msra.mxu0 0.0
        %457 = vmatprep.subr.mxu0 0.0
        %458 = vmatpush1.msra.mxu0 0.0
        %459 = vmatprep.subr.mxu0 0.0
        %460 = vmatpush1.msra.mxu0 0.0
        %461 = vmatprep.subr.mxu0 0.0
        %462 = vmatpush1.msra.mxu0 0.0
        %463 = vmatprep.subr.mxu0 0.0
        %464 = vmatpush1.msra.mxu0 0.0
        %465 = vmatprep.subr.mxu0 0.0
        %466 = vmatpush1.msra.mxu0 0.0
        %467 = vmatprep.subr.mxu0 0.0
        %468 = vmatpush1.msra.mxu0 0.0
        %469 = vmatprep.subr.mxu0 0.0
        %470 = vmatpush1.msra.mxu0 0.0
        %471 = vmatprep.subr.mxu0 0.0
        %472 = vmatpush1.msra.mxu0 0.0
        %473 = vmatprep.subr.mxu0 0.0
        %474 = vmatpush1.msra.mxu0 0.0
        %475 = vmatprep.subr.mxu0 0.0
        %476 = vmatpush1.msra.mxu0 0.0
        %477 = vmatprep.subr.mxu0 0.0
        %478 = vmatpush1.msra.mxu0 0.0
        %479 = vmatprep.subr.mxu0 0.0
        %480 = vmatpush1.msra.mxu0 0.0
        %481 = vmatprep.subr.mxu0 0.0
        %482 = vmatpush1.msra.mxu0 0.0
        %483 = vmatprep.subr.mxu0 0.0
        %484 = vmatpush1.msra.mxu0 0.0
        %485 = vmatprep.subr.mxu0 0.0
        %486 = vmatpush1.msra.mxu0 0.0
        %487 = vmatprep.subr.mxu0 0.0
        %488 = vmatpush1.msra.mxu0 0.0
        %489 = vmatprep.subr.mxu0 0.0
        %490 = vmatpush1.msra.mxu0 0.0
        %491 = vmatprep.subr.mxu0 0.0
        %492 = vmatpush1.msra.mxu0 0.0
        %493 = vmatprep.subr.mxu0 0.0
        %494 = vmatpush1.msra.mxu0 0.0
        %495 = vmatprep.subr.mxu0 0.0
        %496 = vmatpush1.msra.mxu0 0.0
        %497 = vmatprep.subr.mxu0 0.0
        %498 = vmatpush1.msra.mxu0 0.0
        %499 = vmatprep.subr.mxu0 0.0
        %500 = vmatpush1.msra.mxu0 0.0
        %501 = vmatprep.subr.mxu0 0.0
        %502 = vmatpush1.msra.mxu0 0.0
        %503 = vmatprep.subr.mxu0 0.0
        %504 = vmatpush1.msra.mxu0 0.0
        %505 = vmatprep.mubr.f32.mxu0 0.0
        %506 = vmatmul.mubr.f32.gmra.mrb[0].mxu0 %v439
        %v507 = vpop.f32.mrb[0].mxu0
        %v508 = vadd.f32 %v435, %v507
        %v509 = vpop.f32.mrb[0].mxu0
        %510 = vdwg.mxu0
        %v511 = vld [vmem:[#allocation2 + $0x7] sm:$0xf]
        %v512 = vsel %vm330, 1, 0
        %vm513 = vcmp.eq.s32.totalorder %v512, 1
        %v514 = vsel %vm513, 0.0, %v511
        %s515 = scalar_lea.vmem %s3, 64
        %v516 = vld [vmem:[%s515] sm:$0xff]
        %v517 = vld [vmem:[%s515 + $0x8] sm:$0xff]
        %v518 = vld [vmem:[%s515 + $0x10] sm:$0xff]
        %v519 = vld [vmem:[%s515 + $0x18] sm:$0xff]
        %v521 = vsel %vm331, %v514, 0
        %523 = vmatprep.subr.mxu0 0.0
        %524 = vmatpush1.msra.mxu0 %v516
        %525 = vmatprep.subr.mxu0 0.0
        %526 = vmatpush1.msra.mxu0 %v517
        %527 = vmatprep.subr.mxu0 0.0
        %528 = vmatpush1.msra.mxu0 %v518
        %529 = vmatprep.subr.mxu0 0.0
        %530 = vmatpush1.msra.mxu0 %v519
        %531 = vmatprep.subr.mxu0 0.0
        %532 = vmatpush1.msra.mxu0 0.0
        %533 = vmatprep.subr.mxu0 0.0
        %534 = vmatpush1.msra.mxu0 0.0
        %535 = vmatprep.subr.mxu0 0.0
        %536 = vmatpush1.msra.mxu0 0.0
        %537 = vmatprep.subr.mxu0 0.0
        %538 = vmatpush1.msra.mxu0 0.0
        %539 = vmatprep.subr.mxu0 0.0
        %540 = vmatpush1.msra.mxu0 0.0
        %541 = vmatprep.subr.mxu0 0.0
        %542 = vmatpush1.msra.mxu0 0.0
        %543 = vmatprep.subr.mxu0 0.0
        %544 = vmatpush1.msra.mxu0 0.0
        %545 = vmatprep.subr.mxu0 0.0
        %546 = vmatpush1.msra.mxu0 0.0
        %547 = vmatprep.subr.mxu0 0.0
        %548 = vmatpush1.msra.mxu0 0.0
        %549 = vmatprep.subr.mxu0 0.0
        %550 = vmatpush1.msra.mxu0 0.0
        %551 = vmatprep.subr.mxu0 0.0
        %552 = vmatpush1.msra.mxu0 0.0
        %553 = vmatprep.subr.mxu0 0.0
        %554 = vmatpush1.msra.mxu0 0.0
        %555 = vmatprep.subr.mxu0 0.0
        %556 = vmatpush1.msra.mxu0 0.0
        %557 = vmatprep.subr.mxu0 0.0
        %558 = vmatpush1.msra.mxu0 0.0
        %559 = vmatprep.subr.mxu0 0.0
        %560 = vmatpush1.msra.mxu0 0.0
        %561 = vmatprep.subr.mxu0 0.0
        %562 = vmatpush1.msra.mxu0 0.0
        %563 = vmatprep.subr.mxu0 0.0
        %564 = vmatpush1.msra.mxu0 0.0
        %565 = vmatprep.subr.mxu0 0.0
        %566 = vmatpush1.msra.mxu0 0.0
        %567 = vmatprep.subr.mxu0 0.0
        %568 = vmatpush1.msra.mxu0 0.0
        %569 = vmatprep.subr.mxu0 0.0
        %570 = vmatpush1.msra.mxu0 0.0
        %571 = vmatprep.subr.mxu0 0.0
        %572 = vmatpush1.msra.mxu0 0.0
        %573 = vmatprep.subr.mxu0 0.0
        %574 = vmatpush1.msra.mxu0 0.0
        %575 = vmatprep.subr.mxu0 0.0
        %576 = vmatpush1.msra.mxu0 0.0
        %577 = vmatprep.subr.mxu0 0.0
        %578 = vmatpush1.msra.mxu0 0.0
        %579 = vmatprep.subr.mxu0 0.0
        %580 = vmatpush1.msra.mxu0 0.0
        %581 = vmatprep.subr.mxu0 0.0
        %582 = vmatpush1.msra.mxu0 0.0
        %583 = vmatprep.subr.mxu0 0.0
        %584 = vmatpush1.msra.mxu0 0.0
        %585 = vmatprep.subr.mxu0 0.0
        %586 = vmatpush1.msra.mxu0 0.0
        %587 = vmatprep.mubr.f32.mxu0 0.0
        %588 = vmatmul.mubr.f32.gmra.mrb[0].mxu0 %v521
        %v589 = vpop.f32.mrb[0].mxu0
        %v590 = vadd.f32 0.0, %v589
        %v591 = vpop.f32.mrb[0].mxu0
        %592 = vdwg.mxu0
        %v593 = vadd.f32 %v508, %v590
        %v594 = vsel %vm353, 0.0, %v511
        %s595 = scalar_lea.vmem %s3, 96
        %v596 = vld [vmem:[%s595] sm:$0xff]
        %v597 = vld [vmem:[%s595 + $0x8] sm:$0xff]
        %v598 = vld [vmem:[%s595 + $0x10] sm:$0xff]
        %v599 = vld [vmem:[%s595 + $0x18] sm:$0xff]
        %v601 = vsel %vm331, %v594, 0
        %603 = vmatprep.subr.mxu0 0.0
        %604 = vmatpush1.msra.mxu0 %v596
        %605 = vmatprep.subr.mxu0 0.0
        %606 = vmatpush1.msra.mxu0 %v597
        %607 = vmatprep.subr.mxu0 0.0
        %608 = vmatpush1.msra.mxu0 %v598
        %609 = vmatprep.subr.mxu0 0.0
        %610 = vmatpush1.msra.mxu0 %v599
        %611 = vmatprep.subr.mxu0 0.0
        %612 = vmatpush1.msra.mxu0 0.0
        %613 = vmatprep.subr.mxu0 0.0
        %614 = vmatpush1.msra.mxu0 0.0
        %615 = vmatprep.subr.mxu0 0.0
        %616 = vmatpush1.msra.mxu0 0.0
        %617 = vmatprep.subr.mxu0 0.0
        %618 = vmatpush1.msra.mxu0 0.0
        %619 = vmatprep.subr.mxu0 0.0
        %620 = vmatpush1.msra.mxu0 0.0
        %621 = vmatprep.subr.mxu0 0.0
        %622 = vmatpush1.msra.mxu0 0.0
        %623 = vmatprep.subr.mxu0 0.0
        %624 = vmatpush1.msra.mxu0 0.0
        %625 = vmatprep.subr.mxu0 0.0
        %626 = vmatpush1.msra.mxu0 0.0
        %627 = vmatprep.subr.mxu0 0.0
        %628 = vmatpush1.msra.mxu0 0.0
        %629 = vmatprep.subr.mxu0 0.0
        %630 = vmatpush1.msra.mxu0 0.0
        %631 = vmatprep.subr.mxu0 0.0
        %632 = vmatpush1.msra.mxu0 0.0
        %633 = vmatprep.subr.mxu0 0.0
        %634 = vmatpush1.msra.mxu0 0.0
        %635 = vmatprep.subr.mxu0 0.0
        %636 = vmatpush1.msra.mxu0 0.0
        %637 = vmatprep.subr.mxu0 0.0
        %638 = vmatpush1.msra.mxu0 0.0
        %639 = vmatprep.subr.mxu0 0.0
        %640 = vmatpush1.msra.mxu0 0.0
        %641 = vmatprep.subr.mxu0 0.0
        %642 = vmatpush1.msra.mxu0 0.0
        %643 = vmatprep.subr.mxu0 0.0
        %644 = vmatpush1.msra.mxu0 0.0
        %645 = vmatprep.subr.mxu0 0.0
        %646 = vmatpush1.msra.mxu0 0.0
        %647 = vmatprep.subr.mxu0 0.0
        %648 = vmatpush1.msra.mxu0 0.0
        %649 = vmatprep.subr.mxu0 0.0
        %650 = vmatpush1.msra.mxu0 0.0
        %651 = vmatprep.subr.mxu0 0.0
        %652 = vmatpush1.msra.mxu0 0.0
        %653 = vmatprep.subr.mxu0 0.0
        %654 = vmatpush1.msra.mxu0 0.0
        %655 = vmatprep.subr.mxu0 0.0
        %656 = vmatpush1.msra.mxu0 0.0
        %657 = vmatprep.subr.mxu0 0.0
        %658 = vmatpush1.msra.mxu0 0.0
        %659 = vmatprep.subr.mxu0 0.0
        %660 = vmatpush1.msra.mxu0 0.0
        %661 = vmatprep.subr.mxu0 0.0
        %662 = vmatpush1.msra.mxu0 0.0
        %663 = vmatprep.subr.mxu0 0.0
        %664 = vmatpush1.msra.mxu0 0.0
        %665 = vmatprep.subr.mxu0 0.0
        %666 = vmatpush1.msra.mxu0 0.0
        %667 = vmatprep.mubr.f32.mxu0 0.0
        %668 = vmatmul.mubr.f32.gmra.mrb[0].mxu0 %v601
        %v669 = vpop.f32.mrb[0].mxu0
        %v670 = vadd.f32 0.0, %v669
        %v671 = vpop.f32.mrb[0].mxu0
        %672 = vdwg.mxu0
        %v673 = vadd.f32 %v593, %v670
        %v674 = vld [vmem:[#allocation2 + $0x8] sm:$0xf]
        %s675 = scalar_lea.vmem %s3, 128
        %v676 = vld [vmem:[%s675] sm:$0xff]
        %v677 = vld [vmem:[%s675 + $0x8] sm:$0xff]
        %v678 = vld [vmem:[%s675 + $0x10] sm:$0xff]
        %v679 = vld [vmem:[%s675 + $0x18] sm:$0xff]
        %v681 = vsel %vm331, %v674, 0
        %683 = vmatprep.subr.mxu0 0.0
        %684 = vmatpush1.msra.mxu0 %v676
        %685 = vmatprep.subr.mxu0 0.0
        %686 = vmatpush1.msra.mxu0 %v677
        %687 = vmatprep.subr.mxu0 0.0
        %688 = vmatpush1.msra.mxu0 %v678
        %689 = vmatprep.subr.mxu0 0.0
        %690 = vmatpush1.msra.mxu0 %v679
        %691 = vmatprep.subr.mxu0 0.0
        %692 = vmatpush1.msra.mxu0 0.0
        %693 = vmatprep.subr.mxu0 0.0
        %694 = vmatpush1.msra.mxu0 0.0
        %695 = vmatprep.subr.mxu0 0.0
        %696 = vmatpush1.msra.mxu0 0.0
        %697 = vmatprep.subr.mxu0 0.0
        %698 = vmatpush1.msra.mxu0 0.0
        %699 = vmatprep.subr.mxu0 0.0
        %700 = vmatpush1.msra.mxu0 0.0
        %701 = vmatprep.subr.mxu0 0.0
        %702 = vmatpush1.msra.mxu0 0.0
        %703 = vmatprep.subr.mxu0 0.0
        %704 = vmatpush1.msra.mxu0 0.0
        %705 = vmatprep.subr.mxu0 0.0
        %706 = vmatpush1.msra.mxu0 0.0
        %707 = vmatprep.subr.mxu0 0.0
        %708 = vmatpush1.msra.mxu0 0.0
        %709 = vmatprep.subr.mxu0 0.0
        %710 = vmatpush1.msra.mxu0 0.0
        %711 = vmatprep.subr.mxu0 0.0
        %712 = vmatpush1.msra.mxu0 0.0
        %713 = vmatprep.subr.mxu0 0.0
        %714 = vmatpush1.msra.mxu0 0.0
        %715 = vmatprep.subr.mxu0 0.0
        %716 = vmatpush1.msra.mxu0 0.0
        %717 = vmatprep.subr.mxu0 0.0
        %718 = vmatpush1.msra.mxu0 0.0
        %719 = vmatprep.subr.mxu0 0.0
        %720 = vmatpush1.msra.mxu0 0.0
        %721 = vmatprep.subr.mxu0 0.0
        %722 = vmatpush1.msra.mxu0 0.0
        %723 = vmatprep.subr.mxu0 0.0
        %724 = vmatpush1.msra.mxu0 0.0
        %725 = vmatprep.subr.mxu0 0.0
        %726 = vmatpush1.msra.mxu0 0.0
        %727 = vmatprep.subr.mxu0 0.0
        %728 = vmatpush1.msra.mxu0 0.0
        %729 = vmatprep.subr.mxu0 0.0
        %730 = vmatpush1.msra.mxu0 0.0
        %731 = vmatprep.subr.mxu0 0.0
        %732 = vmatpush1.msra.mxu0 0.0
        %733 = vmatprep.subr.mxu0 0.0
        %734 = vmatpush1.msra.mxu0 0.0
        %735 = vmatprep.subr.mxu0 0.0
        %736 = vmatpush1.msra.mxu0 0.0
        %737 = vmatprep.subr.mxu0 0.0
        %738 = vmatpush1.msra.mxu0 0.0
        %739 = vmatprep.subr.mxu0 0.0
        %740 = vmatpush1.msra.mxu0 0.0
        %741 = vmatprep.subr.mxu0 0.0
        %742 = vmatpush1.msra.mxu0 0.0
        %743 = vmatprep.subr.mxu0 0.0
        %744 = vmatpush1.msra.mxu0 0.0
        %745 = vmatprep.subr.mxu0 0.0
        %746 = vmatpush1.msra.mxu0 0.0
        %747 = vmatprep.mubr.f32.mxu0 0.0
        %748 = vmatmul.mubr.f32.gmra.mrb[0].mxu0 %v681
        %v749 = vpop.f32.mrb[0].mxu0
        %v750 = vadd.f32 0.0, %v749
        %v751 = vpop.f32.mrb[0].mxu0
        %752 = vdwg.mxu0
        %v753 = vadd.f32 %v673, %v750
        %v754 = vld [vmem:[#allocation2 + $0x9] sm:$0xf]
        %v755 = vsel %vm513, 0.0, %v754
        %s756 = scalar_lea.vmem %s3, 160
        %v757 = vld [vmem:[%s756] sm:$0xff]
        %v758 = vld [vmem:[%s756 + $0x8] sm:$0xff]
        %v759 = vld [vmem:[%s756 + $0x10] sm:$0xff]
        %v760 = vld [vmem:[%s756 + $0x18] sm:$0xff]
        %v762 = vsel %vm331, %v755, 0
        %764 = vmatprep.subr.mxu0 0.0
        %765 = vmatpush1.msra.mxu0 %v757
        %766 = vmatprep.subr.mxu0 0.0
        %767 = vmatpush1.msra.mxu0 %v758
        %768 = vmatprep.subr.mxu0 0.0
        %769 = vmatpush1.msra.mxu0 %v759
        %770 = vmatprep.subr.mxu0 0.0
        %771 = vmatpush1.msra.mxu0 %v760
        %772 = vmatprep.subr.mxu0 0.0
        %773 = vmatpush1.msra.mxu0 0.0
        %774 = vmatprep.subr.mxu0 0.0
        %775 = vmatpush1.msra.mxu0 0.0
        %776 = vmatprep.subr.mxu0 0.0
        %777 = vmatpush1.msra.mxu0 0.0
        %778 = vmatprep.subr.mxu0 0.0
        %779 = vmatpush1.msra.mxu0 0.0
        %780 = vmatprep.subr.mxu0 0.0
        %781 = vmatpush1.msra.mxu0 0.0
        %782 = vmatprep.subr.mxu0 0.0
        %783 = vmatpush1.msra.mxu0 0.0
        %784 = vmatprep.subr.mxu0 0.0
        %785 = vmatpush1.msra.mxu0 0.0
        %786 = vmatprep.subr.mxu0 0.0
        %787 = vmatpush1.msra.mxu0 0.0
        %788 = vmatprep.subr.mxu0 0.0
        %789 = vmatpush1.msra.mxu0 0.0
        %790 = vmatprep.subr.mxu0 0.0
        %791 = vmatpush1.msra.mxu0 0.0
        %792 = vmatprep.subr.mxu0 0.0
        %793 = vmatpush1.msra.mxu0 0.0
        %794 = vmatprep.subr.mxu0 0.0
        %795 = vmatpush1.msra.mxu0 0.0
        %796 = vmatprep.subr.mxu0 0.0
        %797 = vmatpush1.msra.mxu0 0.0
        %798 = vmatprep.subr.mxu0 0.0
        %799 = vmatpush1.msra.mxu0 0.0
        %800 = vmatprep.subr.mxu0 0.0
        %801 = vmatpush1.msra.mxu0 0.0
        %802 = vmatprep.subr.mxu0 0.0
        %803 = vmatpush1.msra.mxu0 0.0
        %804 = vmatprep.subr.mxu0 0.0
        %805 = vmatpush1.msra.mxu0 0.0
        %806 = vmatprep.subr.mxu0 0.0
        %807 = vmatpush1.msra.mxu0 0.0
        %808 = vmatprep.subr.mxu0 0.0
        %809 = vmatpush1.msra.mxu0 0.0
        %810 = vmatprep.subr.mxu0 0.0
        %811 = vmatpush1.msra.mxu0 0.0
        %812 = vmatprep.subr.mxu0 0.0
        %813 = vmatpush1.msra.mxu0 0.0
        %814 = vmatprep.subr.mxu0 0.0
        %815 = vmatpush1.msra.mxu0 0.0
        %816 = vmatprep.subr.mxu0 0.0
        %817 = vmatpush1.msra.mxu0 0.0
        %818 = vmatprep.subr.mxu0 0.0
        %819 = vmatpush1.msra.mxu0 0.0
        %820 = vmatprep.subr.mxu0 0.0
        %821 = vmatpush1.msra.mxu0 0.0
        %822 = vmatprep.subr.mxu0 0.0
        %823 = vmatpush1.msra.mxu0 0.0
        %824 = vmatprep.subr.mxu0 0.0
        %825 = vmatpush1.msra.mxu0 0.0
        %826 = vmatprep.subr.mxu0 0.0
        %827 = vmatpush1.msra.mxu0 0.0
        %828 = vmatprep.mubr.f32.mxu0 0.0
        %829 = vmatmul.mubr.f32.gmra.mrb[0].mxu0 %v762
        %v830 = vpop.f32.mrb[0].mxu0
        %v831 = vadd.f32 0.0, %v830
        %v832 = vpop.f32.mrb[0].mxu0
        %833 = vdwg.mxu0
        %v834 = vadd.f32 %v753, %v831
        %v835 = vsel %vm353, 0.0, %v754
        %s836 = scalar_lea.vmem %s3, 192
        %v837 = vld [vmem:[%s836] sm:$0xff]
        %v838 = vld [vmem:[%s836 + $0x8] sm:$0xff]
        %v839 = vld [vmem:[%s836 + $0x10] sm:$0xff]
        %v840 = vld [vmem:[%s836 + $0x18] sm:$0xff]
        %v842 = vsel %vm331, %v835, 0
        %844 = vmatprep.subr.mxu0 0.0
        %845 = vmatpush1.msra.mxu0 %v837
        %846 = vmatprep.subr.mxu0 0.0
        %847 = vmatpush1.msra.mxu0 %v838
        %848 = vmatprep.subr.mxu0 0.0
        %849 = vmatpush1.msra.mxu0 %v839
        %850 = vmatprep.subr.mxu0 0.0
        %851 = vmatpush1.msra.mxu0 %v840
        %852 = vmatprep.subr.mxu0 0.0
        %853 = vmatpush1.msra.mxu0 0.0
        %854 = vmatprep.subr.mxu0 0.0
        %855 = vmatpush1.msra.mxu0 0.0
        %856 = vmatprep.subr.mxu0 0.0
        %857 = vmatpush1.msra.mxu0 0.0
        %858 = vmatprep.subr.mxu0 0.0
        %859 = vmatpush1.msra.mxu0 0.0
        %860 = vmatprep.subr.mxu0 0.0
        %861 = vmatpush1.msra.mxu0 0.0
        %862 = vmatprep.subr.mxu0 0.0
        %863 = vmatpush1.msra.mxu0 0.0
        %864 = vmatprep.subr.mxu0 0.0
        %865 = vmatpush1.msra.mxu0 0.0
        %866 = vmatprep.subr.mxu0 0.0
        %867 = vmatpush1.msra.mxu0 0.0
        %868 = vmatprep.subr.mxu0 0.0
        %869 = vmatpush1.msra.mxu0 0.0
        %870 = vmatprep.subr.mxu0 0.0
        %871 = vmatpush1.msra.mxu0 0.0
        %872 = vmatprep.subr.mxu0 0.0
        %873 = vmatpush1.msra.mxu0 0.0
        %874 = vmatprep.subr.mxu0 0.0
        %875 = vmatpush1.msra.mxu0 0.0
        %876 = vmatprep.subr.mxu0 0.0
        %877 = vmatpush1.msra.mxu0 0.0
        %878 = vmatprep.subr.mxu0 0.0
        %879 = vmatpush1.msra.mxu0 0.0
        %880 = vmatprep.subr.mxu0 0.0
        %881 = vmatpush1.msra.mxu0 0.0
        %882 = vmatprep.subr.mxu0 0.0
        %883 = vmatpush1.msra.mxu0 0.0
        %884 = vmatprep.subr.mxu0 0.0
        %885 = vmatpush1.msra.mxu0 0.0
        %886 = vmatprep.subr.mxu0 0.0
        %887 = vmatpush1.msra.mxu0 0.0
        %888 = vmatprep.subr.mxu0 0.0
        %889 = vmatpush1.msra.mxu0 0.0
        %890 = vmatprep.subr.mxu0 0.0
        %891 = vmatpush1.msra.mxu0 0.0
        %892 = vmatprep.subr.mxu0 0.0
        %893 = vmatpush1.msra.mxu0 0.0
        %894 = vmatprep.subr.mxu0 0.0
        %895 = vmatpush1.msra.mxu0 0.0
        %896 = vmatprep.subr.mxu0 0.0
        %897 = vmatpush1.msra.mxu0 0.0
        %898 = vmatprep.subr.mxu0 0.0
        %899 = vmatpush1.msra.mxu0 0.0
        %900 = vmatprep.subr.mxu0 0.0
        %901 = vmatpush1.msra.mxu0 0.0
        %902 = vmatprep.subr.mxu0 0.0
        %903 = vmatpush1.msra.mxu0 0.0
        %904 = vmatprep.subr.mxu0 0.0
        %905 = vmatpush1.msra.mxu0 0.0
        %906 = vmatprep.subr.mxu0 0.0
        %907 = vmatpush1.msra.mxu0 0.0
        %908 = vmatprep.mubr.f32.mxu0 0.0
        %909 = vmatmul.mubr.f32.gmra.mrb[0].mxu0 %v842
        %v910 = vpop.f32.mrb[0].mxu0
        %v911 = vadd.f32 0.0, %v910
        %v912 = vpop.f32.mrb[0].mxu0
        %913 = vdwg.mxu0
        %v914 = vadd.f32 %v834, %v911
        %v915 = vld [vmem:[#allocation2 + $0xa] sm:$0xf]
        %s916 = scalar_lea.vmem %s3, 224
        %v917 = vld [vmem:[%s916] sm:$0xff]
        %v918 = vld [vmem:[%s916 + $0x8] sm:$0xff]
        %v919 = vld [vmem:[%s916 + $0x10] sm:$0xff]
        %v920 = vld [vmem:[%s916 + $0x18] sm:$0xff]
        %v922 = vsel %vm331, %v915, 0
        %924 = vmatprep.subr.mxu0 0.0
        %925 = vmatpush1.msra.mxu0 %v917
        %926 = vmatprep.subr.mxu0 0.0
        %927 = vmatpush1.msra.mxu0 %v918
        %928 = vmatprep.subr.mxu0 0.0
        %929 = vmatpush1.msra.mxu0 %v919
        %930 = vmatprep.subr.mxu0 0.0
        %931 = vmatpush1.msra.mxu0 %v920
        %932 = vmatprep.subr.mxu0 0.0
        %933 = vmatpush1.msra.mxu0 0.0
        %934 = vmatprep.subr.mxu0 0.0
        %935 = vmatpush1.msra.mxu0 0.0
        %936 = vmatprep.subr.mxu0 0.0
        %937 = vmatpush1.msra.mxu0 0.0
        %938 = vmatprep.subr.mxu0 0.0
        %939 = vmatpush1.msra.mxu0 0.0
        %940 = vmatprep.subr.mxu0 0.0
        %941 = vmatpush1.msra.mxu0 0.0
        %942 = vmatprep.subr.mxu0 0.0
        %943 = vmatpush1.msra.mxu0 0.0
        %944 = vmatprep.subr.mxu0 0.0
        %945 = vmatpush1.msra.mxu0 0.0
        %946 = vmatprep.subr.mxu0 0.0
        %947 = vmatpush1.msra.mxu0 0.0
        %948 = vmatprep.subr.mxu0 0.0
        %949 = vmatpush1.msra.mxu0 0.0
        %950 = vmatprep.subr.mxu0 0.0
        %951 = vmatpush1.msra.mxu0 0.0
        %952 = vmatprep.subr.mxu0 0.0
        %953 = vmatpush1.msra.mxu0 0.0
        %954 = vmatprep.subr.mxu0 0.0
        %955 = vmatpush1.msra.mxu0 0.0
        %956 = vmatprep.subr.mxu0 0.0
        %957 = vmatpush1.msra.mxu0 0.0
        %958 = vmatprep.subr.mxu0 0.0
        %959 = vmatpush1.msra.mxu0 0.0
        %960 = vmatprep.subr.mxu0 0.0
        %961 = vmatpush1.msra.mxu0 0.0
        %962 = vmatprep.subr.mxu0 0.0
        %963 = vmatpush1.msra.mxu0 0.0
        %964 = vmatprep.subr.mxu0 0.0
        %965 = vmatpush1.msra.mxu0 0.0
        %966 = vmatprep.subr.mxu0 0.0
        %967 = vmatpush1.msra.mxu0 0.0
        %968 = vmatprep.subr.mxu0 0.0
        %969 = vmatpush1.msra.mxu0 0.0
        %970 = vmatprep.subr.mxu0 0.0
        %971 = vmatpush1.msra.mxu0 0.0
        %972 = vmatprep.subr.mxu0 0.0
        %973 = vmatpush1.msra.mxu0 0.0
        %974 = vmatprep.subr.mxu0 0.0
        %975 = vmatpush1.msra.mxu0 0.0
        %976 = vmatprep.subr.mxu0 0.0
        %977 = vmatpush1.msra.mxu0 0.0
        %978 = vmatprep.subr.mxu0 0.0
        %979 = vmatpush1.msra.mxu0 0.0
        %980 = vmatprep.subr.mxu0 0.0
        %981 = vmatpush1.msra.mxu0 0.0
        %982 = vmatprep.subr.mxu0 0.0
        %983 = vmatpush1.msra.mxu0 0.0
        %984 = vmatprep.subr.mxu0 0.0
        %985 = vmatpush1.msra.mxu0 0.0
        %986 = vmatprep.subr.mxu0 0.0
        %987 = vmatpush1.msra.mxu0 0.0
        %988 = vmatprep.mubr.f32.mxu0 0.0
        %989 = vmatmul.mubr.f32.gmra.mrb[0].mxu0 %v922
        %v990 = vpop.f32.mrb[0].mxu0
        %v991 = vadd.f32 0.0, %v990
        %v992 = vpop.f32.mrb[0].mxu0
        %993 = vdwg.mxu0
        %v994 = vadd.f32 %v914, %v991
        %v995 = vld [vmem:[#allocation2 + $0xb] sm:$0xf]
        %v996 = vsel %vm513, 0.0, %v995
        %s997 = scalar_lea.vmem %s3, 256
        %v998 = vld [vmem:[%s997] sm:$0xff]
        %v999 = vld [vmem:[%s997 + $0x8] sm:$0xff]
        %v1000 = vld [vmem:[%s997 + $0x10] sm:$0xff]
        %v1001 = vld [vmem:[%s997 + $0x18] sm:$0xff]
        %v1003 = vsel %vm331, %v996, 0
        %1005 = vmatprep.subr.mxu0 0.0
        %1006 = vmatpush1.msra.mxu0 %v998
        %1007 = vmatprep.subr.mxu0 0.0
        %1008 = vmatpush1.msra.mxu0 %v999
        %1009 = vmatprep.subr.mxu0 0.0
        %1010 = vmatpush1.msra.mxu0 %v1000
        %1011 = vmatprep.subr.mxu0 0.0
        %1012 = vmatpush1.msra.mxu0 %v1001
        %1013 = vmatprep.subr.mxu0 0.0
        %1014 = vmatpush1.msra.mxu0 0.0
        %1015 = vmatprep.subr.mxu0 0.0
        %1016 = vmatpush1.msra.mxu0 0.0
        %1017 = vmatprep.subr.mxu0 0.0
        %1018 = vmatpush1.msra.mxu0 0.0
        %1019 = vmatprep.subr.mxu0 0.0
        %1020 = vmatpush1.msra.mxu0 0.0
        %1021 = vmatprep.subr.mxu0 0.0
        %1022 = vmatpush1.msra.mxu0 0.0
        %1023 = vmatprep.subr.mxu0 0.0
        %1024 = vmatpush1.msra.mxu0 0.0
        %1025 = vmatprep.subr.mxu0 0.0
        %1026 = vmatpush1.msra.mxu0 0.0
        %1027 = vmatprep.subr.mxu0 0.0
        %1028 = vmatpush1.msra.mxu0 0.0
        %1029 = vmatprep.subr.mxu0 0.0
        %1030 = vmatpush1.msra.mxu0 0.0
        %1031 = vmatprep.subr.mxu0 0.0
        %1032 = vmatpush1.msra.mxu0 0.0
        %1033 = vmatprep.subr.mxu0 0.0
        %1034 = vmatpush1.msra.mxu0 0.0
        %1035 = vmatprep.subr.mxu0 0.0
        %1036 = vmatpush1.msra.mxu0 0.0
        %1037 = vmatprep.subr.mxu0 0.0
        %1038 = vmatpush1.msra.mxu0 0.0
        %1039 = vmatprep.subr.mxu0 0.0
        %1040 = vmatpush1.msra.mxu0 0.0
        %1041 = vmatprep.subr.mxu0 0.0
        %1042 = vmatpush1.msra.mxu0 0.0
        %1043 = vmatprep.subr.mxu0 0.0
        %1044 = vmatpush1.msra.mxu0 0.0
        %1045 = vmatprep.subr.mxu0 0.0
        %1046 = vmatpush1.msra.mxu0 0.0
        %1047 = vmatprep.subr.mxu0 0.0
        %1048 = vmatpush1.msra.mxu0 0.0
        %1049 = vmatprep.subr.mxu0 0.0
        %1050 = vmatpush1.msra.mxu0 0.0
        %1051 = vmatprep.subr.mxu0 0.0
        %1052 = vmatpush1.msra.mxu0 0.0
        %1053 = vmatprep.subr.mxu0 0.0
        %1054 = vmatpush1.msra.mxu0 0.0
        %1055 = vmatprep.subr.mxu0 0.0
        %1056 = vmatpush1.msra.mxu0 0.0
        %1057 = vmatprep.subr.mxu0 0.0
        %1058 = vmatpush1.msra.mxu0 0.0
        %1059 = vmatprep.subr.mxu0 0.0
        %1060 = vmatpush1.msra.mxu0 0.0
        %1061 = vmatprep.subr.mxu0 0.0
        %1062 = vmatpush1.msra.mxu0 0.0
        %1063 = vmatprep.subr.mxu0 0.0
        %1064 = vmatpush1.msra.mxu0 0.0
        %1065 = vmatprep.subr.mxu0 0.0
        %1066 = vmatpush1.msra.mxu0 0.0
        %1067 = vmatprep.subr.mxu0 0.0
        %1068 = vmatpush1.msra.mxu0 0.0
        %1069 = vmatprep.mubr.f32.mxu0 0.0
        %1070 = vmatmul.mubr.f32.gmra.mrb[0].mxu0 %v1003
        %v1071 = vpop.f32.mrb[0].mxu0
        %v1072 = vadd.f32 0.0, %v1071
        %v1073 = vpop.f32.mrb[0].mxu0
        %1074 = vdwg.mxu0
        %v1075 = vadd.f32 %v994, %v1072
        %v1076 = vld [vmem:[#allocation3 + $0x5] sm:$0xf]
        %v1077 = vsel %vm353, 0.0, %v1076
        %v1078 = vld [vmem:[%s4] sm:$0xff]
        %v1079 = vld [vmem:[%s4 + $0x8] sm:$0xff]
        %v1080 = vld [vmem:[%s4 + $0x10] sm:$0xff]
        %v1081 = vld [vmem:[%s4 + $0x18] sm:$0xff]
        %v1082 = vld [vmem:[%s4 + $0x20] sm:$0xff]
        %v1083 = vld [vmem:[%s4 + $0x28] sm:$0xff]
        %v1084 = vld [vmem:[%s4 + $0x30] sm:$0xff]
        %v1085 = vld [vmem:[%s4 + $0x38] sm:$0xff]
        %v1086 = vld [vmem:[#allocation3 + $0x6] sm:$0xf]
        %s1087 = scalar_lea.vmem %s4, 64
        %v1088 = vld [vmem:[%s1087] sm:$0xff]
        %v1089 = vld [vmem:[%s1087 + $0x8] sm:$0xff]
        %v1090 = vld [vmem:[%s1087 + $0x10] sm:$0xff]
        %v1091 = vld [vmem:[%s1087 + $0x18] sm:$0xff]
        %v1092 = vld [vmem:[%s1087 + $0x20] sm:$0xff]
        %v1093 = vld [vmem:[%s1087 + $0x28] sm:$0xff]
        %v1094 = vld [vmem:[%s1087 + $0x30] sm:$0xff]
        %v1095 = vld [vmem:[%s1087 + $0x38] sm:$0xff]
        %v1097 = vsel %vm335, %v1086, 0
        %1099 = vmatprep.subr.mxu0 0.0
        %1100 = vmatpush1.msra.mxu0 %v1088
        %1101 = vmatprep.subr.mxu0 0.0
        %1102 = vmatpush1.msra.mxu0 %v1089
        %1103 = vmatprep.subr.mxu0 0.0
        %1104 = vmatpush1.msra.mxu0 %v1090
        %1105 = vmatprep.subr.mxu0 0.0
        %1106 = vmatpush1.msra.mxu0 %v1091
        %1107 = vmatprep.subr.mxu0 0.0
        %1108 = vmatpush1.msra.mxu0 %v1092
        %1109 = vmatprep.subr.mxu0 0.0
        %1110 = vmatpush1.msra.mxu0 %v1093
        %1111 = vmatprep.subr.mxu0 0.0
        %1112 = vmatpush1.msra.mxu0 %v1094
        %1113 = vmatprep.subr.mxu0 0.0
        %1114 = vmatpush1.msra.mxu0 %v1095
        %1115 = vmatprep.subr.mxu0 0.0
        %1116 = vmatpush1.msra.mxu0 0.0
        %1117 = vmatprep.subr.mxu0 0.0
        %1118 = vmatpush1.msra.mxu0 0.0
        %1119 = vmatprep.subr.mxu0 0.0
        %1120 = vmatpush1.msra.mxu0 0.0
        %1121 = vmatprep.subr.mxu0 0.0
        %1122 = vmatpush1.msra.mxu0 0.0
        %1123 = vmatprep.subr.mxu0 0.0
        %1124 = vmatpush1.msra.mxu0 0.0
        %1125 = vmatprep.subr.mxu0 0.0
        %1126 = vmatpush1.msra.mxu0 0.0
        %1127 = vmatprep.subr.mxu0 0.0
        %1128 = vmatpush1.msra.mxu0 0.0
        %1129 = vmatprep.subr.mxu0 0.0
        %1130 = vmatpush1.msra.mxu0 0.0
        %1131 = vmatprep.subr.mxu0 0.0
        %1132 = vmatpush1.msra.mxu0 0.0
        %1133 = vmatprep.subr.mxu0 0.0
        %1134 = vmatpush1.msra.mxu0 0.0
        %1135 = vmatprep.subr.mxu0 0.0
        %1136 = vmatpush1.msra.mxu0 0.0
        %1137 = vmatprep.subr.mxu0 0.0
        %1138 = vmatpush1.msra.mxu0 0.0
        %1139 = vmatprep.subr.mxu0 0.0
        %1140 = vmatpush1.msra.mxu0 0.0
        %1141 = vmatprep.subr.mxu0 0.0
        %1142 = vmatpush1.msra.mxu0 0.0
        %1143 = vmatprep.subr.mxu0 0.0
        %1144 = vmatpush1.msra.mxu0 0.0
        %1145 = vmatprep.subr.mxu0 0.0
        %1146 = vmatpush1.msra.mxu0 0.0
        %1147 = vmatprep.subr.mxu0 0.0
        %1148 = vmatpush1.msra.mxu0 0.0
        %1149 = vmatprep.subr.mxu0 0.0
        %1150 = vmatpush1.msra.mxu0 0.0
        %1151 = vmatprep.subr.mxu0 0.0
        %1152 = vmatpush1.msra.mxu0 0.0
        %1153 = vmatprep.subr.mxu0 0.0
        %1154 = vmatpush1.msra.mxu0 0.0
        %1155 = vmatprep.subr.mxu0 0.0
        %1156 = vmatpush1.msra.mxu0 0.0
        %1157 = vmatprep.subr.mxu0 0.0
        %1158 = vmatpush1.msra.mxu0 0.0
        %1159 = vmatprep.subr.mxu0 0.0
        %1160 = vmatpush1.msra.mxu0 0.0
        %1161 = vmatprep.subr.mxu0 0.0
        %1162 = vmatpush1.msra.mxu0 0.0
        %1163 = vmatprep.mubr.f32.mxu0 0.0
        %1164 = vmatmul.mubr.f32.gmra.mrb[0].mxu0 %v1097
        %v1165 = vpop.f32.mrb[0].mxu0
        %v1166 = vadd.f32 0.0, %v1165
        %v1167 = vpop.f32.mrb[0].mxu0
        %1168 = vdwg.mxu0
        %v1170 = vsel %vm335, %v1077, 0
        %1172 = vmatprep.subr.mxu0 0.0
        %1173 = vmatpush1.msra.mxu0 %v1078
        %1174 = vmatprep.subr.mxu0 0.0
        %1175 = vmatpush1.msra.mxu0 %v1079
        %1176 = vmatprep.subr.mxu0 0.0
        %1177 = vmatpush1.msra.mxu0 %v1080
        %1178 = vmatprep.subr.mxu0 0.0
        %1179 = vmatpush1.msra.mxu0 %v1081
        %1180 = vmatprep.subr.mxu0 0.0
        %1181 = vmatpush1.msra.mxu0 %v1082
        %1182 = vmatprep.subr.mxu0 0.0
        %1183 = vmatpush1.msra.mxu0 %v1083
        %1184 = vmatprep.subr.mxu0 0.0
        %1185 = vmatpush1.msra.mxu0 %v1084
        %1186 = vmatprep.subr.mxu0 0.0
        %1187 = vmatpush1.msra.mxu0 %v1085
        %1188 = vmatprep.subr.mxu0 0.0
        %1189 = vmatpush1.msra.mxu0 0.0
        %1190 = vmatprep.subr.mxu0 0.0
        %1191 = vmatpush1.msra.mxu0 0.0
        %1192 = vmatprep.subr.mxu0 0.0
        %1193 = vmatpush1.msra.mxu0 0.0
        %1194 = vmatprep.subr.mxu0 0.0
        %1195 = vmatpush1.msra.mxu0 0.0
        %1196 = vmatprep.subr.mxu0 0.0
        %1197 = vmatpush1.msra.mxu0 0.0
        %1198 = vmatprep.subr.mxu0 0.0
        %1199 = vmatpush1.msra.mxu0 0.0
        %1200 = vmatprep.subr.mxu0 0.0
        %1201 = vmatpush1.msra.mxu0 0.0
        %1202 = vmatprep.subr.mxu0 0.0
        %1203 = vmatpush1.msra.mxu0 0.0
        %1204 = vmatprep.subr.mxu0 0.0
        %1205 = vmatpush1.msra.mxu0 0.0
        %1206 = vmatprep.subr.mxu0 0.0
        %1207 = vmatpush1.msra.mxu0 0.0
        %1208 = vmatprep.subr.mxu0 0.0
        %1209 = vmatpush1.msra.mxu0 0.0
        %1210 = vmatprep.subr.mxu0 0.0
        %1211 = vmatpush1.msra.mxu0 0.0
        %1212 = vmatprep.subr.mxu0 0.0
        %1213 = vmatpush1.msra.mxu0 0.0
        %1214 = vmatprep.subr.mxu0 0.0
        %1215 = vmatpush1.msra.mxu0 0.0
        %1216 = vmatprep.subr.mxu0 0.0
        %1217 = vmatpush1.msra.mxu0 0.0
        %1218 = vmatprep.subr.mxu0 0.0
        %1219 = vmatpush1.msra.mxu0 0.0
        %1220 = vmatprep.subr.mxu0 0.0
        %1221 = vmatpush1.msra.mxu0 0.0
        %1222 = vmatprep.subr.mxu0 0.0
        %1223 = vmatpush1.msra.mxu0 0.0
        %1224 = vmatprep.subr.mxu0 0.0
        %1225 = vmatpush1.msra.mxu0 0.0
        %1226 = vmatprep.subr.mxu0 0.0
        %1227 = vmatpush1.msra.mxu0 0.0
        %1228 = vmatprep.subr.mxu0 0.0
        %1229 = vmatpush1.msra.mxu0 0.0
        %1230 = vmatprep.subr.mxu0 0.0
        %1231 = vmatpush1.msra.mxu0 0.0
        %1232 = vmatprep.subr.mxu0 0.0
        %1233 = vmatpush1.msra.mxu0 0.0
        %1234 = vmatprep.subr.mxu0 0.0
        %1235 = vmatpush1.msra.mxu0 0.0
        %1236 = vmatprep.mubr.f32.mxu0 0.0
        %1237 = vmatmul.mubr.f32.gmra.mrb[0].mxu0 %v1170
        %v1238 = vpop.f32.mrb[0].mxu0
        %v1239 = vadd.f32 %v1166, %v1238
        %v1240 = vpop.f32.mrb[0].mxu0
        %1241 = vdwg.mxu0
        %v1242 = vld [vmem:[#allocation3 + $0x7] sm:$0xf]
        %v1243 = vsel %vm513, 0.0, %v1242
        %s1244 = scalar_lea.vmem %s4, 128
        %v1245 = vld [vmem:[%s1244] sm:$0xff]
        %v1246 = vld [vmem:[%s1244 + $0x8] sm:$0xff]
        %v1247 = vld [vmem:[%s1244 + $0x10] sm:$0xff]
        %v1248 = vld [vmem:[%s1244 + $0x18] sm:$0xff]
        %v1249 = vld [vmem:[%s1244 + $0x20] sm:$0xff]
        %v1250 = vld [vmem:[%s1244 + $0x28] sm:$0xff]
        %v1251 = vld [vmem:[%s1244 + $0x30] sm:$0xff]
        %v1252 = vld [vmem:[%s1244 + $0x38] sm:$0xff]
        %v1254 = vsel %vm335, %v1243, 0
        %1256 = vmatprep.subr.mxu0 0.0
        %1257 = vmatpush1.msra.mxu0 %v1245
        %1258 = vmatprep.subr.mxu0 0.0
        %1259 = vmatpush1.msra.mxu0 %v1246
        %1260 = vmatprep.subr.mxu0 0.0
        %1261 = vmatpush1.msra.mxu0 %v1247
        %1262 = vmatprep.subr.mxu0 0.0
        %1263 = vmatpush1.msra.mxu0 %v1248
        %1264 = vmatprep.subr.mxu0 0.0
        %1265 = vmatpush1.msra.mxu0 %v1249
        %1266 = vmatprep.subr.mxu0 0.0
        %1267 = vmatpush1.msra.mxu0 %v1250
        %1268 = vmatprep.subr.mxu0 0.0
        %1269 = vmatpush1.msra.mxu0 %v1251
        %1270 = vmatprep.subr.mxu0 0.0
        %1271 = vmatpush1.msra.mxu0 %v1252
        %1272 = vmatprep.subr.mxu0 0.0
        %1273 = vmatpush1.msra.mxu0 0.0
        %1274 = vmatprep.subr.mxu0 0.0
        %1275 = vmatpush1.msra.mxu0 0.0
        %1276 = vmatprep.subr.mxu0 0.0
        %1277 = vmatpush1.msra.mxu0 0.0
        %1278 = vmatprep.subr.mxu0 0.0
        %1279 = vmatpush1.msra.mxu0 0.0
        %1280 = vmatprep.subr.mxu0 0.0
        %1281 = vmatpush1.msra.mxu0 0.0
        %1282 = vmatprep.subr.mxu0 0.0
        %1283 = vmatpush1.msra.mxu0 0.0
        %1284 = vmatprep.subr.mxu0 0.0
        %1285 = vmatpush1.msra.mxu0 0.0
        %1286 = vmatprep.subr.mxu0 0.0
        %1287 = vmatpush1.msra.mxu0 0.0
        %1288 = vmatprep.subr.mxu0 0.0
        %1289 = vmatpush1.msra.mxu0 0.0
        %1290 = vmatprep.subr.mxu0 0.0
        %1291 = vmatpush1.msra.mxu0 0.0
        %1292 = vmatprep.subr.mxu0 0.0
        %1293 = vmatpush1.msra.mxu0 0.0
        %1294 = vmatprep.subr.mxu0 0.0
        %1295 = vmatpush1.msra.mxu0 0.0
        %1296 = vmatprep.subr.mxu0 0.0
        %1297 = vmatpush1.msra.mxu0 0.0
        %1298 = vmatprep.subr.mxu0 0.0
        %1299 = vmatpush1.msra.mxu0 0.0
        %1300 = vmatprep.subr.mxu0 0.0
        %1301 = vmatpush1.msra.mxu0 0.0
        %1302 = vmatprep.subr.mxu0 0.0
        %1303 = vmatpush1.msra.mxu0 0.0
        %1304 = vmatprep.subr.mxu0 0.0
        %1305 = vmatpush1.msra.mxu0 0.0
        %1306 = vmatprep.subr.mxu0 0.0
        %1307 = vmatpush1.msra.mxu0 0.0
        %1308 = vmatprep.subr.mxu0 0.0
        %1309 = vmatpush1.msra.mxu0 0.0
        %1310 = vmatprep.subr.mxu0 0.0
        %1311 = vmatpush1.msra.mxu0 0.0
        %1312 = vmatprep.subr.mxu0 0.0
        %1313 = vmatpush1.msra.mxu0 0.0
        %1314 = vmatprep.subr.mxu0 0.0
        %1315 = vmatpush1.msra.mxu0 0.0
        %1316 = vmatprep.subr.mxu0 0.0
        %1317 = vmatpush1.msra.mxu0 0.0
        %1318 = vmatprep.subr.mxu0 0.0
        %1319 = vmatpush1.msra.mxu0 0.0
        %1320 = vmatprep.mubr.f32.mxu0 0.0
        %1321 = vmatmul.mubr.f32.gmra.mrb[0].mxu0 %v1254
        %v1322 = vpop.f32.mrb[0].mxu0
        %v1323 = vadd.f32 0.0, %v1322
        %v1324 = vpop.f32.mrb[0].mxu0
        %1325 = vdwg.mxu0
        %v1326 = vadd.f32 %v1239, %v1323
        %v1327 = vsel %vm353, 0.0, %v1242
        %s1328 = scalar_lea.vmem %s4, 192
        %v1329 = vld [vmem:[%s1328] sm:$0xff]
        %v1330 = vld [vmem:[%s1328 + $0x8] sm:$0xff]
        %v1331 = vld [vmem:[%s1328 + $0x10] sm:$0xff]
        %v1332 = vld [vmem:[%s1328 + $0x18] sm:$0xff]
        %v1333 = vld [vmem:[%s1328 + $0x20] sm:$0xff]
        %v1334 = vld [vmem:[%s1328 + $0x28] sm:$0xff]
        %v1335 = vld [vmem:[%s1328 + $0x30] sm:$0xff]
        %v1336 = vld [vmem:[%s1328 + $0x38] sm:$0xff]
        %v1338 = vsel %vm335, %v1327, 0
        %1340 = vmatprep.subr.mxu0 0.0
        %1341 = vmatpush1.msra.mxu0 %v1329
        %1342 = vmatprep.subr.mxu0 0.0
        %1343 = vmatpush1.msra.mxu0 %v1330
        %1344 = vmatprep.subr.mxu0 0.0
        %1345 = vmatpush1.msra.mxu0 %v1331
        %1346 = vmatprep.subr.mxu0 0.0
        %1347 = vmatpush1.msra.mxu0 %v1332
        %1348 = vmatprep.subr.mxu0 0.0
        %1349 = vmatpush1.msra.mxu0 %v1333
        %1350 = vmatprep.subr.mxu0 0.0
        %1351 = vmatpush1.msra.mxu0 %v1334
        %1352 = vmatprep.subr.mxu0 0.0
        %1353 = vmatpush1.msra.mxu0 %v1335
        %1354 = vmatprep.subr.mxu0 0.0
        %1355 = vmatpush1.msra.mxu0 %v1336
        %1356 = vmatprep.subr.mxu0 0.0
        %1357 = vmatpush1.msra.mxu0 0.0
        %1358 = vmatprep.subr.mxu0 0.0
        %1359 = vmatpush1.msra.mxu0 0.0
        %1360 = vmatprep.subr.mxu0 0.0
        %1361 = vmatpush1.msra.mxu0 0.0
        %1362 = vmatprep.subr.mxu0 0.0
        %1363 = vmatpush1.msra.mxu0 0.0
        %1364 = vmatprep.subr.mxu0 0.0
        %1365 = vmatpush1.msra.mxu0 0.0
        %1366 = vmatprep.subr.mxu0 0.0
        %1367 = vmatpush1.msra.mxu0 0.0
        %1368 = vmatprep.subr.mxu0 0.0
        %1369 = vmatpush1.msra.mxu0 0.0
        %1370 = vmatprep.subr.mxu0 0.0
        %1371 = vmatpush1.msra.mxu0 0.0
        %1372 = vmatprep.subr.mxu0 0.0
        %1373 = vmatpush1.msra.mxu0 0.0
        %1374 = vmatprep.subr.mxu0 0.0
        %1375 = vmatpush1.msra.mxu0 0.0
        %1376 = vmatprep.subr.mxu0 0.0
        %1377 = vmatpush1.msra.mxu0 0.0
        %1378 = vmatprep.subr.mxu0 0.0
        %1379 = vmatpush1.msra.mxu0 0.0
        %1380 = vmatprep.subr.mxu0 0.0
        %1381 = vmatpush1.msra.mxu0 0.0
        %1382 = vmatprep.subr.mxu0 0.0
        %1383 = vmatpush1.msra.mxu0 0.0
        %1384 = vmatprep.subr.mxu0 0.0
        %1385 = vmatpush1.msra.mxu0 0.0
        %1386 = vmatprep.subr.mxu0 0.0
        %1387 = vmatpush1.msra.mxu0 0.0
        %1388 = vmatprep.subr.mxu0 0.0
        %1389 = vmatpush1.msra.mxu0 0.0
        %1390 = vmatprep.subr.mxu0 0.0
        %1391 = vmatpush1.msra.mxu0 0.0
        %1392 = vmatprep.subr.mxu0 0.0
        %1393 = vmatpush1.msra.mxu0 0.0
        %1394 = vmatprep.subr.mxu0 0.0
        %1395 = vmatpush1.msra.mxu0 0.0
        %1396 = vmatprep.subr.mxu0 0.0
        %1397 = vmatpush1.msra.mxu0 0.0
        %1398 = vmatprep.subr.mxu0 0.0
        %1399 = vmatpush1.msra.mxu0 0.0
        %1400 = vmatprep.subr.mxu0 0.0
        %1401 = vmatpush1.msra.mxu0 0.0
        %1402 = vmatprep.subr.mxu0 0.0
        %1403 = vmatpush1.msra.mxu0 0.0
        %1404 = vmatprep.mubr.f32.mxu0 0.0
        %1405 = vmatmul.mubr.f32.gmra.mrb[0].mxu0 %v1338
        %v1406 = vpop.f32.mrb[0].mxu0
        %v1407 = vadd.f32 0.0, %v1406
        %v1408 = vpop.f32.mrb[0].mxu0
        %1409 = vdwg.mxu0
        %v1410 = vadd.f32 %v1326, %v1407
        %v1411 = vld [vmem:[#allocation3 + $0x8] sm:$0xf]
        %s1412 = scalar_lea.vmem %s4, 256
        %v1413 = vld [vmem:[%s1412] sm:$0xff]
        %v1414 = vld [vmem:[%s1412 + $0x8] sm:$0xff]
        %v1415 = vld [vmem:[%s1412 + $0x10] sm:$0xff]
        %v1416 = vld [vmem:[%s1412 + $0x18] sm:$0xff]
        %v1417 = vld [vmem:[%s1412 + $0x20] sm:$0xff]
        %v1418 = vld [vmem:[%s1412 + $0x28] sm:$0xff]
        %v1419 = vld [vmem:[%s1412 + $0x30] sm:$0xff]
        %v1420 = vld [vmem:[%s1412 + $0x38] sm:$0xff]
        %v1422 = vsel %vm335, %v1411, 0
        %1424 = vmatprep.subr.mxu0 0.0
        %1425 = vmatpush1.msra.mxu0 %v1413
        %1426 = vmatprep.subr.mxu0 0.0
        %1427 = vmatpush1.msra.mxu0 %v1414
        %1428 = vmatprep.subr.mxu0 0.0
        %1429 = vmatpush1.msra.mxu0 %v1415
        %1430 = vmatprep.subr.mxu0 0.0
        %1431 = vmatpush1.msra.mxu0 %v1416
        %1432 = vmatprep.subr.mxu0 0.0
        %1433 = vmatpush1.msra.mxu0 %v1417
        %1434 = vmatprep.subr.mxu0 0.0
        %1435 = vmatpush1.msra.mxu0 %v1418
        %1436 = vmatprep.subr.mxu0 0.0
        %1437 = vmatpush1.msra.mxu0 %v1419
        %1438 = vmatprep.subr.mxu0 0.0
        %1439 = vmatpush1.msra.mxu0 %v1420
        %1440 = vmatprep.subr.mxu0 0.0
        %1441 = vmatpush1.msra.mxu0 0.0
        %1442 = vmatprep.subr.mxu0 0.0
        %1443 = vmatpush1.msra.mxu0 0.0
        %1444 = vmatprep.subr.mxu0 0.0
        %1445 = vmatpush1.msra.mxu0 0.0
        %1446 = vmatprep.subr.mxu0 0.0
        %1447 = vmatpush1.msra.mxu0 0.0
        %1448 = vmatprep.subr.mxu0 0.0
        %1449 = vmatpush1.msra.mxu0 0.0
        %1450 = vmatprep.subr.mxu0 0.0
        %1451 = vmatpush1.msra.mxu0 0.0
        %1452 = vmatprep.subr.mxu0 0.0
        %1453 = vmatpush1.msra.mxu0 0.0
        %1454 = vmatprep.subr.mxu0 0.0
        %1455 = vmatpush1.msra.mxu0 0.0
        %1456 = vmatprep.subr.mxu0 0.0
        %1457 = vmatpush1.msra.mxu0 0.0
        %1458 = vmatprep.subr.mxu0 0.0
        %1459 = vmatpush1.msra.mxu0 0.0
        %1460 = vmatprep.subr.mxu0 0.0
        %1461 = vmatpush1.msra.mxu0 0.0
        %1462 = vmatprep.subr.mxu0 0.0
        %1463 = vmatpush1.msra.mxu0 0.0
        %1464 = vmatprep.subr.mxu0 0.0
        %1465 = vmatpush1.msra.mxu0 0.0
        %1466 = vmatprep.subr.mxu0 0.0
        %1467 = vmatpush1.msra.mxu0 0.0
        %1468 = vmatprep.subr.mxu0 0.0
        %1469 = vmatpush1.msra.mxu0 0.0
        %1470 = vmatprep.subr.mxu0 0.0
        %1471 = vmatpush1.msra.mxu0 0.0
        %1472 = vmatprep.subr.mxu0 0.0
        %1473 = vmatpush1.msra.mxu0 0.0
        %1474 = vmatprep.subr.mxu0 0.0
        %1475 = vmatpush1.msra.mxu0 0.0
        %1476 = vmatprep.subr.mxu0 0.0
        %1477 = vmatpush1.msra.mxu0 0.0
        %1478 = vmatprep.subr.mxu0 0.0
        %1479 = vmatpush1.msra.mxu0 0.0
        %1480 = vmatprep.subr.mxu0 0.0
        %1481 = vmatpush1.msra.mxu0 0.0
        %1482 = vmatprep.subr.mxu0 0.0
        %1483 = vmatpush1.msra.mxu0 0.0
        %1484 = vmatprep.subr.mxu0 0.0
        %1485 = vmatpush1.msra.mxu0 0.0
        %1486 = vmatprep.subr.mxu0 0.0
        %1487 = vmatpush1.msra.mxu0 0.0
        %1488 = vmatprep.mubr.f32.mxu0 0.0
        %1489 = vmatmul.mubr.f32.gmra.mrb[0].mxu0 %v1422
        %v1490 = vpop.f32.mrb[0].mxu0
        %v1491 = vadd.f32 0.0, %v1490
        %v1492 = vpop.f32.mrb[0].mxu0
        %1493 = vdwg.mxu0
        %v1494 = vadd.f32 %v1410, %v1491
        %v1495 = vld [vmem:[#allocation3 + $0x9] sm:$0xf]
        %v1496 = vsel %vm513, 0.0, %v1495
        %s1497 = scalar_lea.vmem %s4, 320
        %v1498 = vld [vmem:[%s1497] sm:$0xff]
        %v1499 = vld [vmem:[%s1497 + $0x8] sm:$0xff]
        %v1500 = vld [vmem:[%s1497 + $0x10] sm:$0xff]
        %v1501 = vld [vmem:[%s1497 + $0x18] sm:$0xff]
        %v1502 = vld [vmem:[%s1497 + $0x20] sm:$0xff]
        %v1503 = vld [vmem:[%s1497 + $0x28] sm:$0xff]
        %v1504 = vld [vmem:[%s1497 + $0x30] sm:$0xff]
        %v1505 = vld [vmem:[%s1497 + $0x38] sm:$0xff]
        %v1507 = vsel %vm335, %v1496, 0
        %1509 = vmatprep.subr.mxu0 0.0
        %1510 = vmatpush1.msra.mxu0 %v1498
        %1511 = vmatprep.subr.mxu0 0.0
        %1512 = vmatpush1.msra.mxu0 %v1499
        %1513 = vmatprep.subr.mxu0 0.0
        %1514 = vmatpush1.msra.mxu0 %v1500
        %1515 = vmatprep.subr.mxu0 0.0
        %1516 = vmatpush1.msra.mxu0 %v1501
        %1517 = vmatprep.subr.mxu0 0.0
        %1518 = vmatpush1.msra.mxu0 %v1502
        %1519 = vmatprep.subr.mxu0 0.0
        %1520 = vmatpush1.msra.mxu0 %v1503
        %1521 = vmatprep.subr.mxu0 0.0
        %1522 = vmatpush1.msra.mxu0 %v1504
        %1523 = vmatprep.subr.mxu0 0.0
        %1524 = vmatpush1.msra.mxu0 %v1505
        %1525 = vmatprep.subr.mxu0 0.0
        %1526 = vmatpush1.msra.mxu0 0.0
        %1527 = vmatprep.subr.mxu0 0.0
        %1528 = vmatpush1.msra.mxu0 0.0
        %1529 = vmatprep.subr.mxu0 0.0
        %1530 = vmatpush1.msra.mxu0 0.0
        %1531 = vmatprep.subr.mxu0 0.0
        %1532 = vmatpush1.msra.mxu0 0.0
        %1533 = vmatprep.subr.mxu0 0.0
        %1534 = vmatpush1.msra.mxu0 0.0
        %1535 = vmatprep.subr.mxu0 0.0
        %1536 = vmatpush1.msra.mxu0 0.0
        %1537 = vmatprep.subr.mxu0 0.0
        %1538 = vmatpush1.msra.mxu0 0.0
        %1539 = vmatprep.subr.mxu0 0.0
        %1540 = vmatpush1.msra.mxu0 0.0
        %1541 = vmatprep.subr.mxu0 0.0
        %1542 = vmatpush1.msra.mxu0 0.0
        %1543 = vmatprep.subr.mxu0 0.0
        %1544 = vmatpush1.msra.mxu0 0.0
        %1545 = vmatprep.subr.mxu0 0.0
        %1546 = vmatpush1.msra.mxu0 0.0
        %1547 = vmatprep.subr.mxu0 0.0
        %1548 = vmatpush1.msra.mxu0 0.0
        %1549 = vmatprep.subr.mxu0 0.0
        %1550 = vmatpush1.msra.mxu0 0.0
        %1551 = vmatprep.subr.mxu0 0.0
        %1552 = vmatpush1.msra.mxu0 0.0
        %1553 = vmatprep.subr.mxu0 0.0
        %1554 = vmatpush1.msra.mxu0 0.0
        %1555 = vmatprep.subr.mxu0 0.0
        %1556 = vmatpush1.msra.mxu0 0.0
        %1557 = vmatprep.subr.mxu0 0.0
        %1558 = vmatpush1.msra.mxu0 0.0
        %1559 = vmatprep.subr.mxu0 0.0
        %1560 = vmatpush1.msra.mxu0 0.0
        %1561 = vmatprep.subr.mxu0 0.0
        %1562 = vmatpush1.msra.mxu0 0.0
        %1563 = vmatprep.subr.mxu0 0.0
        %1564 = vmatpush1.msra.mxu0 0.0
        %1565 = vmatprep.subr.mxu0 0.0
        %1566 = vmatpush1.msra.mxu0 0.0
        %1567 = vmatprep.subr.mxu0 0.0
        %1568 = vmatpush1.msra.mxu0 0.0
        %1569 = vmatprep.subr.mxu0 0.0
        %1570 = vmatpush1.msra.mxu0 0.0
        %1571 = vmatprep.subr.mxu0 0.0
        %1572 = vmatpush1.msra.mxu0 0.0
        %1573 = vmatprep.mubr.f32.mxu0 0.0
        %1574 = vmatmul.mubr.f32.gmra.mrb[0].mxu0 %v1507
        %v1575 = vpop.f32.mrb[0].mxu0
        %v1576 = vadd.f32 0.0, %v1575
        %v1577 = vpop.f32.mrb[0].mxu0
        %1578 = vdwg.mxu0
        %v1579 = vadd.f32 %v1494, %v1576
        %v1580 = vsel %vm353, 0.0, %v1495
        %s1581 = scalar_lea.vmem %s4, 384
        %v1582 = vld [vmem:[%s1581] sm:$0xff]
        %v1583 = vld [vmem:[%s1581 + $0x8] sm:$0xff]
        %v1584 = vld [vmem:[%s1581 + $0x10] sm:$0xff]
        %v1585 = vld [vmem:[%s1581 + $0x18] sm:$0xff]
        %v1586 = vld [vmem:[%s1581 + $0x20] sm:$0xff]
        %v1587 = vld [vmem:[%s1581 + $0x28] sm:$0xff]
        %v1588 = vld [vmem:[%s1581 + $0x30] sm:$0xff]
        %v1589 = vld [vmem:[%s1581 + $0x38] sm:$0xff]
        %v1591 = vsel %vm335, %v1580, 0
        %1593 = vmatprep.subr.mxu0 0.0
        %1594 = vmatpush1.msra.mxu0 %v1582
        %1595 = vmatprep.subr.mxu0 0.0
        %1596 = vmatpush1.msra.mxu0 %v1583
        %1597 = vmatprep.subr.mxu0 0.0
        %1598 = vmatpush1.msra.mxu0 %v1584
        %1599 = vmatprep.subr.mxu0 0.0
        %1600 = vmatpush1.msra.mxu0 %v1585
        %1601 = vmatprep.subr.mxu0 0.0
        %1602 = vmatpush1.msra.mxu0 %v1586
        %1603 = vmatprep.subr.mxu0 0.0
        %1604 = vmatpush1.msra.mxu0 %v1587
        %1605 = vmatprep.subr.mxu0 0.0
        %1606 = vmatpush1.msra.mxu0 %v1588
        %1607 = vmatprep.subr.mxu0 0.0
        %1608 = vmatpush1.msra.mxu0 %v1589
        %1609 = vmatprep.subr.mxu0 0.0
        %1610 = vmatpush1.msra.mxu0 0.0
        %1611 = vmatprep.subr.mxu0 0.0
        %1612 = vmatpush1.msra.mxu0 0.0
        %1613 = vmatprep.subr.mxu0 0.0
        %1614 = vmatpush1.msra.mxu0 0.0
        %1615 = vmatprep.subr.mxu0 0.0
        %1616 = vmatpush1.msra.mxu0 0.0
        %1617 = vmatprep.subr.mxu0 0.0
        %1618 = vmatpush1.msra.mxu0 0.0
        %1619 = vmatprep.subr.mxu0 0.0
        %1620 = vmatpush1.msra.mxu0 0.0
        %1621 = vmatprep.subr.mxu0 0.0
        %1622 = vmatpush1.msra.mxu0 0.0
        %1623 = vmatprep.subr.mxu0 0.0
        %1624 = vmatpush1.msra.mxu0 0.0
        %1625 = vmatprep.subr.mxu0 0.0
        %1626 = vmatpush1.msra.mxu0 0.0
        %1627 = vmatprep.subr.mxu0 0.0
        %1628 = vmatpush1.msra.mxu0 0.0
        %1629 = vmatprep.subr.mxu0 0.0
        %1630 = vmatpush1.msra.mxu0 0.0
        %1631 = vmatprep.subr.mxu0 0.0
        %1632 = vmatpush1.msra.mxu0 0.0
        %1633 = vmatprep.subr.mxu0 0.0
        %1634 = vmatpush1.msra.mxu0 0.0
        %1635 = vmatprep.subr.mxu0 0.0
        %1636 = vmatpush1.msra.mxu0 0.0
        %1637 = vmatprep.subr.mxu0 0.0
        %1638 = vmatpush1.msra.mxu0 0.0
        %1639 = vmatprep.subr.mxu0 0.0
        %1640 = vmatpush1.msra.mxu0 0.0
        %1641 = vmatprep.subr.mxu0 0.0
        %1642 = vmatpush1.msra.mxu0 0.0
        %1643 = vmatprep.subr.mxu0 0.0
        %1644 = vmatpush1.msra.mxu0 0.0
        %1645 = vmatprep.subr.mxu0 0.0
        %1646 = vmatpush1.msra.mxu0 0.0
        %1647 = vmatprep.subr.mxu0 0.0
        %1648 = vmatpush1.msra.mxu0 0.0
        %1649 = vmatprep.subr.mxu0 0.0
        %1650 = vmatpush1.msra.mxu0 0.0
        %1651 = vmatprep.subr.mxu0 0.0
        %1652 = vmatpush1.msra.mxu0 0.0
        %1653 = vmatprep.subr.mxu0 0.0
        %1654 = vmatpush1.msra.mxu0 0.0
        %1655 = vmatprep.subr.mxu0 0.0
        %1656 = vmatpush1.msra.mxu0 0.0
        %1657 = vmatprep.mubr.f32.mxu0 0.0
        %1658 = vmatmul.mubr.f32.gmra.mrb[0].mxu0 %v1591
        %v1659 = vpop.f32.mrb[0].mxu0
        %v1660 = vadd.f32 0.0, %v1659
        %v1661 = vpop.f32.mrb[0].mxu0
        %1662 = vdwg.mxu0
        %v1663 = vadd.f32 %v1579, %v1660
        %v1664 = vld [vmem:[#allocation3 + $0xa] sm:$0xf]
        %s1665 = scalar_lea.vmem %s4, 448
        %v1666 = vld [vmem:[%s1665] sm:$0xff]
        %v1667 = vld [vmem:[%s1665 + $0x8] sm:$0xff]
        %v1668 = vld [vmem:[%s1665 + $0x10] sm:$0xff]
        %v1669 = vld [vmem:[%s1665 + $0x18] sm:$0xff]
        %v1670 = vld [vmem:[%s1665 + $0x20] sm:$0xff]
        %v1671 = vld [vmem:[%s1665 + $0x28] sm:$0xff]
        %v1672 = vld [vmem:[%s1665 + $0x30] sm:$0xff]
        %v1673 = vld [vmem:[%s1665 + $0x38] sm:$0xff]
        %v1675 = vsel %vm335, %v1664, 0
        %1677 = vmatprep.subr.mxu0 0.0
        %1678 = vmatpush1.msra.mxu0 %v1666
        %1679 = vmatprep.subr.mxu0 0.0
        %1680 = vmatpush1.msra.mxu0 %v1667
        %1681 = vmatprep.subr.mxu0 0.0
        %1682 = vmatpush1.msra.mxu0 %v1668
        %1683 = vmatprep.subr.mxu0 0.0
        %1684 = vmatpush1.msra.mxu0 %v1669
        %1685 = vmatprep.subr.mxu0 0.0
        %1686 = vmatpush1.msra.mxu0 %v1670
        %1687 = vmatprep.subr.mxu0 0.0
        %1688 = vmatpush1.msra.mxu0 %v1671
        %1689 = vmatprep.subr.mxu0 0.0
        %1690 = vmatpush1.msra.mxu0 %v1672
        %1691 = vmatprep.subr.mxu0 0.0
        %1692 = vmatpush1.msra.mxu0 %v1673
        %1693 = vmatprep.subr.mxu0 0.0
        %1694 = vmatpush1.msra.mxu0 0.0
        %1695 = vmatprep.subr.mxu0 0.0
        %1696 = vmatpush1.msra.mxu0 0.0
        %1697 = vmatprep.subr.mxu0 0.0
        %1698 = vmatpush1.msra.mxu0 0.0
        %1699 = vmatprep.subr.mxu0 0.0
        %1700 = vmatpush1.msra.mxu0 0.0
        %1701 = vmatprep.subr.mxu0 0.0
        %1702 = vmatpush1.msra.mxu0 0.0
        %1703 = vmatprep.subr.mxu0 0.0
        %1704 = vmatpush1.msra.mxu0 0.0
        %1705 = vmatprep.subr.mxu0 0.0
        %1706 = vmatpush1.msra.mxu0 0.0
        %1707 = vmatprep.subr.mxu0 0.0
        %1708 = vmatpush1.msra.mxu0 0.0
        %1709 = vmatprep.subr.mxu0 0.0
        %1710 = vmatpush1.msra.mxu0 0.0
        %1711 = vmatprep.subr.mxu0 0.0
        %1712 = vmatpush1.msra.mxu0 0.0
        %1713 = vmatprep.subr.mxu0 0.0
        %1714 = vmatpush1.msra.mxu0 0.0
        %1715 = vmatprep.subr.mxu0 0.0
        %1716 = vmatpush1.msra.mxu0 0.0
        %1717 = vmatprep.subr.mxu0 0.0
        %1718 = vmatpush1.msra.mxu0 0.0
        %1719 = vmatprep.subr.mxu0 0.0
        %1720 = vmatpush1.msra.mxu0 0.0
        %1721 = vmatprep.subr.mxu0 0.0
        %1722 = vmatpush1.msra.mxu0 0.0
        %1723 = vmatprep.subr.mxu0 0.0
        %1724 = vmatpush1.msra.mxu0 0.0
        %1725 = vmatprep.subr.mxu0 0.0
        %1726 = vmatpush1.msra.mxu0 0.0
        %1727 = vmatprep.subr.mxu0 0.0
        %1728 = vmatpush1.msra.mxu0 0.0
        %1729 = vmatprep.subr.mxu0 0.0
        %1730 = vmatpush1.msra.mxu0 0.0
        %1731 = vmatprep.subr.mxu0 0.0
        %1732 = vmatpush1.msra.mxu0 0.0
        %1733 = vmatprep.subr.mxu0 0.0
        %1734 = vmatpush1.msra.mxu0 0.0
        %1735 = vmatprep.subr.mxu0 0.0
        %1736 = vmatpush1.msra.mxu0 0.0
        %1737 = vmatprep.subr.mxu0 0.0
        %1738 = vmatpush1.msra.mxu0 0.0
        %1739 = vmatprep.subr.mxu0 0.0
        %1740 = vmatpush1.msra.mxu0 0.0
        %1741 = vmatprep.mubr.f32.mxu0 0.0
        %1742 = vmatmul.mubr.f32.gmra.mrb[0].mxu0 %v1675
        %v1743 = vpop.f32.mrb[0].mxu0
        %v1744 = vadd.f32 0.0, %v1743
        %v1745 = vpop.f32.mrb[0].mxu0
        %1746 = vdwg.mxu0
        %v1747 = vadd.f32 %v1663, %v1744
        %v1748 = vld [vmem:[#allocation3 + $0xb] sm:$0xf]
        %v1749 = vsel %vm513, 0.0, %v1748
        %s1750 = scalar_lea.vmem %s4, 512
        %v1751 = vld [vmem:[%s1750] sm:$0xff]
        %v1752 = vld [vmem:[%s1750 + $0x8] sm:$0xff]
        %v1753 = vld [vmem:[%s1750 + $0x10] sm:$0xff]
        %v1754 = vld [vmem:[%s1750 + $0x18] sm:$0xff]
        %v1755 = vld [vmem:[%s1750 + $0x20] sm:$0xff]
        %v1756 = vld [vmem:[%s1750 + $0x28] sm:$0xff]
        %v1757 = vld [vmem:[%s1750 + $0x30] sm:$0xff]
        %v1758 = vld [vmem:[%s1750 + $0x38] sm:$0xff]
        %v1760 = vsel %vm335, %v1749, 0
        %1762 = vmatprep.subr.mxu0 0.0
        %1763 = vmatpush1.msra.mxu0 %v1751
        %1764 = vmatprep.subr.mxu0 0.0
        %1765 = vmatpush1.msra.mxu0 %v1752
        %1766 = vmatprep.subr.mxu0 0.0
        %1767 = vmatpush1.msra.mxu0 %v1753
        %1768 = vmatprep.subr.mxu0 0.0
        %1769 = vmatpush1.msra.mxu0 %v1754
        %1770 = vmatprep.subr.mxu0 0.0
        %1771 = vmatpush1.msra.mxu0 %v1755
        %1772 = vmatprep.subr.mxu0 0.0
        %1773 = vmatpush1.msra.mxu0 %v1756
        %1774 = vmatprep.subr.mxu0 0.0
        %1775 = vmatpush1.msra.mxu0 %v1757
        %1776 = vmatprep.subr.mxu0 0.0
        %1777 = vmatpush1.msra.mxu0 %v1758
        %1778 = vmatprep.subr.mxu0 0.0
        %1779 = vmatpush1.msra.mxu0 0.0
        %1780 = vmatprep.subr.mxu0 0.0
        %1781 = vmatpush1.msra.mxu0 0.0
        %1782 = vmatprep.subr.mxu0 0.0
        %1783 = vmatpush1.msra.mxu0 0.0
        %1784 = vmatprep.subr.mxu0 0.0
        %1785 = vmatpush1.msra.mxu0 0.0
        %1786 = vmatprep.subr.mxu0 0.0
        %1787 = vmatpush1.msra.mxu0 0.0
        %1788 = vmatprep.subr.mxu0 0.0
        %1789 = vmatpush1.msra.mxu0 0.0
        %1790 = vmatprep.subr.mxu0 0.0
        %1791 = vmatpush1.msra.mxu0 0.0
        %1792 = vmatprep.subr.mxu0 0.0
        %1793 = vmatpush1.msra.mxu0 0.0
        %1794 = vmatprep.subr.mxu0 0.0
        %1795 = vmatpush1.msra.mxu0 0.0
        %1796 = vmatprep.subr.mxu0 0.0
        %1797 = vmatpush1.msra.mxu0 0.0
        %1798 = vmatprep.subr.mxu0 0.0
        %1799 = vmatpush1.msra.mxu0 0.0
        %1800 = vmatprep.subr.mxu0 0.0
        %1801 = vmatpush1.msra.mxu0 0.0
        %1802 = vmatprep.subr.mxu0 0.0
        %1803 = vmatpush1.msra.mxu0 0.0
        %1804 = vmatprep.subr.mxu0 0.0
        %1805 = vmatpush1.msra.mxu0 0.0
        %1806 = vmatprep.subr.mxu0 0.0
        %1807 = vmatpush1.msra.mxu0 0.0
        %1808 = vmatprep.subr.mxu0 0.0
        %1809 = vmatpush1.msra.mxu0 0.0
        %1810 = vmatprep.subr.mxu0 0.0
        %1811 = vmatpush1.msra.mxu0 0.0
        %1812 = vmatprep.subr.mxu0 0.0
        %1813 = vmatpush1.msra.mxu0 0.0
        %1814 = vmatprep.subr.mxu0 0.0
        %1815 = vmatpush1.msra.mxu0 0.0
        %1816 = vmatprep.subr.mxu0 0.0
        %1817 = vmatpush1.msra.mxu0 0.0
        %1818 = vmatprep.subr.mxu0 0.0
        %1819 = vmatpush1.msra.mxu0 0.0
        %1820 = vmatprep.subr.mxu0 0.0
        %1821 = vmatpush1.msra.mxu0 0.0
        %1822 = vmatprep.subr.mxu0 0.0
        %1823 = vmatpush1.msra.mxu0 0.0
        %1824 = vmatprep.subr.mxu0 0.0
        %1825 = vmatpush1.msra.mxu0 0.0
        %1826 = vmatprep.mubr.f32.mxu0 0.0
        %1827 = vmatmul.mubr.f32.gmra.mrb[0].mxu0 %v1760
        %v1828 = vpop.f32.mrb[0].mxu0
        %v1829 = vadd.f32 0.0, %v1828
        %v1830 = vpop.f32.mrb[0].mxu0
        %1831 = vdwg.mxu0
        %v1832 = vadd.f32 %v1747, %v1829
        %v1833 = vadd.f32 %v1075, %v1832
        %v1834 = vld [vmem:[%s5] sm:$0x1]
        %v1836 = vlaneseq
        %v1837 = vshrl.u32 %v1836, 7
        %v1838 = vsub.s32 0, %v1837
        %v1839 = vrot.slane %v1834, %v1838
        %v1841 = vadd.f32 %v1833, %v1839
        %v1842 = vmax.f32 %v1841, 0.0
        %1843 = vst.msk [vmem:[#allocation4] sm:$0xff] %vm331, 0.0
        %1844 = vst.msk [vmem:[#allocation4 + $0x8] sm:$0x7f] %vm333, 0.0
        %1845 = vst.msk [vmem:[#allocation4 + $0x8] sm:$0xf] %vm340, %v1842
        %v1846 = vld [vmem:[#allocation4 + $0x5] sm:$0xf]
        %v1847 = vsel %vm353, 0.0, %v1846
        %v1848 = vld [vmem:[%s6] sm:$0xff]
        %v1849 = vld [vmem:[%s6 + $0x8] sm:$0xff]
        %v1850 = vld [vmem:[%s6 + $0x10] sm:$0xff]
        %v1851 = vld [vmem:[%s6 + $0x18] sm:$0xff]
        %v1852 = vld [vmem:[#allocation4 + $0x6] sm:$0xf]
        %s1853 = scalar_lea.vmem %s6, 32
        %v1854 = vld [vmem:[%s1853] sm:$0xff]
        %v1855 = vld [vmem:[%s1853 + $0x8] sm:$0xff]
        %v1856 = vld [vmem:[%s1853 + $0x10] sm:$0xff]
        %v1857 = vld [vmem:[%s1853 + $0x18] sm:$0xff]
        %v1859 = vsel %vm331, %v1852, 0
        %1861 = vmatprep.subr.mxu0 0.0
        %1862 = vmatpush1.msra.mxu0 %v1854
        %1863 = vmatprep.subr.mxu0 0.0
        %1864 = vmatpush1.msra.mxu0 %v1855
        %1865 = vmatprep.subr.mxu0 0.0
        %1866 = vmatpush1.msra.mxu0 %v1856
        %1867 = vmatprep.subr.mxu0 0.0
        %1868 = vmatpush1.msra.mxu0 %v1857
        %1869 = vmatprep.subr.mxu0 0.0
        %1870 = vmatpush1.msra.mxu0 0.0
        %1871 = vmatprep.subr.mxu0 0.0
        %1872 = vmatpush1.msra.mxu0 0.0
        %1873 = vmatprep.subr.mxu0 0.0
        %1874 = vmatpush1.msra.mxu0 0.0
        %1875 = vmatprep.subr.mxu0 0.0
        %1876 = vmatpush1.msra.mxu0 0.0
        %1877 = vmatprep.subr.mxu0 0.0
        %1878 = vmatpush1.msra.mxu0 0.0
        %1879 = vmatprep.subr.mxu0 0.0
        %1880 = vmatpush1.msra.mxu0 0.0
        %1881 = vmatprep.subr.mxu0 0.0
        %1882 = vmatpush1.msra.mxu0 0.0
        %1883 = vmatprep.subr.mxu0 0.0
        %1884 = vmatpush1.msra.mxu0 0.0
        %1885 = vmatprep.subr.mxu0 0.0
        %1886 = vmatpush1.msra.mxu0 0.0
        %1887 = vmatprep.subr.mxu0 0.0
        %1888 = vmatpush1.msra.mxu0 0.0
        %1889 = vmatprep.subr.mxu0 0.0
        %1890 = vmatpush1.msra.mxu0 0.0
        %1891 = vmatprep.subr.mxu0 0.0
        %1892 = vmatpush1.msra.mxu0 0.0
        %1893 = vmatprep.subr.mxu0 0.0
        %1894 = vmatpush1.msra.mxu0 0.0
        %1895 = vmatprep.subr.mxu0 0.0
        %1896 = vmatpush1.msra.mxu0 0.0
        %1897 = vmatprep.subr.mxu0 0.0
        %1898 = vmatpush1.msra.mxu0 0.0
        %1899 = vmatprep.subr.mxu0 0.0
        %1900 = vmatpush1.msra.mxu0 0.0
        %1901 = vmatprep.subr.mxu0 0.0
        %1902 = vmatpush1.msra.mxu0 0.0
        %1903 = vmatprep.subr.mxu0 0.0
        %1904 = vmatpush1.msra.mxu0 0.0
        %1905 = vmatprep.subr.mxu0 0.0
        %1906 = vmatpush1.msra.mxu0 0.0
        %1907 = vmatprep.subr.mxu0 0.0
        %1908 = vmatpush1.msra.mxu0 0.0
        %1909 = vmatprep.subr.mxu0 0.0
        %1910 = vmatpush1.msra.mxu0 0.0
        %1911 = vmatprep.subr.mxu0 0.0
        %1912 = vmatpush1.msra.mxu0 0.0
        %1913 = vmatprep.subr.mxu0 0.0
        %1914 = vmatpush1.msra.mxu0 0.0
        %1915 = vmatprep.subr.mxu0 0.0
        %1916 = vmatpush1.msra.mxu0 0.0
        %1917 = vmatprep.subr.mxu0 0.0
        %1918 = vmatpush1.msra.mxu0 0.0
        %1919 = vmatprep.subr.mxu0 0.0
        %1920 = vmatpush1.msra.mxu0 0.0
        %1921 = vmatprep.subr.mxu0 0.0
        %1922 = vmatpush1.msra.mxu0 0.0
        %1923 = vmatprep.subr.mxu0 0.0
        %1924 = vmatpush1.msra.mxu0 0.0
        %1925 = vmatprep.mubr.f32.mxu0 0.0
        %1926 = vmatmul.mubr.f32.gmra.mrb[0].mxu0 %v1859
        %v1927 = vpop.f32.mrb[0].mxu0
        %v1928 = vadd.f32 0.0, %v1927
        %v1929 = vpop.f32.mrb[0].mxu0
        %1930 = vdwg.mxu0
        %v1932 = vsel %vm331, %v1847, 0
        %1934 = vmatprep.subr.mxu0 0.0
        %1935 = vmatpush1.msra.mxu0 %v1848
        %1936 = vmatprep.subr.mxu0 0.0
        %1937 = vmatpush1.msra.mxu0 %v1849
        %1938 = vmatprep.subr.mxu0 0.0
        %1939 = vmatpush1.msra.mxu0 %v1850
        %1940 = vmatprep.subr.mxu0 0.0
        %1941 = vmatpush1.msra.mxu0 %v1851
        %1942 = vmatprep.subr.mxu0 0.0
        %1943 = vmatpush1.msra.mxu0 0.0
        %1944 = vmatprep.subr.mxu0 0.0
        %1945 = vmatpush1.msra.mxu0 0.0
        %1946 = vmatprep.subr.mxu0 0.0
        %1947 = vmatpush1.msra.mxu0 0.0
        %1948 = vmatprep.subr.mxu0 0.0
        %1949 = vmatpush1.msra.mxu0 0.0
        %1950 = vmatprep.subr.mxu0 0.0
        %1951 = vmatpush1.msra.mxu0 0.0
        %1952 = vmatprep.subr.mxu0 0.0
        %1953 = vmatpush1.msra.mxu0 0.0
        %1954 = vmatprep.subr.mxu0 0.0
        %1955 = vmatpush1.msra.mxu0 0.0
        %1956 = vmatprep.subr.mxu0 0.0
        %1957 = vmatpush1.msra.mxu0 0.0
        %1958 = vmatprep.subr.mxu0 0.0
        %1959 = vmatpush1.msra.mxu0 0.0
        %1960 = vmatprep.subr.mxu0 0.0
        %1961 = vmatpush1.msra.mxu0 0.0
        %1962 = vmatprep.subr.mxu0 0.0
        %1963 = vmatpush1.msra.mxu0 0.0
        %1964 = vmatprep.subr.mxu0 0.0
        %1965 = vmatpush1.msra.mxu0 0.0
        %1966 = vmatprep.subr.mxu0 0.0
        %1967 = vmatpush1.msra.mxu0 0.0
        %1968 = vmatprep.subr.mxu0 0.0
        %1969 = vmatpush1.msra.mxu0 0.0
        %1970 = vmatprep.subr.mxu0 0.0
        %1971 = vmatpush1.msra.mxu0 0.0
        %1972 = vmatprep.subr.mxu0 0.0
        %1973 = vmatpush1.msra.mxu0 0.0
        %1974 = vmatprep.subr.mxu0 0.0
        %1975 = vmatpush1.msra.mxu0 0.0
        %1976 = vmatprep.subr.mxu0 0.0
        %1977 = vmatpush1.msra.mxu0 0.0
        %1978 = vmatprep.subr.mxu0 0.0
        %1979 = vmatpush1.msra.mxu0 0.0
        %1980 = vmatprep.subr.mxu0 0.0
        %1981 = vmatpush1.msra.mxu0 0.0
        %1982 = vmatprep.subr.mxu0 0.0
        %1983 = vmatpush1.msra.mxu0 0.0
        %1984 = vmatprep.subr.mxu0 0.0
        %1985 = vmatpush1.msra.mxu0 0.0
        %1986 = vmatprep.subr.mxu0 0.0
        %1987 = vmatpush1.msra.mxu0 0.0
        %1988 = vmatprep.subr.mxu0 0.0
        %1989 = vmatpush1.msra.mxu0 0.0
        %1990 = vmatprep.subr.mxu0 0.0
        %1991 = vmatpush1.msra.mxu0 0.0
        %1992 = vmatprep.subr.mxu0 0.0
        %1993 = vmatpush1.msra.mxu0 0.0
        %1994 = vmatprep.subr.mxu0 0.0
        %1995 = vmatpush1.msra.mxu0 0.0
        %1996 = vmatprep.subr.mxu0 0.0
        %1997 = vmatpush1.msra.mxu0 0.0
        %1998 = vmatprep.mubr.f32.mxu0 0.0
        %1999 = vmatmul.mubr.f32.gmra.mrb[0].mxu0 %v1932
        %v2000 = vpop.f32.mrb[0].mxu0
        %v2001 = vadd.f32 %v1928, %v2000
        %v2002 = vpop.f32.mrb[0].mxu0
        %2003 = vdwg.mxu0
        %v2004 = vld [vmem:[#allocation4 + $0x7] sm:$0xf]
        %v2005 = vsel %vm513, 0.0, %v2004
        %s2006 = scalar_lea.vmem %s6, 64
        %v2007 = vld [vmem:[%s2006] sm:$0xff]
        %v2008 = vld [vmem:[%s2006 + $0x8] sm:$0xff]
        %v2009 = vld [vmem:[%s2006 + $0x10] sm:$0xff]
        %v2010 = vld [vmem:[%s2006 + $0x18] sm:$0xff]
        %v2012 = vsel %vm331, %v2005, 0
        %2014 = vmatprep.subr.mxu0 0.0
        %2015 = vmatpush1.msra.mxu0 %v2007
        %2016 = vmatprep.subr.mxu0 0.0
        %2017 = vmatpush1.msra.mxu0 %v2008
        %2018 = vmatprep.subr.mxu0 0.0
        %2019 = vmatpush1.msra.mxu0 %v2009
        %2020 = vmatprep.subr.mxu0 0.0
        %2021 = vmatpush1.msra.mxu0 %v2010
        %2022 = vmatprep.subr.mxu0 0.0
        %2023 = vmatpush1.msra.mxu0 0.0
        %2024 = vmatprep.subr.mxu0 0.0
        %2025 = vmatpush1.msra.mxu0 0.0
        %2026 = vmatprep.subr.mxu0 0.0
        %2027 = vmatpush1.msra.mxu0 0.0
        %2028 = vmatprep.subr.mxu0 0.0
        %2029 = vmatpush1.msra.mxu0 0.0
        %2030 = vmatprep.subr.mxu0 0.0
        %2031 = vmatpush1.msra.mxu0 0.0
        %2032 = vmatprep.subr.mxu0 0.0
        %2033 = vmatpush1.msra.mxu0 0.0
        %2034 = vmatprep.subr.mxu0 0.0
        %2035 = vmatpush1.msra.mxu0 0.0
        %2036 = vmatprep.subr.mxu0 0.0
        %2037 = vmatpush1.msra.mxu0 0.0
        %2038 = vmatprep.subr.mxu0 0.0
        %2039 = vmatpush1.msra.mxu0 0.0
        %2040 = vmatprep.subr.mxu0 0.0
        %2041 = vmatpush1.msra.mxu0 0.0
        %2042 = vmatprep.subr.mxu0 0.0
        %2043 = vmatpush1.msra.mxu0 0.0
        %2044 = vmatprep.subr.mxu0 0.0
        %2045 = vmatpush1.msra.mxu0 0.0
        %2046 = vmatprep.subr.mxu0 0.0
        %2047 = vmatpush1.msra.mxu0 0.0
        %2048 = vmatprep.subr.mxu0 0.0
        %2049 = vmatpush1.msra.mxu0 0.0
        %2050 = vmatprep.subr.mxu0 0.0
        %2051 = vmatpush1.msra.mxu0 0.0
        %2052 = vmatprep.subr.mxu0 0.0
        %2053 = vmatpush1.msra.mxu0 0.0
        %2054 = vmatprep.subr.mxu0 0.0
        %2055 = vmatpush1.msra.mxu0 0.0
        %2056 = vmatprep.subr.mxu0 0.0
        %2057 = vmatpush1.msra.mxu0 0.0
        %2058 = vmatprep.subr.mxu0 0.0
        %2059 = vmatpush1.msra.mxu0 0.0
        %2060 = vmatprep.subr.mxu0 0.0
        %2061 = vmatpush1.msra.mxu0 0.0
        %2062 = vmatprep.subr.mxu0 0.0
        %2063 = vmatpush1.msra.mxu0 0.0
        %2064 = vmatprep.subr.mxu0 0.0
        %2065 = vmatpush1.msra.mxu0 0.0
        %2066 = vmatprep.subr.mxu0 0.0
        %2067 = vmatpush1.msra.mxu0 0.0
        %2068 = vmatprep.subr.mxu0 0.0
        %2069 = vmatpush1.msra.mxu0 0.0
        %2070 = vmatprep.subr.mxu0 0.0
        %2071 = vmatpush1.msra.mxu0 0.0
        %2072 = vmatprep.subr.mxu0 0.0
        %2073 = vmatpush1.msra.mxu0 0.0
        %2074 = vmatprep.subr.mxu0 0.0
        %2075 = vmatpush1.msra.mxu0 0.0
        %2076 = vmatprep.subr.mxu0 0.0
        %2077 = vmatpush1.msra.mxu0 0.0
        %2078 = vmatprep.mubr.f32.mxu0 0.0
        %2079 = vmatmul.mubr.f32.gmra.mrb[0].mxu0 %v2012
        %v2080 = vpop.f32.mrb[0].mxu0
        %v2081 = vadd.f32 0.0, %v2080
        %v2082 = vpop.f32.mrb[0].mxu0
        %2083 = vdwg.mxu0
        %v2084 = vadd.f32 %v2001, %v2081
        %v2085 = vsel %vm353, 0.0, %v2004
        %s2086 = scalar_lea.vmem %s6, 96
        %v2087 = vld [vmem:[%s2086] sm:$0xff]
        %v2088 = vld [vmem:[%s2086 + $0x8] sm:$0xff]
        %v2089 = vld [vmem:[%s2086 + $0x10] sm:$0xff]
        %v2090 = vld [vmem:[%s2086 + $0x18] sm:$0xff]
        %v2092 = vsel %vm331, %v2085, 0
        %2094 = vmatprep.subr.mxu0 0.0
        %2095 = vmatpush1.msra.mxu0 %v2087
        %2096 = vmatprep.subr.mxu0 0.0
        %2097 = vmatpush1.msra.mxu0 %v2088
        %2098 = vmatprep.subr.mxu0 0.0
        %2099 = vmatpush1.msra.mxu0 %v2089
        %2100 = vmatprep.subr.mxu0 0.0
        %2101 = vmatpush1.msra.mxu0 %v2090
        %2102 = vmatprep.subr.mxu0 0.0
        %2103 = vmatpush1.msra.mxu0 0.0
        %2104 = vmatprep.subr.mxu0 0.0
        %2105 = vmatpush1.msra.mxu0 0.0
        %2106 = vmatprep.subr.mxu0 0.0
        %2107 = vmatpush1.msra.mxu0 0.0
        %2108 = vmatprep.subr.mxu0 0.0
        %2109 = vmatpush1.msra.mxu0 0.0
        %2110 = vmatprep.subr.mxu0 0.0
        %2111 = vmatpush1.msra.mxu0 0.0
        %2112 = vmatprep.subr.mxu0 0.0
        %2113 = vmatpush1.msra.mxu0 0.0
        %2114 = vmatprep.subr.mxu0 0.0
        %2115 = vmatpush1.msra.mxu0 0.0
        %2116 = vmatprep.subr.mxu0 0.0
        %2117 = vmatpush1.msra.mxu0 0.0
        %2118 = vmatprep.subr.mxu0 0.0
        %2119 = vmatpush1.msra.mxu0 0.0
        %2120 = vmatprep.subr.mxu0 0.0
        %2121 = vmatpush1.msra.mxu0 0.0
        %2122 = vmatprep.subr.mxu0 0.0
        %2123 = vmatpush1.msra.mxu0 0.0
        %2124 = vmatprep.subr.mxu0 0.0
        %2125 = vmatpush1.msra.mxu0 0.0
        %2126 = vmatprep.subr.mxu0 0.0
        %2127 = vmatpush1.msra.mxu0 0.0
        %2128 = vmatprep.subr.mxu0 0.0
        %2129 = vmatpush1.msra.mxu0 0.0
        %2130 = vmatprep.subr.mxu0 0.0
        %2131 = vmatpush1.msra.mxu0 0.0
        %2132 = vmatprep.subr.mxu0 0.0
        %2133 = vmatpush1.msra.mxu0 0.0
        %2134 = vmatprep.subr.mxu0 0.0
        %2135 = vmatpush1.msra.mxu0 0.0
        %2136 = vmatprep.subr.mxu0 0.0
        %2137 = vmatpush1.msra.mxu0 0.0
        %2138 = vmatprep.subr.mxu0 0.0
        %2139 = vmatpush1.msra.mxu0 0.0
        %2140 = vmatprep.subr.mxu0 0.0
        %2141 = vmatpush1.msra.mxu0 0.0
        %2142 = vmatprep.subr.mxu0 0.0
        %2143 = vmatpush1.msra.mxu0 0.0
        %2144 = vmatprep.subr.mxu0 0.0
        %2145 = vmatpush1.msra.mxu0 0.0
        %2146 = vmatprep.subr.mxu0 0.0
        %2147 = vmatpush1.msra.mxu0 0.0
        %2148 = vmatprep.subr.mxu0 0.0
        %2149 = vmatpush1.msra.mxu0 0.0
        %2150 = vmatprep.subr.mxu0 0.0
        %2151 = vmatpush1.msra.mxu0 0.0
        %2152 = vmatprep.subr.mxu0 0.0
        %2153 = vmatpush1.msra.mxu0 0.0
        %2154 = vmatprep.subr.mxu0 0.0
        %2155 = vmatpush1.msra.mxu0 0.0
        %2156 = vmatprep.subr.mxu0 0.0
        %2157 = vmatpush1.msra.mxu0 0.0
        %2158 = vmatprep.mubr.f32.mxu0 0.0
        %2159 = vmatmul.mubr.f32.gmra.mrb[0].mxu0 %v2092
        %v2160 = vpop.f32.mrb[0].mxu0
        %v2161 = vadd.f32 0.0, %v2160
        %v2162 = vpop.f32.mrb[0].mxu0
        %2163 = vdwg.mxu0
        %v2164 = vadd.f32 %v2084, %v2161
        %v2165 = vld [vmem:[#allocation4 + $0x8] sm:$0xf]
        %s2166 = scalar_lea.vmem %s6, 128
        %v2167 = vld [vmem:[%s2166] sm:$0xff]
        %v2168 = vld [vmem:[%s2166 + $0x8] sm:$0xff]
        %v2169 = vld [vmem:[%s2166 + $0x10] sm:$0xff]
        %v2170 = vld [vmem:[%s2166 + $0x18] sm:$0xff]
        %v2172 = vsel %vm331, %v2165, 0
        %2174 = vmatprep.subr.mxu0 0.0
        %2175 = vmatpush1.msra.mxu0 %v2167
        %2176 = vmatprep.subr.mxu0 0.0
        %2177 = vmatpush1.msra.mxu0 %v2168
        %2178 = vmatprep.subr.mxu0 0.0
        %2179 = vmatpush1.msra.mxu0 %v2169
        %2180 = vmatprep.subr.mxu0 0.0
        %2181 = vmatpush1.msra.mxu0 %v2170
        %2182 = vmatprep.subr.mxu0 0.0
        %2183 = vmatpush1.msra.mxu0 0.0
        %2184 = vmatprep.subr.mxu0 0.0
        %2185 = vmatpush1.msra.mxu0 0.0
        %2186 = vmatprep.subr.mxu0 0.0
        %2187 = vmatpush1.msra.mxu0 0.0
        %2188 = vmatprep.subr.mxu0 0.0
        %2189 = vmatpush1.msra.mxu0 0.0
        %2190 = vmatprep.subr.mxu0 0.0
        %2191 = vmatpush1.msra.mxu0 0.0
        %2192 = vmatprep.subr.mxu0 0.0
        %2193 = vmatpush1.msra.mxu0 0.0
        %2194 = vmatprep.subr.mxu0 0.0
        %2195 = vmatpush1.msra.mxu0 0.0
        %2196 = vmatprep.subr.mxu0 0.0
        %2197 = vmatpush1.msra.mxu0 0.0
        %2198 = vmatprep.subr.mxu0 0.0
        %2199 = vmatpush1.msra.mxu0 0.0
        %2200 = vmatprep.subr.mxu0 0.0
        %2201 = vmatpush1.msra.mxu0 0.0
        %2202 = vmatprep.subr.mxu0 0.0
        %2203 = vmatpush1.msra.mxu0 0.0
        %2204 = vmatprep.subr.mxu0 0.0
        %2205 = vmatpush1.msra.mxu0 0.0
        %2206 = vmatprep.subr.mxu0 0.0
        %2207 = vmatpush1.msra.mxu0 0.0
        %2208 = vmatprep.subr.mxu0 0.0
        %2209 = vmatpush1.msra.mxu0 0.0
        %2210 = vmatprep.subr.mxu0 0.0
        %2211 = vmatpush1.msra.mxu0 0.0
        %2212 = vmatprep.subr.mxu0 0.0
        %2213 = vmatpush1.msra.mxu0 0.0
        %2214 = vmatprep.subr.mxu0 0.0
        %2215 = vmatpush1.msra.mxu0 0.0
        %2216 = vmatprep.subr.mxu0 0.0
        %2217 = vmatpush1.msra.mxu0 0.0
        %2218 = vmatprep.subr.mxu0 0.0
        %2219 = vmatpush1.msra.mxu0 0.0
        %2220 = vmatprep.subr.mxu0 0.0
        %2221 = vmatpush1.msra.mxu0 0.0
        %2222 = vmatprep.subr.mxu0 0.0
        %2223 = vmatpush1.msra.mxu0 0.0
        %2224 = vmatprep.subr.mxu0 0.0
        %2225 = vmatpush1.msra.mxu0 0.0
        %2226 = vmatprep.subr.mxu0 0.0
        %2227 = vmatpush1.msra.mxu0 0.0
        %2228 = vmatprep.subr.mxu0 0.0
        %2229 = vmatpush1.msra.mxu0 0.0
        %2230 = vmatprep.subr.mxu0 0.0
        %2231 = vmatpush1.msra.mxu0 0.0
        %2232 = vmatprep.subr.mxu0 0.0
        %2233 = vmatpush1.msra.mxu0 0.0
        %2234 = vmatprep.subr.mxu0 0.0
        %2235 = vmatpush1.msra.mxu0 0.0
        %2236 = vmatprep.subr.mxu0 0.0
        %2237 = vmatpush1.msra.mxu0 0.0
        %2238 = vmatprep.mubr.f32.mxu0 0.0
        %2239 = vmatmul.mubr.f32.gmra.mrb[0].mxu0 %v2172
        %v2240 = vpop.f32.mrb[0].mxu0
        %v2241 = vadd.f32 0.0, %v2240
        %v2242 = vpop.f32.mrb[0].mxu0
        %2243 = vdwg.mxu0
        %v2244 = vadd.f32 %v2164, %v2241
        %v2245 = vld [vmem:[#allocation4 + $0x9] sm:$0xf]
        %v2246 = vsel %vm513, 0.0, %v2245
        %s2247 = scalar_lea.vmem %s6, 160
        %v2248 = vld [vmem:[%s2247] sm:$0xff]
        %v2249 = vld [vmem:[%s2247 + $0x8] sm:$0xff]
        %v2250 = vld [vmem:[%s2247 + $0x10] sm:$0xff]
        %v2251 = vld [vmem:[%s2247 + $0x18] sm:$0xff]
        %v2253 = vsel %vm331, %v2246, 0
        %2255 = vmatprep.subr.mxu0 0.0
        %2256 = vmatpush1.msra.mxu0 %v2248
        %2257 = vmatprep.subr.mxu0 0.0
        %2258 = vmatpush1.msra.mxu0 %v2249
        %2259 = vmatprep.subr.mxu0 0.0
        %2260 = vmatpush1.msra.mxu0 %v2250
        %2261 = vmatprep.subr.mxu0 0.0
        %2262 = vmatpush1.msra.mxu0 %v2251
        %2263 = vmatprep.subr.mxu0 0.0
        %2264 = vmatpush1.msra.mxu0 0.0
        %2265 = vmatprep.subr.mxu0 0.0
        %2266 = vmatpush1.msra.mxu0 0.0
        %2267 = vmatprep.subr.mxu0 0.0
        %2268 = vmatpush1.msra.mxu0 0.0
        %2269 = vmatprep.subr.mxu0 0.0
        %2270 = vmatpush1.msra.mxu0 0.0
        %2271 = vmatprep.subr.mxu0 0.0
        %2272 = vmatpush1.msra.mxu0 0.0
        %2273 = vmatprep.subr.mxu0 0.0
        %2274 = vmatpush1.msra.mxu0 0.0
        %2275 = vmatprep.subr.mxu0 0.0
        %2276 = vmatpush1.msra.mxu0 0.0
        %2277 = vmatprep.subr.mxu0 0.0
        %2278 = vmatpush1.msra.mxu0 0.0
        %2279 = vmatprep.subr.mxu0 0.0
        %2280 = vmatpush1.msra.mxu0 0.0
        %2281 = vmatprep.subr.mxu0 0.0
        %2282 = vmatpush1.msra.mxu0 0.0
        %2283 = vmatprep.subr.mxu0 0.0
        %2284 = vmatpush1.msra.mxu0 0.0
        %2285 = vmatprep.subr.mxu0 0.0
        %2286 = vmatpush1.msra.mxu0 0.0
        %2287 = vmatprep.subr.mxu0 0.0
        %2288 = vmatpush1.msra.mxu0 0.0
        %2289 = vmatprep.subr.mxu0 0.0
        %2290 = vmatpush1.msra.mxu0 0.0
        %2291 = vmatprep.subr.mxu0 0.0
        %2292 = vmatpush1.msra.mxu0 0.0
        %2293 = vmatprep.subr.mxu0 0.0
        %2294 = vmatpush1.msra.mxu0 0.0
        %2295 = vmatprep.subr.mxu0 0.0
        %2296 = vmatpush1.msra.mxu0 0.0
        %2297 = vmatprep.subr.mxu0 0.0
        %2298 = vmatpush1.msra.mxu0 0.0
        %2299 = vmatprep.subr.mxu0 0.0
        %2300 = vmatpush1.msra.mxu0 0.0
        %2301 = vmatprep.subr.mxu0 0.0
        %2302 = vmatpush1.msra.mxu0 0.0
        %2303 = vmatprep.subr.mxu0 0.0
        %2304 = vmatpush1.msra.mxu0 0.0
        %2305 = vmatprep.subr.mxu0 0.0
        %2306 = vmatpush1.msra.mxu0 0.0
        %2307 = vmatprep.subr.mxu0 0.0
        %2308 = vmatpush1.msra.mxu0 0.0
        %2309 = vmatprep.subr.mxu0 0.0
        %2310 = vmatpush1.msra.mxu0 0.0
        %2311 = vmatprep.subr.mxu0 0.0
        %2312 = vmatpush1.msra.mxu0 0.0
        %2313 = vmatprep.subr.mxu0 0.0
        %2314 = vmatpush1.msra.mxu0 0.0
        %2315 = vmatprep.subr.mxu0 0.0
        %2316 = vmatpush1.msra.mxu0 0.0
        %2317 = vmatprep.subr.mxu0 0.0
        %2318 = vmatpush1.msra.mxu0 0.0
        %2319 = vmatprep.mubr.f32.mxu0 0.0
        %2320 = vmatmul.mubr.f32.gmra.mrb[0].mxu0 %v2253
        %v2321 = vpop.f32.mrb[0].mxu0
        %v2322 = vadd.f32 0.0, %v2321
        %v2323 = vpop.f32.mrb[0].mxu0
        %2324 = vdwg.mxu0
        %v2325 = vadd.f32 %v2244, %v2322
        %v2326 = vsel %vm353, 0.0, %v2245
        %s2327 = scalar_lea.vmem %s6, 192
        %v2328 = vld [vmem:[%s2327] sm:$0xff]
        %v2329 = vld [vmem:[%s2327 + $0x8] sm:$0xff]
        %v2330 = vld [vmem:[%s2327 + $0x10] sm:$0xff]
        %v2331 = vld [vmem:[%s2327 + $0x18] sm:$0xff]
        %v2333 = vsel %vm331, %v2326, 0
        %2335 = vmatprep.subr.mxu0 0.0
        %2336 = vmatpush1.msra.mxu0 %v2328
        %2337 = vmatprep.subr.mxu0 0.0
        %2338 = vmatpush1.msra.mxu0 %v2329
        %2339 = vmatprep.subr.mxu0 0.0
        %2340 = vmatpush1.msra.mxu0 %v2330
        %2341 = vmatprep.subr.mxu0 0.0
        %2342 = vmatpush1.msra.mxu0 %v2331
        %2343 = vmatprep.subr.mxu0 0.0
        %2344 = vmatpush1.msra.mxu0 0.0
        %2345 = vmatprep.subr.mxu0 0.0
        %2346 = vmatpush1.msra.mxu0 0.0
        %2347 = vmatprep.subr.mxu0 0.0
        %2348 = vmatpush1.msra.mxu0 0.0
        %2349 = vmatprep.subr.mxu0 0.0
        %2350 = vmatpush1.msra.mxu0 0.0
        %2351 = vmatprep.subr.mxu0 0.0
        %2352 = vmatpush1.msra.mxu0 0.0
        %2353 = vmatprep.subr.mxu0 0.0
        %2354 = vmatpush1.msra.mxu0 0.0
        %2355 = vmatprep.subr.mxu0 0.0
        %2356 = vmatpush1.msra.mxu0 0.0
        %2357 = vmatprep.subr.mxu0 0.0
        %2358 = vmatpush1.msra.mxu0 0.0
        %2359 = vmatprep.subr.mxu0 0.0
        %2360 = vmatpush1.msra.mxu0 0.0
        %2361 = vmatprep.subr.mxu0 0.0
        %2362 = vmatpush1.msra.mxu0 0.0
        %2363 = vmatprep.subr.mxu0 0.0
        %2364 = vmatpush1.msra.mxu0 0.0
        %2365 = vmatprep.subr.mxu0 0.0
        %2366 = vmatpush1.msra.mxu0 0.0
        %2367 = vmatprep.subr.mxu0 0.0
        %2368 = vmatpush1.msra.mxu0 0.0
        %2369 = vmatprep.subr.mxu0 0.0
        %2370 = vmatpush1.msra.mxu0 0.0
        %2371 = vmatprep.subr.mxu0 0.0
        %2372 = vmatpush1.msra.mxu0 0.0
        %2373 = vmatprep.subr.mxu0 0.0
        %2374 = vmatpush1.msra.mxu0 0.0
        %2375 = vmatprep.subr.mxu0 0.0
        %2376 = vmatpush1.msra.mxu0 0.0
        %2377 = vmatprep.subr.mxu0 0.0
        %2378 = vmatpush1.msra.mxu0 0.0
        %2379 = vmatprep.subr.mxu0 0.0
        %2380 = vmatpush1.msra.mxu0 0.0
        %2381 = vmatprep.subr.mxu0 0.0
        %2382 = vmatpush1.msra.mxu0 0.0
        %2383 = vmatprep.subr.mxu0 0.0
        %2384 = vmatpush1.msra.mxu0 0.0
        %2385 = vmatprep.subr.mxu0 0.0
        %2386 = vmatpush1.msra.mxu0 0.0
        %2387 = vmatprep.subr.mxu0 0.0
        %2388 = vmatpush1.msra.mxu0 0.0
        %2389 = vmatprep.subr.mxu0 0.0
        %2390 = vmatpush1.msra.mxu0 0.0
        %2391 = vmatprep.subr.mxu0 0.0
        %2392 = vmatpush1.msra.mxu0 0.0
        %2393 = vmatprep.subr.mxu0 0.0
        %2394 = vmatpush1.msra.mxu0 0.0
        %2395 = vmatprep.subr.mxu0 0.0
        %2396 = vmatpush1.msra.mxu0 0.0
        %2397 = vmatprep.subr.mxu0 0.0
        %2398 = vmatpush1.msra.mxu0 0.0
        %2399 = vmatprep.mubr.f32.mxu0 0.0
        %2400 = vmatmul.mubr.f32.gmra.mrb[0].mxu0 %v2333
        %v2401 = vpop.f32.mrb[0].mxu0
        %v2402 = vadd.f32 0.0, %v2401
        %v2403 = vpop.f32.mrb[0].mxu0
        %2404 = vdwg.mxu0
        %v2405 = vadd.f32 %v2325, %v2402
        %v2406 = vld [vmem:[#allocation4 + $0xa] sm:$0xf]
        %s2407 = scalar_lea.vmem %s6, 224
        %v2408 = vld [vmem:[%s2407] sm:$0xff]
        %v2409 = vld [vmem:[%s2407 + $0x8] sm:$0xff]
        %v2410 = vld [vmem:[%s2407 + $0x10] sm:$0xff]
        %v2411 = vld [vmem:[%s2407 + $0x18] sm:$0xff]
        %v2413 = vsel %vm331, %v2406, 0
        %2415 = vmatprep.subr.mxu0 0.0
        %2416 = vmatpush1.msra.mxu0 %v2408
        %2417 = vmatprep.subr.mxu0 0.0
        %2418 = vmatpush1.msra.mxu0 %v2409
        %2419 = vmatprep.subr.mxu0 0.0
        %2420 = vmatpush1.msra.mxu0 %v2410
        %2421 = vmatprep.subr.mxu0 0.0
        %2422 = vmatpush1.msra.mxu0 %v2411
        %2423 = vmatprep.subr.mxu0 0.0
        %2424 = vmatpush1.msra.mxu0 0.0
        %2425 = vmatprep.subr.mxu0 0.0
        %2426 = vmatpush1.msra.mxu0 0.0
        %2427 = vmatprep.subr.mxu0 0.0
        %2428 = vmatpush1.msra.mxu0 0.0
        %2429 = vmatprep.subr.mxu0 0.0
        %2430 = vmatpush1.msra.mxu0 0.0
        %2431 = vmatprep.subr.mxu0 0.0
        %2432 = vmatpush1.msra.mxu0 0.0
        %2433 = vmatprep.subr.mxu0 0.0
        %2434 = vmatpush1.msra.mxu0 0.0
        %2435 = vmatprep.subr.mxu0 0.0
        %2436 = vmatpush1.msra.mxu0 0.0
        %2437 = vmatprep.subr.mxu0 0.0
        %2438 = vmatpush1.msra.mxu0 0.0
        %2439 = vmatprep.subr.mxu0 0.0
        %2440 = vmatpush1.msra.mxu0 0.0
        %2441 = vmatprep.subr.mxu0 0.0
        %2442 = vmatpush1.msra.mxu0 0.0
        %2443 = vmatprep.subr.mxu0 0.0
        %2444 = vmatpush1.msra.mxu0 0.0
        %2445 = vmatprep.subr.mxu0 0.0
        %2446 = vmatpush1.msra.mxu0 0.0
        %2447 = vmatprep.subr.mxu0 0.0
        %2448 = vmatpush1.msra.mxu0 0.0
        %2449 = vmatprep.subr.mxu0 0.0
        %2450 = vmatpush1.msra.mxu0 0.0
        %2451 = vmatprep.subr.mxu0 0.0
        %2452 = vmatpush1.msra.mxu0 0.0
        %2453 = vmatprep.subr.mxu0 0.0
        %2454 = vmatpush1.msra.mxu0 0.0
        %2455 = vmatprep.subr.mxu0 0.0
        %2456 = vmatpush1.msra.mxu0 0.0
        %2457 = vmatprep.subr.mxu0 0.0
        %2458 = vmatpush1.msra.mxu0 0.0
        %2459 = vmatprep.subr.mxu0 0.0
        %2460 = vmatpush1.msra.mxu0 0.0
        %2461 = vmatprep.subr.mxu0 0.0
        %2462 = vmatpush1.msra.mxu0 0.0
        %2463 = vmatprep.subr.mxu0 0.0
        %2464 = vmatpush1.msra.mxu0 0.0
        %2465 = vmatprep.subr.mxu0 0.0
        %2466 = vmatpush1.msra.mxu0 0.0
        %2467 = vmatprep.subr.mxu0 0.0
        %2468 = vmatpush1.msra.mxu0 0.0
        %2469 = vmatprep.subr.mxu0 0.0
        %2470 = vmatpush1.msra.mxu0 0.0
        %2471 = vmatprep.subr.mxu0 0.0
        %2472 = vmatpush1.msra.mxu0 0.0
        %2473 = vmatprep.subr.mxu0 0.0
        %2474 = vmatpush1.msra.mxu0 0.0
        %2475 = vmatprep.subr.mxu0 0.0
        %2476 = vmatpush1.msra.mxu0 0.0
        %2477 = vmatprep.subr.mxu0 0.0
        %2478 = vmatpush1.msra.mxu0 0.0
        %2479 = vmatprep.mubr.f32.mxu0 0.0
        %2480 = vmatmul.mubr.f32.gmra.mrb[0].mxu0 %v2413
        %v2481 = vpop.f32.mrb[0].mxu0
        %v2482 = vadd.f32 0.0, %v2481
        %v2483 = vpop.f32.mrb[0].mxu0
        %2484 = vdwg.mxu0
        %v2485 = vadd.f32 %v2405, %v2482
        %v2486 = vld [vmem:[#allocation4 + $0xb] sm:$0xf]
        %v2487 = vsel %vm513, 0.0, %v2486
        %s2488 = scalar_lea.vmem %s6, 256
        %v2489 = vld [vmem:[%s2488] sm:$0xff]
        %v2490 = vld [vmem:[%s2488 + $0x8] sm:$0xff]
        %v2491 = vld [vmem:[%s2488 + $0x10] sm:$0xff]
        %v2492 = vld [vmem:[%s2488 + $0x18] sm:$0xff]
        %v2494 = vsel %vm331, %v2487, 0
        %2496 = vmatprep.subr.mxu0 0.0
        %2497 = vmatpush1.msra.mxu0 %v2489
        %2498 = vmatprep.subr.mxu0 0.0
        %2499 = vmatpush1.msra.mxu0 %v2490
        %2500 = vmatprep.subr.mxu0 0.0
        %2501 = vmatpush1.msra.mxu0 %v2491
        %2502 = vmatprep.subr.mxu0 0.0
        %2503 = vmatpush1.msra.mxu0 %v2492
        %2504 = vmatprep.subr.mxu0 0.0
        %2505 = vmatpush1.msra.mxu0 0.0
        %2506 = vmatprep.subr.mxu0 0.0
        %2507 = vmatpush1.msra.mxu0 0.0
        %2508 = vmatprep.subr.mxu0 0.0
        %2509 = vmatpush1.msra.mxu0 0.0
        %2510 = vmatprep.subr.mxu0 0.0
        %2511 = vmatpush1.msra.mxu0 0.0
        %2512 = vmatprep.subr.mxu0 0.0
        %2513 = vmatpush1.msra.mxu0 0.0
        %2514 = vmatprep.subr.mxu0 0.0
        %2515 = vmatpush1.msra.mxu0 0.0
        %2516 = vmatprep.subr.mxu0 0.0
        %2517 = vmatpush1.msra.mxu0 0.0
        %2518 = vmatprep.subr.mxu0 0.0
        %2519 = vmatpush1.msra.mxu0 0.0
        %2520 = vmatprep.subr.mxu0 0.0
        %2521 = vmatpush1.msra.mxu0 0.0
        %2522 = vmatprep.subr.mxu0 0.0
        %2523 = vmatpush1.msra.mxu0 0.0
        %2524 = vmatprep.subr.mxu0 0.0
        %2525 = vmatpush1.msra.mxu0 0.0
        %2526 = vmatprep.subr.mxu0 0.0
        %2527 = vmatpush1.msra.mxu0 0.0
        %2528 = vmatprep.subr.mxu0 0.0
        %2529 = vmatpush1.msra.mxu0 0.0
        %2530 = vmatprep.subr.mxu0 0.0
        %2531 = vmatpush1.msra.mxu0 0.0
        %2532 = vmatprep.subr.mxu0 0.0
        %2533 = vmatpush1.msra.mxu0 0.0
        %2534 = vmatprep.subr.mxu0 0.0
        %2535 = vmatpush1.msra.mxu0 0.0
        %2536 = vmatprep.subr.mxu0 0.0
        %2537 = vmatpush1.msra.mxu0 0.0
        %2538 = vmatprep.subr.mxu0 0.0
        %2539 = vmatpush1.msra.mxu0 0.0
        %2540 = vmatprep.subr.mxu0 0.0
        %2541 = vmatpush1.msra.mxu0 0.0
        %2542 = vmatprep.subr.mxu0 0.0
        %2543 = vmatpush1.msra.mxu0 0.0
        %2544 = vmatprep.subr.mxu0 0.0
        %2545 = vmatpush1.msra.mxu0 0.0
        %2546 = vmatprep.subr.mxu0 0.0
        %2547 = vmatpush1.msra.mxu0 0.0
        %2548 = vmatprep.subr.mxu0 0.0
        %2549 = vmatpush1.msra.mxu0 0.0
        %2550 = vmatprep.subr.mxu0 0.0
        %2551 = vmatpush1.msra.mxu0 0.0
        %2552 = vmatprep.subr.mxu0 0.0
        %2553 = vmatpush1.msra.mxu0 0.0
        %2554 = vmatprep.subr.mxu0 0.0
        %2555 = vmatpush1.msra.mxu0 0.0
        %2556 = vmatprep.subr.mxu0 0.0
        %2557 = vmatpush1.msra.mxu0 0.0
        %2558 = vmatprep.subr.mxu0 0.0
        %2559 = vmatpush1.msra.mxu0 0.0
        %2560 = vmatprep.mubr.f32.mxu0 0.0
        %2561 = vmatmul.mubr.f32.gmra.mrb[0].mxu0 %v2494
        %v2562 = vpop.f32.mrb[0].mxu0
        %v2563 = vadd.f32 0.0, %v2562
        %v2564 = vpop.f32.mrb[0].mxu0
        %2565 = vdwg.mxu0
        %v2566 = vadd.f32 %v2485, %v2563
        %v2567 = vld [vmem:[%s7] sm:$0x1]
        %v2569 = vlaneseq
        %v2570 = vshrl.u32 %v2569, 7
        %v2571 = vsub.s32 0, %v2570
        %v2572 = vrot.slane %v2567, %v2571
        %v2574 = vadd.f32 %v2566, %v2572
        %v2575 = vmax.f32 %v2574, 0.0
        %2576 = vst.msk [vmem:[%s307] sm:$0xf] %vm340, %v2575
        %s2577 = sand.u32 %s208, 1
        %s2578 = scalar_lea.sflag [#allocation6], %s2577
        %s2579 = sand.u32 %s208, 1
        %s2580 = smul.addr %s2579, 4
        %s2581 = scalar_lea.vmem [#allocation5], %s2580
        // Predicated region
        $region53: #{tpu_custom_call.1} parent=51 // pred_check
          %p2582 = pneg %p218
        $region54: #{tpu_custom_call.1} parent=51 // pred_check_branch
          %2584 = sbr.rel (%p2582) target = $region56
        $region55: #{tpu_custom_call.1} parent=51 // pred_region
          %s2586 = ssub.s32 64, 64
          %2587 = vsyncadd %s2578, %s2586
          %s2588 = smul.addr %s22, 64
          %s2589 = scalar_lea.hbm %s8, %s2588
          %s2591 = sshll.u32 %s2581, 4
          %s2592 = int_to_ptr.vmem [resolvable:$true] %s2591
          %2594 = dma.vmem_to_hbm [thread:$0]  %s2592, 64, %s2589, %s2578
        $region56: #{tpu_custom_call.1} parent=51 // pred_fallthru
          _
      $region52: #{tpu_custom_call.1} parent=5 // pred_fallthru
        _
      %p2595 = scmp.le.s32.totalorder 2, %s17
      // Predicated region
      $region57: #{tpu_custom_call.1} parent=5 // pred_check
        %p2596 = pneg %p2595
      $region58: #{tpu_custom_call.1} parent=5 // pred_check_branch
        %2598 = sbr.rel (%p2596) target = $region60
      $region59: #{tpu_custom_call.1} parent=5 // pred_region
        %s2599 = ssub.s32 %s17, 2
        // Predicated region
        $region61: #{tpu_custom_call.1} parent=59 // pred_check
          %p2600 = pneg %p224
        $region62: #{tpu_custom_call.1} parent=59 // pred_check_branch
          %2602 = sbr.rel (%p2600) target = $region64
        $region63: #{tpu_custom_call.1} parent=59 // pred_region
          %s2603 = sand.u32 %s209, 1
          %s2604 = scalar_lea.sflag [#allocation6], %s2603
          %s2605 = sand.u32 %s209, 1
          %s2606 = smul.addr %s2605, 4
          %s2607 = scalar_lea.vmem [#allocation5], %s2606
          %2608 = dma.done %s2604, 64
        $region64: #{tpu_custom_call.1} parent=59 // pred_fallthru
          _
      $region60: #{tpu_custom_call.1} parent=5 // pred_fallthru
        _
    $region6: #{tpu_custom_call.1} parent=1 // loop_footer
      %s21 = sadd.s32 1, %s17
    $region7: #{tpu_custom_call.1} parent=1 // loop_footer_branch
      %16 = sbr.rel target = $region3
    $region8: #{tpu_custom_call.1} parent=1 // loop_exit
      _
    %2609 = vsyncpa [#allocation6], 1
    %s2610 = scalar_lea.sflag [#allocation6], 1
    %2611 = vsyncpa %s2610, 1

</llo_original>
